<compile_context>
chip_gen: v7x
topology: tpu7x:2x2x1
jax: 0.10.0
libtpu: 0.0.40
codegen_flags: <defaults>
</compile_context>

<pallas_src>
import functools
import math

import jax
import jax.numpy as jnp
from jax.experimental import pallas as pl
from jax.experimental.pallas import tpu as pltpu

EPS = 1e-6
_MAX_PACK_LANES = 512  # lane-packing cap (512-1024 per review)


def _ln_kernel_wide(x_ref, alpha_ref, bias_ref, o_ref, *, features):
    """groups == 1 path: one LayerNorm row per kernel row."""
    x = x_ref[...].astype(jnp.float32)
    n = jnp.float32(features)
    mean = jnp.sum(x, axis=-1, keepdims=True) / n
    xc = x - mean
    # two-pass, unbiased (ddof=1) variance; x is already resident in VMEM.
    var = jnp.sum(xc * xc, axis=-1, keepdims=True) / (n - 1.0)
    inv = pl.reciprocal(jnp.sqrt(var) + jnp.float32(EPS), approx=False)
    alpha = alpha_ref[...].astype(jnp.float32)
    bias = bias_ref[...].astype(jnp.float32)
    o_ref[...] = (xc * inv * alpha + bias).astype(o_ref.dtype)


def _ln_kernel_packed(x_ref, alpha_ref, bias_ref, sel_ref, selt_ref, o_ref, *,
                      features):
    """groups > 1 path: several LayerNorm rows packed per lane-dense kernel row.

    sel   : (L, G) 0/1 selector  (segmented sums via MXU, no relayout)
    sel_t : (G, L) 0/1 selector  (broadcast per-group stats back across lanes)
    Both are precomputed in the wrapper (hoisted out of the grid loop).
    """
    hi = jax.lax.Precision.HIGHEST  # keep f32 data exact on the MXU
    x = x_ref[...].astype(jnp.float32)
    n = jnp.float32(features)
    sel = sel_ref[...]
    sel_t = selt_ref[...]

    s = jnp.dot(x, sel, preferred_element_type=jnp.float32, precision=hi)
    mean = s / n                                                  # (TM, G)
    mean_b = jnp.dot(mean, sel_t, preferred_element_type=jnp.float32,
                     precision=hi)                                # (TM, L)
    xc = x - mean_b
    ss = jnp.dot(xc * xc, sel, preferred_element_type=jnp.float32,
                 precision=hi)                                    # (TM, G)
    var = ss / (n - 1.0)                                          # unbiased
    inv = pl.reciprocal(jnp.sqrt(var) + jnp.float32(EPS), approx=False)
    inv_b = jnp.dot(inv, sel_t, preferred_element_type=jnp.float32,
                    precision=hi)                                 # (TM, L)

    alpha = alpha_ref[...].astype(jnp.float32)
    bias = bias_ref[...].astype(jnp.float32)
    o_ref[...] = (xc * inv_b * alpha + bias).astype(o_ref.dtype)


def _choose_groups(features: int) -> int:
    """Largest k with k*features a multiple of 128 and <= _MAX_PACK_LANES."""
    if features >= 128:
        return 1
    best = 1
    k = 1
    while k * features <= _MAX_PACK_LANES:
        if (k * features) % 128 == 0:
            best = k
        k += 1
    # TODO(synk): if best == 1 (e.g. odd F with huge lcm with 128), we fall
    # back to lane_width = F < 128, which uses masked partial stores.
    return best


def _chip_budget():
    """(target_block_bytes, vmem_limit_bytes) per TPU generation."""
    try:
        vmem_phys = int(pltpu.get_tpu_info().vmem_capacity_bytes)
    except Exception:
        vmem_phys = 0  # unknown -> conservative (v7x-safe) numbers
    if vmem_phys > 64 * 1024 * 1024:
        # v5e / v6e: 128 MiB physical VMEM.
        return 12 * 1024 * 1024, 96 * 1024 * 1024
    # v7x-like (64 MiB physical) or unknown.  Budget: 2*in + 2*out buffers in
    # input dtype plus ~3x block of f32 in-kernel temps -> ~7x block <= limit.
    return 6 * 1024 * 1024, 48 * 1024 * 1024


def layer_norm_pallas(x, alpha, bias, *, row_tile=None, vmem_limit_bytes=None):
    """x: (..., F); alpha, bias: (F,). Matches the torch LayerNormalization."""
    orig_shape = x.shape
    features = int(orig_shape[-1])
    rows = int(math.prod(orig_shape[:-1])) if len(orig_shape) > 1 else 1
    x2 = x.reshape(rows, features)

    groups = _choose_groups(features)
    pad_rows = (-rows) % groups
    if pad_rows:
        # Keep the lane-dense (unmasked vst) fast path by padding a few zero
        # rows on the host; they are sliced off after the kernel.
        x2 = jnp.pad(x2, ((0, pad_rows), (0, 0)))
    total_rows = rows + pad_rows
    packed_rows = total_rows // groups
    lane_width = groups * features

    x_packed = x2.reshape(packed_rows, lane_width)
    alpha_l = jnp.tile(alpha.reshape(1, features).astype(jnp.float32),
                       (1, groups))
    bias_l = jnp.tile(bias.reshape(1, features).astype(jnp.float32),
                      (1, groups))

    target_block_bytes, default_vmem_limit = _chip_budget()
    if vmem_limit_bytes is None:
        vmem_limit_bytes = default_vmem_limit

    if row_tile is None:
        itemsize = jnp.dtype(x.dtype).itemsize
        rt = max(16, target_block_bytes // (lane_width * itemsize))
        # Keep the grid at >= ~4 steps when there is enough data so both of
        # v7x's TensorCores get work (no effect on single-TC v5e/v6e).
        if packed_rows >= 64:
            rt = min(rt, pl.cdiv(packed_rows, 4))
        row_tile = rt
    row_tile = int(min(row_tile, packed_rows))
    if row_tile != packed_rows:
        # multiple of 16 satisfies the (8,128) rule and bf16 sublane packing
        row_tile = max(16, (row_tile // 16) * 16)
        row_tile = min(row_tile, packed_rows)

    grid = (pl.cdiv(packed_rows, row_tile),)  # ragged last block, no extra pad

    x_spec = pl.BlockSpec((row_tile, lane_width), lambda i: (i, 0))
    p_spec = pl.BlockSpec((1, lane_width), lambda i: (0, 0))
    out_spec = pl.BlockSpec((row_tile, lane_width), lambda i: (i, 0))

    if groups == 1:
        kernel = functools.partial(_ln_kernel_wide, features=features)
        in_specs = [x_spec, p_spec, p_spec]
        args = (x_packed, alpha_l, bias_l)
    else:
        lane = jnp.arange(lane_width)[:, None]
        grp = jnp.arange(groups)[None, :]
        sel = ((lane >= grp * features) &
               (lane < (grp + 1) * features)).astype(jnp.float32)   # (L, G)
        sel_t = sel.T                                               # (G, L)
        kernel = functools.partial(_ln_kernel_packed, features=features)
        in_specs = [
            x_spec, p_spec, p_spec,
            pl.BlockSpec((lane_width, groups), lambda i: (0, 0)),
            pl.BlockSpec((groups, lane_width), lambda i: (0, 0)),
        ]
        args = (x_packed, alpha_l, bias_l, sel, sel_t)

    out = pl.pallas_call(
        kernel,
        out_shape=jax.ShapeDtypeStruct((packed_rows, lane_width), x.dtype),
        grid_spec=pltpu.PrefetchScalarGridSpec(
            num_scalar_prefetch=0,
            grid=grid,
            in_specs=in_specs,
            out_specs=out_spec,
        ),
        compiler_params=pltpu.CompilerParams(
            dimension_semantics=("parallel",),
            vmem_limit_bytes=vmem_limit_bytes,
        ),
    )(*args)

    out = out.reshape(total_rows, features)
    if pad_rows:
        out = out[:rows]
    return out.reshape(orig_shape)


class EncoderPallas:
    """Mirrors the PyTorch Encoder: run `layers` (empty here) then final LayerNorm."""

    def __init__(self, features: int):
        self.features = features
        # deterministic init, same as nn.Parameter(torch.ones / torch.zeros)
        self.alpha = jnp.ones((features,), jnp.float32)
        self.bias = jnp.zeros((features,), jnp.float32)
        self.layers = []  # TODO(synk): encoder layer class not supplied in reference

    def __call__(self, x, mask, return_attention_scores: bool = False):
        all_scores = [] if return_attention_scores else None
        for layer in self.layers:
            if return_attention_scores:
                x, scores = layer(x, mask, True)
                all_scores.append(scores)
            else:
                x = layer(x, mask, False)
        x = layer_norm_pallas(x, self.alpha, self.bias)
        if return_attention_scores:
            return x, all_scores
        return x


def _layernorm_ref(x, alpha, bias):
    mean = jnp.mean(x, axis=-1, keepdims=True)
    var = jnp.sum((x - mean) ** 2, axis=-1, keepdims=True) / (x.shape[-1] - 1)
    std = jnp.sqrt(var)
    return alpha * (x - mean) / (std + EPS) + bias


if __name__ == "__main__":
    key = jax.random.PRNGKey(0)
    k1, k2, k3 = jax.random.split(key, 3)

    # Case 1: small feature dim (packed, lane-dense path, rows % groups == 0).
    batch, seq, features = 2, 8, 32
    x = jax.random.normal(k1, (batch, seq, features), dtype=jnp.float32)
    mask = jnp.ones((batch, 1, 1, seq), dtype=jnp.float32)  # unused by final norm
    enc = EncoderPallas(features)
    out = jax.block_until_ready(enc(x, mask))
    ref = _layernorm_ref(x, enc.alpha, enc.bias)
    assert out.shape == x.shape
    assert jnp.allclose(out, ref, atol=1e-5, rtol=1e-5), "mismatch (packed path)"

    # Case 2: wide feature dim (groups == 1 path).
    features2 = 256
    x2 = jax.random.normal(k2, (batch, seq, features2), dtype=jnp.float32)
    enc2 = EncoderPallas(features2)
    out2 = jax.block_until_ready(enc2(x2, jnp.ones((batch, 1, 1, seq))))
    ref2 = _layernorm_ref(x2, enc2.alpha, enc2.bias)
    assert out2.shape == x2.shape
    assert jnp.allclose(out2, ref2, atol=1e-5, rtol=1e-5), "mismatch (wide path)"

    # Case 3: small feature dim with rows NOT divisible by groups (row-pad path).
    x3 = jax.random.normal(k3, (1, 5, features), dtype=jnp.float32)
    enc3 = EncoderPallas(features)
    out3 = jax.block_until_ready(enc3(x3, jnp.ones((1, 1, 1, 5))))
    ref3 = _layernorm_ref(x3, enc3.alpha, enc3.bias)
    assert out3.shape == x3.shape
    assert jnp.allclose(out3, ref3, atol=1e-5, rtol=1e-5), "mismatch (padded path)"

    print("KERNEL_OK")
</pallas_src>

<mosaic_0001>
module attributes {stable_mosaic.version = 11 : i64} {
  func.func @_ln_kernel_packed(%arg0: i32, %arg1: memref<1x512xf32, #tpu.memory_space<vmem>>, %arg2: memref<1x512xf32, #tpu.memory_space<vmem>>, %arg3: memref<1x512xf32, #tpu.memory_space<vmem>>, %arg4: memref<512x16xf32, #tpu.memory_space<vmem>>, %arg5: memref<16x512xf32, #tpu.memory_space<vmem>>, %arg6: memref<1x512xf32, #tpu.memory_space<vmem>>) attributes {dimension_semantics = [#tpu.dimension_semantics<parallel>], iteration_bounds = array<i64: 1>, scalar_prefetch = 0 : i64, scratch_operands = 0 : i64, tpu.core_type = #tpu.core_type<tc>, window_params = [{transform_indices = @transform_0, window_bounds = array<i64: 1, 512>}, {pipeline_mode = #tpu.pipeline_mode<synchronous>, transform_indices = @transform_1, window_bounds = array<i64: 1, 512>}, {pipeline_mode = #tpu.pipeline_mode<synchronous>, transform_indices = @transform_2, window_bounds = array<i64: 1, 512>}, {pipeline_mode = #tpu.pipeline_mode<synchronous>, transform_indices = @transform_3, window_bounds = array<i64: 512, 16>}, {pipeline_mode = #tpu.pipeline_mode<synchronous>, transform_indices = @transform_4, window_bounds = array<i64: 16, 512>}, {transform_indices = @transform_5, window_bounds = array<i64: 1, 512>}]} {
    %c0 = arith.constant 0 : index
    %c0_0 = arith.constant 0 : index
    %0 = vector.load %arg1[%c0, %c0_0] : memref<1x512xf32, #tpu.memory_space<vmem>>, vector<1x512xf32>
    %c0_1 = arith.constant 0 : index
    %c0_2 = arith.constant 0 : index
    %1 = vector.load %arg4[%c0_1, %c0_2] : memref<512x16xf32, #tpu.memory_space<vmem>>, vector<512x16xf32>
    %c0_3 = arith.constant 0 : index
    %c0_4 = arith.constant 0 : index
    %2 = vector.load %arg5[%c0_3, %c0_4] : memref<16x512xf32, #tpu.memory_space<vmem>>, vector<16x512xf32>
    %cst = arith.constant dense<0.000000e+00> : vector<1x16xf32>
    %3 = tpu.matmul %0, %1, %cst {dimension_numbers = #tpu.dot_dimension_numbers<[1], [0], [0], [1], [0, 0, 1, 1], [], []>, precision = #tpu.contract_precision<fp32>} : vector<1x512xf32>, vector<512x16xf32>, vector<1x16xf32> -> vector<1x16xf32>
    %cst_5 = arith.constant 3.200000e+01 : f32
    %4 = vector.broadcast %cst_5 : f32 to vector<1x16xf32>
    %5 = arith.divf %3, %4 : vector<1x16xf32>
    %cst_6 = arith.constant dense<0.000000e+00> : vector<1x512xf32>
    %6 = tpu.matmul %5, %2, %cst_6 {dimension_numbers = #tpu.dot_dimension_numbers<[1], [0], [0], [1], [0, 0, 1, 1], [], []>, precision = #tpu.contract_precision<fp32>} : vector<1x16xf32>, vector<16x512xf32>, vector<1x512xf32> -> vector<1x512xf32>
    %7 = arith.subf %0, %6 : vector<1x512xf32>
    %8 = arith.mulf %7, %7 : vector<1x512xf32>
    %cst_7 = arith.constant dense<0.000000e+00> : vector<1x16xf32>
    %9 = tpu.matmul %8, %1, %cst_7 {dimension_numbers = #tpu.dot_dimension_numbers<[1], [0], [0], [1], [0, 0, 1, 1], [], []>, precision = #tpu.contract_precision<fp32>} : vector<1x512xf32>, vector<512x16xf32>, vector<1x16xf32> -> vector<1x16xf32>
    %cst_8 = arith.constant 3.200000e+01 : f32
    %cst_9 = arith.constant 1.000000e+00 : f32
    %10 = arith.subf %cst_8, %cst_9 : f32
    %11 = vector.broadcast %10 : f32 to vector<1x16xf32>
    %12 = arith.divf %9, %11 : vector<1x16xf32>
    %13 = math.sqrt %12 : vector<1x16xf32>
    %cst_10 = arith.constant 9.99999997E-7 : f32
    %14 = vector.broadcast %cst_10 : f32 to vector<1x16xf32>
    %15 = arith.addf %13, %14 : vector<1x16xf32>
    %16 = tpu.reciprocal %15 : vector<1x16xf32> -> vector<1x16xf32>
    %cst_11 = arith.constant dense<0.000000e+00> : vector<1x512xf32>
    %17 = tpu.matmul %16, %2, %cst_11 {dimension_numbers = #tpu.dot_dimension_numbers<[1], [0], [0], [1], [0, 0, 1, 1], [], []>, precision = #tpu.contract_precision<fp32>} : vector<1x16xf32>, vector<16x512xf32>, vector<1x512xf32> -> vector<1x512xf32>
    %c0_12 = arith.constant 0 : index
    %c0_13 = arith.constant 0 : index
    %18 = vector.load %arg2[%c0_12, %c0_13] : memref<1x512xf32, #tpu.memory_space<vmem>>, vector<1x512xf32>
    %c0_14 = arith.constant 0 : index
    %c0_15 = arith.constant 0 : index
    %19 = vector.load %arg3[%c0_14, %c0_15] : memref<1x512xf32, #tpu.memory_space<vmem>>, vector<1x512xf32>
    %20 = arith.mulf %7, %17 : vector<1x512xf32>
    %21 = arith.mulf %20, %18 : vector<1x512xf32>
    %22 = arith.addf %21, %19 : vector<1x512xf32>
    %c0_16 = arith.constant 0 : index
    %c0_17 = arith.constant 0 : index
    %23 = vector.load %arg6[%c0_16, %c0_17] : memref<1x512xf32, #tpu.memory_space<vmem>>, vector<1x512xf32>
    tpu.vector_store %arg6[%c0_16, %c0_17], %22 {strides = array<i32>} : memref<1x512xf32, #tpu.memory_space<vmem>>, vector<1x512xf32>,
    return
  }
  func.func @transform_0(%arg0: i32) -> (i32, i32) {
    %c0_i32 = arith.constant 0 : i32
    %c0_i32_0 = arith.constant 0 : i32
    return %arg0, %c0_i32 : i32, i32
  }
  func.func @transform_1(%arg0: i32) -> (i32, i32) {
    %c0_i32 = arith.constant 0 : i32
    %c0_i32_0 = arith.constant 0 : i32
    %c0_i32_1 = arith.constant 0 : i32
    return %c0_i32, %c0_i32_0 : i32, i32
  }
  func.func @transform_2(%arg0: i32) -> (i32, i32) {
    %c0_i32 = arith.constant 0 : i32
    %c0_i32_0 = arith.constant 0 : i32
    %c0_i32_1 = arith.constant 0 : i32
    return %c0_i32, %c0_i32_0 : i32, i32
  }
  func.func @transform_3(%arg0: i32) -> (i32, i32) {
    %c0_i32 = arith.constant 0 : i32
    %c0_i32_0 = arith.constant 0 : i32
    %c0_i32_1 = arith.constant 0 : i32
    return %c0_i32, %c0_i32_0 : i32, i32
  }
  func.func @transform_4(%arg0: i32) -> (i32, i32) {
    %c0_i32 = arith.constant 0 : i32
    %c0_i32_0 = arith.constant 0 : i32
    %c0_i32_1 = arith.constant 0 : i32
    return %c0_i32, %c0_i32_0 : i32, i32
  }
  func.func @transform_5(%arg0: i32) -> (i32, i32) {
    %c0_i32 = arith.constant 0 : i32
    %c0_i32_0 = arith.constant 0 : i32
    return %arg0, %c0_i32 : i32, i32
  }
}

</mosaic_0001>

<llo_original>
// kernel: tpu_custom_call.1
$region0: #{tpu_custom_call.1}
  #allocation0 [shape = 'u32[]', space=smem, size = 0x4, offset = 0x4, fixed_abs, tag = 'smem constant byte address 0x4 - core index']
  #allocation1 [shape = 'u32[144,128]{1,0:T(1,128)}', space=vmem, size = 0x12000, scoped, tag = 'internal scratch']
  %s0 = inlined_call_operand.vmem [shape: f32[1,512], index: 0, kind: input, shape index: {}]
  %s1 = inlined_call_operand.vmem [shape: f32[1,512], index: 1, kind: input, shape index: {}]
  %s2 = inlined_call_operand.vmem [shape: f32[1,512], index: 2, kind: input, shape index: {}]
  %s3 = inlined_call_operand.vmem [shape: f32[512,16], index: 3, kind: input, shape index: {}]
  %s4 = inlined_call_operand.vmem [shape: f32[16,512], index: 4, kind: input, shape index: {}]
  %s5 = inlined_call_operand.hbm [shape: f32[1,512], index: 5, kind: output, shape index: {}]
  %s6 = sld [smem:[#allocation0]]
  $region30: #{tpu_custom_call.1} parent=0
    _
  %s8 = ssub.s32 1, %s6
  %s9 = scalar_select 0, %s8, %s6
  $region1: #{tpu_custom_call.1} parent=0
    #allocation2 [shape = 'u8[2048]{0}', space=vmem, size = 0x800, scoped, tag = 'output window, operand 0, single buffered']
    #allocation3 [shape = 's32[1]{0}', space=sflag, size = 0x4, scoped, tag = 'scoped memory for tpu_custom_call.1']
    %10 = vsyncpa [#allocation3], 0
    // Predicated region
    $region2: #{tpu_custom_call.1} parent=1 // pred_check
      _
    $region3: #{tpu_custom_call.1} parent=1 // pred_check_branch
      %12 = sbr.rel (0) target = $region5
    $region4: #{tpu_custom_call.1} parent=1 // pred_region
      _
    $region5: #{tpu_custom_call.1} parent=1 // pred_fallthru
      _
    // Predicated region
    $region6: #{tpu_custom_call.1} parent=1 // pred_check
      _
    $region7: #{tpu_custom_call.1} parent=1 // pred_check_branch
      %14 = sbr.rel (0) target = $region9
    $region8: #{tpu_custom_call.1} parent=1 // pred_region
      _
    $region9: #{tpu_custom_call.1} parent=1 // pred_fallthru
      _
    // Predicated region
    $region10: #{tpu_custom_call.1} parent=1 // pred_check
      _
    $region11: #{tpu_custom_call.1} parent=1 // pred_check_branch
      %16 = sbr.rel (0) target = $region13
    $region12: #{tpu_custom_call.1} parent=1 // pred_region
      _
    $region13: #{tpu_custom_call.1} parent=1 // pred_fallthru
      _
    // Predicated region
    $region14: #{tpu_custom_call.1} parent=1 // pred_check
      _
    $region15: #{tpu_custom_call.1} parent=1 // pred_check_branch
      %18 = sbr.rel (0) target = $region17
    $region16: #{tpu_custom_call.1} parent=1 // pred_region
      _
    $region17: #{tpu_custom_call.1} parent=1 // pred_fallthru
      _
    // Predicated region
    $region18: #{tpu_custom_call.1} parent=1 // pred_check
      _
    $region19: #{tpu_custom_call.1} parent=1 // pred_check_branch
      %20 = sbr.rel (0) target = $region21
    $region20: #{tpu_custom_call.1} parent=1 // pred_region
      _
    $region21: #{tpu_custom_call.1} parent=1 // pred_fallthru
      _
    %v21 = vld [vmem:[%s0] sm:$0xf]
    %v22 = vld [vmem:[%s3] sm:$0xff]
    %v23 = vld [vmem:[%s3 + $0x8] sm:$0xff]
    %v24 = vld [vmem:[%s3 + $0x10] sm:$0xff]
    %v25 = vld [vmem:[%s3 + $0x18] sm:$0xff]
    %v26 = vld [vmem:[%s3 + $0x20] sm:$0xff]
    %v27 = vld [vmem:[%s3 + $0x28] sm:$0xff]
    %v28 = vld [vmem:[%s3 + $0x30] sm:$0xff]
    %v29 = vld [vmem:[%s3 + $0x38] sm:$0xff]
    %v30 = vld [vmem:[%s3 + $0x40] sm:$0xff]
    %v31 = vld [vmem:[%s3 + $0x48] sm:$0xff]
    %v32 = vld [vmem:[%s3 + $0x50] sm:$0xff]
    %v33 = vld [vmem:[%s3 + $0x58] sm:$0xff]
    %v34 = vld [vmem:[%s3 + $0x60] sm:$0xff]
    %v35 = vld [vmem:[%s3 + $0x68] sm:$0xff]
    %v36 = vld [vmem:[%s3 + $0x70] sm:$0xff]
    %v37 = vld [vmem:[%s3 + $0x78] sm:$0xff]
    %v38 = vld [vmem:[%s3 + $0x80] sm:$0xff]
    %v39 = vld [vmem:[%s3 + $0x88] sm:$0xff]
    %v40 = vld [vmem:[%s3 + $0x90] sm:$0xff]
    %v41 = vld [vmem:[%s3 + $0x98] sm:$0xff]
    %v42 = vld [vmem:[%s3 + $0xa0] sm:$0xff]
    %v43 = vld [vmem:[%s3 + $0xa8] sm:$0xff]
    %v44 = vld [vmem:[%s3 + $0xb0] sm:$0xff]
    %v45 = vld [vmem:[%s3 + $0xb8] sm:$0xff]
    %v46 = vld [vmem:[%s3 + $0xc0] sm:$0xff]
    %v47 = vld [vmem:[%s3 + $0xc8] sm:$0xff]
    %v48 = vld [vmem:[%s3 + $0xd0] sm:$0xff]
    %v49 = vld [vmem:[%s3 + $0xd8] sm:$0xff]
    %v50 = vld [vmem:[%s3 + $0xe0] sm:$0xff]
    %v51 = vld [vmem:[%s3 + $0xe8] sm:$0xff]
    %v52 = vld [vmem:[%s3 + $0xf0] sm:$0xff]
    %v53 = vld [vmem:[%s3 + $0xf8] sm:$0xff]
    %v54 = vld [vmem:[%s3 + $0x100] sm:$0xff]
    %v55 = vld [vmem:[%s3 + $0x108] sm:$0xff]
    %v56 = vld [vmem:[%s3 + $0x110] sm:$0xff]
    %v57 = vld [vmem:[%s3 + $0x118] sm:$0xff]
    %v58 = vld [vmem:[%s3 + $0x120] sm:$0xff]
    %v59 = vld [vmem:[%s3 + $0x128] sm:$0xff]
    %v60 = vld [vmem:[%s3 + $0x130] sm:$0xff]
    %v61 = vld [vmem:[%s3 + $0x138] sm:$0xff]
    %v62 = vld [vmem:[%s3 + $0x140] sm:$0xff]
    %v63 = vld [vmem:[%s3 + $0x148] sm:$0xff]
    %v64 = vld [vmem:[%s3 + $0x150] sm:$0xff]
    %v65 = vld [vmem:[%s3 + $0x158] sm:$0xff]
    %v66 = vld [vmem:[%s3 + $0x160] sm:$0xff]
    %v67 = vld [vmem:[%s3 + $0x168] sm:$0xff]
    %v68 = vld [vmem:[%s3 + $0x170] sm:$0xff]
    %v69 = vld [vmem:[%s3 + $0x178] sm:$0xff]
    %v70 = vld [vmem:[%s3 + $0x180] sm:$0xff]
    %v71 = vld [vmem:[%s3 + $0x188] sm:$0xff]
    %v72 = vld [vmem:[%s3 + $0x190] sm:$0xff]
    %v73 = vld [vmem:[%s3 + $0x198] sm:$0xff]
    %v74 = vld [vmem:[%s3 + $0x1a0] sm:$0xff]
    %v75 = vld [vmem:[%s3 + $0x1a8] sm:$0xff]
    %v76 = vld [vmem:[%s3 + $0x1b0] sm:$0xff]
    %v77 = vld [vmem:[%s3 + $0x1b8] sm:$0xff]
    %v78 = vld [vmem:[%s3 + $0x1c0] sm:$0xff]
    %v79 = vld [vmem:[%s3 + $0x1c8] sm:$0xff]
    %v80 = vld [vmem:[%s3 + $0x1d0] sm:$0xff]
    %v81 = vld [vmem:[%s3 + $0x1d8] sm:$0xff]
    %v82 = vld [vmem:[%s3 + $0x1e0] sm:$0xff]
    %v83 = vld [vmem:[%s3 + $0x1e8] sm:$0xff]
    %v84 = vld [vmem:[%s3 + $0x1f0] sm:$0xff]
    %v85 = vld [vmem:[%s3 + $0x1f8] sm:$0xff]
    %v86 = vld [vmem:[%s4] sm:$0xff]
    %v87 = vld [vmem:[%s4 + $0x8] sm:$0xff]
    %v88 = vld [vmem:[%s4 + $0x10] sm:$0xff]
    %v89 = vld [vmem:[%s4 + $0x18] sm:$0xff]
    %v90 = vld [vmem:[%s4 + $0x20] sm:$0xff]
    %v91 = vld [vmem:[%s4 + $0x28] sm:$0xff]
    %v92 = vld [vmem:[%s4 + $0x30] sm:$0xff]
    %v93 = vld [vmem:[%s4 + $0x38] sm:$0xff]
    %v95 = vlaneseq
    %v96 = vshrl.u32 %v95, 7
    %v97 = vsub.s32 0, %v96
    %v98 = vrot.slane %v21, %v97
    %v99 = vlaneseq
    %v100 = vshrl.u32 %v99, 7
    %v101 = vsub.s32 1, %v100
    %v102 = vrot.slane %v21, %v101
    %v103 = vlaneseq
    %v104 = vshrl.u32 %v103, 7
    %v105 = vsub.s32 2, %v104
    %v106 = vrot.slane %v21, %v105
    %v107 = vlaneseq
    %v108 = vshrl.u32 %v107, 7
    %v109 = vsub.s32 3, %v108
    %v110 = vrot.slane %v21, %v109
    %115 = vmatprep.subr.mxu0 0.0
    %v116 = vand.u32 %v22, 4294901760
    %117 = vmatpush1.msra.mxu0 %v116
    %118 = vmatprep.subr.mxu0 0.0
    %v119 = vand.u32 %v23, 4294901760
    %120 = vmatpush1.msra.mxu0 %v119
    %121 = vmatprep.subr.mxu0 0.0
    %v122 = vand.u32 %v24, 4294901760
    %123 = vmatpush1.msra.mxu0 %v122
    %124 = vmatprep.subr.mxu0 0.0
    %v125 = vand.u32 %v25, 4294901760
    %126 = vmatpush1.msra.mxu0 %v125
    %127 = vmatprep.subr.mxu0 0.0
    %v128 = vand.u32 %v26, 4294901760
    %129 = vmatpush1.msra.mxu0 %v128
    %130 = vmatprep.subr.mxu0 0.0
    %v131 = vand.u32 %v27, 4294901760
    %132 = vmatpush1.msra.mxu0 %v131
    %133 = vmatprep.subr.mxu0 0.0
    %v134 = vand.u32 %v28, 4294901760
    %135 = vmatpush1.msra.mxu0 %v134
    %136 = vmatprep.subr.mxu0 0.0
    %v137 = vand.u32 %v29, 4294901760
    %138 = vmatpush1.msra.mxu0 %v137
    %139 = vmatprep.subr.mxu0 0.0
    %v140 = vand.u32 %v30, 4294901760
    %141 = vmatpush1.msra.mxu0 %v140
    %142 = vmatprep.subr.mxu0 0.0
    %v143 = vand.u32 %v31, 4294901760
    %144 = vmatpush1.msra.mxu0 %v143
    %145 = vmatprep.subr.mxu0 0.0
    %v146 = vand.u32 %v32, 4294901760
    %147 = vmatpush1.msra.mxu0 %v146
    %148 = vmatprep.subr.mxu0 0.0
    %v149 = vand.u32 %v33, 4294901760
    %150 = vmatpush1.msra.mxu0 %v149
    %151 = vmatprep.subr.mxu0 0.0
    %v152 = vand.u32 %v34, 4294901760
    %153 = vmatpush1.msra.mxu0 %v152
    %154 = vmatprep.subr.mxu0 0.0
    %v155 = vand.u32 %v35, 4294901760
    %156 = vmatpush1.msra.mxu0 %v155
    %157 = vmatprep.subr.mxu0 0.0
    %v158 = vand.u32 %v36, 4294901760
    %159 = vmatpush1.msra.mxu0 %v158
    %160 = vmatprep.subr.mxu0 0.0
    %v161 = vand.u32 %v37, 4294901760
    %162 = vmatpush1.msra.mxu0 %v161
    %163 = vmatprep.subr.mxu0 0.0
    %v164 = vand.u32 %v38, 4294901760
    %165 = vmatpush1.msra.mxu0 %v164
    %166 = vmatprep.subr.mxu0 0.0
    %v167 = vand.u32 %v39, 4294901760
    %168 = vmatpush1.msra.mxu0 %v167
    %169 = vmatprep.subr.mxu0 0.0
    %v170 = vand.u32 %v40, 4294901760
    %171 = vmatpush1.msra.mxu0 %v170
    %172 = vmatprep.subr.mxu0 0.0
    %v173 = vand.u32 %v41, 4294901760
    %174 = vmatpush1.msra.mxu0 %v173
    %175 = vmatprep.subr.mxu0 0.0
    %v176 = vand.u32 %v42, 4294901760
    %177 = vmatpush1.msra.mxu0 %v176
    %178 = vmatprep.subr.mxu0 0.0
    %v179 = vand.u32 %v43, 4294901760
    %180 = vmatpush1.msra.mxu0 %v179
    %181 = vmatprep.subr.mxu0 0.0
    %v182 = vand.u32 %v44, 4294901760
    %183 = vmatpush1.msra.mxu0 %v182
    %184 = vmatprep.subr.mxu0 0.0
    %v185 = vand.u32 %v45, 4294901760
    %186 = vmatpush1.msra.mxu0 %v185
    %187 = vmatprep.subr.mxu0 0.0
    %v188 = vand.u32 %v46, 4294901760
    %189 = vmatpush1.msra.mxu0 %v188
    %190 = vmatprep.subr.mxu0 0.0
    %v191 = vand.u32 %v47, 4294901760
    %192 = vmatpush1.msra.mxu0 %v191
    %193 = vmatprep.subr.mxu0 0.0
    %v194 = vand.u32 %v48, 4294901760
    %195 = vmatpush1.msra.mxu0 %v194
    %196 = vmatprep.subr.mxu0 0.0
    %v197 = vand.u32 %v49, 4294901760
    %198 = vmatpush1.msra.mxu0 %v197
    %199 = vmatprep.subr.mxu0 0.0
    %v200 = vand.u32 %v50, 4294901760
    %201 = vmatpush1.msra.mxu0 %v200
    %202 = vmatprep.subr.mxu0 0.0
    %v203 = vand.u32 %v51, 4294901760
    %204 = vmatpush1.msra.mxu0 %v203
    %205 = vmatprep.subr.mxu0 0.0
    %v206 = vand.u32 %v52, 4294901760
    %207 = vmatpush1.msra.mxu0 %v206
    %208 = vmatprep.subr.mxu0 0.0
    %v209 = vand.u32 %v53, 4294901760
    %210 = vmatpush1.msra.mxu0 %v209
    %v211 = vand.u32 %v102, 4294901760
    %v212 = vsub.f32 %v102, %v211
    %v213 = vand.u32 %v212, 4294901760
    %v214 = vsub.f32 %v212, %v213
    %v215 = vand.u32 %v214, 4294901760
    %216 = vmatprep.mubr.f32.mxu0 %v215
    %v217 = vand.u32 %v98, 4294901760
    %v218 = vsub.f32 %v98, %v217
    %v219 = vand.u32 %v218, 4294901760
    %v220 = vsub.f32 %v218, %v219
    %v221 = vand.u32 %v220, 4294901760
    %222 = vmatmul.mubr.f32.gmra.mrb[0].mxu0 %v221
    %v223 = vpop.f32.mrb[0].mxu0
    %v224 = vadd.f32 0.0, %v223
    %v225 = vpop.f32.mrb[0].mxu0
    %226 = vdwg.mxu0
    %227 = vmatprep.subr.mxu0 0.0
    %v228 = vand.u32 %v22, 4294901760
    %v229 = vsub.f32 %v22, %v228
    %v230 = vand.u32 %v229, 4294901760
    %v231 = vsub.f32 %v229, %v230
    %v232 = vand.u32 %v231, 4294901760
    %233 = vmatpush1.msra.mxu0 %v232
    %234 = vmatprep.subr.mxu0 0.0
    %v235 = vand.u32 %v23, 4294901760
    %v236 = vsub.f32 %v23, %v235
    %v237 = vand.u32 %v236, 4294901760
    %v238 = vsub.f32 %v236, %v237
    %v239 = vand.u32 %v238, 4294901760
    %240 = vmatpush1.msra.mxu0 %v239
    %241 = vmatprep.subr.mxu0 0.0
    %v242 = vand.u32 %v24, 4294901760
    %v243 = vsub.f32 %v24, %v242
    %v244 = vand.u32 %v243, 4294901760
    %v245 = vsub.f32 %v243, %v244
    %v246 = vand.u32 %v245, 4294901760
    %247 = vmatpush1.msra.mxu0 %v246
    %248 = vmatprep.subr.mxu0 0.0
    %v249 = vand.u32 %v25, 4294901760
    %v250 = vsub.f32 %v25, %v249
    %v251 = vand.u32 %v250, 4294901760
    %v252 = vsub.f32 %v250, %v251
    %v253 = vand.u32 %v252, 4294901760
    %254 = vmatpush1.msra.mxu0 %v253
    %255 = vmatprep.subr.mxu0 0.0
    %v256 = vand.u32 %v26, 4294901760
    %v257 = vsub.f32 %v26, %v256
    %v258 = vand.u32 %v257, 4294901760
    %v259 = vsub.f32 %v257, %v258
    %v260 = vand.u32 %v259, 4294901760
    %261 = vmatpush1.msra.mxu0 %v260
    %262 = vmatprep.subr.mxu0 0.0
    %v263 = vand.u32 %v27, 4294901760
    %v264 = vsub.f32 %v27, %v263
    %v265 = vand.u32 %v264, 4294901760
    %v266 = vsub.f32 %v264, %v265
    %v267 = vand.u32 %v266, 4294901760
    %268 = vmatpush1.msra.mxu0 %v267
    %269 = vmatprep.subr.mxu0 0.0
    %v270 = vand.u32 %v28, 4294901760
    %v271 = vsub.f32 %v28, %v270
    %v272 = vand.u32 %v271, 4294901760
    %v273 = vsub.f32 %v271, %v272
    %v274 = vand.u32 %v273, 4294901760
    %275 = vmatpush1.msra.mxu0 %v274
    %276 = vmatprep.subr.mxu0 0.0
    %v277 = vand.u32 %v29, 4294901760
    %v278 = vsub.f32 %v29, %v277
    %v279 = vand.u32 %v278, 4294901760
    %v280 = vsub.f32 %v278, %v279
    %v281 = vand.u32 %v280, 4294901760
    %282 = vmatpush1.msra.mxu0 %v281
    %283 = vmatprep.subr.mxu0 0.0
    %v284 = vand.u32 %v30, 4294901760
    %v285 = vsub.f32 %v30, %v284
    %v286 = vand.u32 %v285, 4294901760
    %v287 = vsub.f32 %v285, %v286
    %v288 = vand.u32 %v287, 4294901760
    %289 = vmatpush1.msra.mxu0 %v288
    %290 = vmatprep.subr.mxu0 0.0
    %v291 = vand.u32 %v31, 4294901760
    %v292 = vsub.f32 %v31, %v291
    %v293 = vand.u32 %v292, 4294901760
    %v294 = vsub.f32 %v292, %v293
    %v295 = vand.u32 %v294, 4294901760
    %296 = vmatpush1.msra.mxu0 %v295
    %297 = vmatprep.subr.mxu0 0.0
    %v298 = vand.u32 %v32, 4294901760
    %v299 = vsub.f32 %v32, %v298
    %v300 = vand.u32 %v299, 4294901760
    %v301 = vsub.f32 %v299, %v300
    %v302 = vand.u32 %v301, 4294901760
    %303 = vmatpush1.msra.mxu0 %v302
    %304 = vmatprep.subr.mxu0 0.0
    %v305 = vand.u32 %v33, 4294901760
    %v306 = vsub.f32 %v33, %v305
    %v307 = vand.u32 %v306, 4294901760
    %v308 = vsub.f32 %v306, %v307
    %v309 = vand.u32 %v308, 4294901760
    %310 = vmatpush1.msra.mxu0 %v309
    %311 = vmatprep.subr.mxu0 0.0
    %v312 = vand.u32 %v34, 4294901760
    %v313 = vsub.f32 %v34, %v312
    %v314 = vand.u32 %v313, 4294901760
    %v315 = vsub.f32 %v313, %v314
    %v316 = vand.u32 %v315, 4294901760
    %317 = vmatpush1.msra.mxu0 %v316
    %318 = vmatprep.subr.mxu0 0.0
    %v319 = vand.u32 %v35, 4294901760
    %v320 = vsub.f32 %v35, %v319
    %v321 = vand.u32 %v320, 4294901760
    %v322 = vsub.f32 %v320, %v321
    %v323 = vand.u32 %v322, 4294901760
    %324 = vmatpush1.msra.mxu0 %v323
    %325 = vmatprep.subr.mxu0 0.0
    %v326 = vand.u32 %v36, 4294901760
    %v327 = vsub.f32 %v36, %v326
    %v328 = vand.u32 %v327, 4294901760
    %v329 = vsub.f32 %v327, %v328
    %v330 = vand.u32 %v329, 4294901760
    %331 = vmatpush1.msra.mxu0 %v330
    %332 = vmatprep.subr.mxu0 0.0
    %v333 = vand.u32 %v37, 4294901760
    %v334 = vsub.f32 %v37, %v333
    %v335 = vand.u32 %v334, 4294901760
    %v336 = vsub.f32 %v334, %v335
    %v337 = vand.u32 %v336, 4294901760
    %338 = vmatpush1.msra.mxu0 %v337
    %339 = vmatprep.subr.mxu0 0.0
    %v340 = vand.u32 %v38, 4294901760
    %v341 = vsub.f32 %v38, %v340
    %v342 = vand.u32 %v341, 4294901760
    %v343 = vsub.f32 %v341, %v342
    %v344 = vand.u32 %v343, 4294901760
    %345 = vmatpush1.msra.mxu0 %v344
    %346 = vmatprep.subr.mxu0 0.0
    %v347 = vand.u32 %v39, 4294901760
    %v348 = vsub.f32 %v39, %v347
    %v349 = vand.u32 %v348, 4294901760
    %v350 = vsub.f32 %v348, %v349
    %v351 = vand.u32 %v350, 4294901760
    %352 = vmatpush1.msra.mxu0 %v351
    %353 = vmatprep.subr.mxu0 0.0
    %v354 = vand.u32 %v40, 4294901760
    %v355 = vsub.f32 %v40, %v354
    %v356 = vand.u32 %v355, 4294901760
    %v357 = vsub.f32 %v355, %v356
    %v358 = vand.u32 %v357, 4294901760
    %359 = vmatpush1.msra.mxu0 %v358
    %360 = vmatprep.subr.mxu0 0.0
    %v361 = vand.u32 %v41, 4294901760
    %v362 = vsub.f32 %v41, %v361
    %v363 = vand.u32 %v362, 4294901760
    %v364 = vsub.f32 %v362, %v363
    %v365 = vand.u32 %v364, 4294901760
    %366 = vmatpush1.msra.mxu0 %v365
    %367 = vmatprep.subr.mxu0 0.0
    %v368 = vand.u32 %v42, 4294901760
    %v369 = vsub.f32 %v42, %v368
    %v370 = vand.u32 %v369, 4294901760
    %v371 = vsub.f32 %v369, %v370
    %v372 = vand.u32 %v371, 4294901760
    %373 = vmatpush1.msra.mxu0 %v372
    %374 = vmatprep.subr.mxu0 0.0
    %v375 = vand.u32 %v43, 4294901760
    %v376 = vsub.f32 %v43, %v375
    %v377 = vand.u32 %v376, 4294901760
    %v378 = vsub.f32 %v376, %v377
    %v379 = vand.u32 %v378, 4294901760
    %380 = vmatpush1.msra.mxu0 %v379
    %381 = vmatprep.subr.mxu0 0.0
    %v382 = vand.u32 %v44, 4294901760
    %v383 = vsub.f32 %v44, %v382
    %v384 = vand.u32 %v383, 4294901760
    %v385 = vsub.f32 %v383, %v384
    %v386 = vand.u32 %v385, 4294901760
    %387 = vmatpush1.msra.mxu0 %v386
    %388 = vmatprep.subr.mxu0 0.0
    %v389 = vand.u32 %v45, 4294901760
    %v390 = vsub.f32 %v45, %v389
    %v391 = vand.u32 %v390, 4294901760
    %v392 = vsub.f32 %v390, %v391
    %v393 = vand.u32 %v392, 4294901760
    %394 = vmatpush1.msra.mxu0 %v393
    %395 = vmatprep.subr.mxu0 0.0
    %v396 = vand.u32 %v46, 4294901760
    %v397 = vsub.f32 %v46, %v396
    %v398 = vand.u32 %v397, 4294901760
    %v399 = vsub.f32 %v397, %v398
    %v400 = vand.u32 %v399, 4294901760
    %401 = vmatpush1.msra.mxu0 %v400
    %402 = vmatprep.subr.mxu0 0.0
    %v403 = vand.u32 %v47, 4294901760
    %v404 = vsub.f32 %v47, %v403
    %v405 = vand.u32 %v404, 4294901760
    %v406 = vsub.f32 %v404, %v405
    %v407 = vand.u32 %v406, 4294901760
    %408 = vmatpush1.msra.mxu0 %v407
    %409 = vmatprep.subr.mxu0 0.0
    %v410 = vand.u32 %v48, 4294901760
    %v411 = vsub.f32 %v48, %v410
    %v412 = vand.u32 %v411, 4294901760
    %v413 = vsub.f32 %v411, %v412
    %v414 = vand.u32 %v413, 4294901760
    %415 = vmatpush1.msra.mxu0 %v414
    %416 = vmatprep.subr.mxu0 0.0
    %v417 = vand.u32 %v49, 4294901760
    %v418 = vsub.f32 %v49, %v417
    %v419 = vand.u32 %v418, 4294901760
    %v420 = vsub.f32 %v418, %v419
    %v421 = vand.u32 %v420, 4294901760
    %422 = vmatpush1.msra.mxu0 %v421
    %423 = vmatprep.subr.mxu0 0.0
    %v424 = vand.u32 %v50, 4294901760
    %v425 = vsub.f32 %v50, %v424
    %v426 = vand.u32 %v425, 4294901760
    %v427 = vsub.f32 %v425, %v426
    %v428 = vand.u32 %v427, 4294901760
    %429 = vmatpush1.msra.mxu0 %v428
    %430 = vmatprep.subr.mxu0 0.0
    %v431 = vand.u32 %v51, 4294901760
    %v432 = vsub.f32 %v51, %v431
    %v433 = vand.u32 %v432, 4294901760
    %v434 = vsub.f32 %v432, %v433
    %v435 = vand.u32 %v434, 4294901760
    %436 = vmatpush1.msra.mxu0 %v435
    %437 = vmatprep.subr.mxu0 0.0
    %v438 = vand.u32 %v52, 4294901760
    %v439 = vsub.f32 %v52, %v438
    %v440 = vand.u32 %v439, 4294901760
    %v441 = vsub.f32 %v439, %v440
    %v442 = vand.u32 %v441, 4294901760
    %443 = vmatpush1.msra.mxu0 %v442
    %444 = vmatprep.subr.mxu0 0.0
    %v445 = vand.u32 %v53, 4294901760
    %v446 = vsub.f32 %v53, %v445
    %v447 = vand.u32 %v446, 4294901760
    %v448 = vsub.f32 %v446, %v447
    %v449 = vand.u32 %v448, 4294901760
    %450 = vmatpush1.msra.mxu0 %v449
    %v451 = vand.u32 %v102, 4294901760
    %452 = vmatprep.mubr.f32.mxu0 %v451
    %v453 = vand.u32 %v98, 4294901760
    %454 = vmatmul.mubr.f32.gmra.mrb[0].mxu0 %v453
    %v455 = vpop.f32.mrb[0].mxu0
    %v456 = vadd.f32 %v224, %v455
    %v457 = vpop.f32.mrb[0].mxu0
    %458 = vdwg.mxu0
    %459 = vmatprep.subr.mxu0 0.0
    %v460 = vand.u32 %v22, 4294901760
    %v461 = vsub.f32 %v22, %v460
    %462 = vmatpush1.msra.mxu0 %v461
    %463 = vmatprep.subr.mxu0 0.0
    %v464 = vand.u32 %v23, 4294901760
    %v465 = vsub.f32 %v23, %v464
    %466 = vmatpush1.msra.mxu0 %v465
    %467 = vmatprep.subr.mxu0 0.0
    %v468 = vand.u32 %v24, 4294901760
    %v469 = vsub.f32 %v24, %v468
    %470 = vmatpush1.msra.mxu0 %v469
    %471 = vmatprep.subr.mxu0 0.0
    %v472 = vand.u32 %v25, 4294901760
    %v473 = vsub.f32 %v25, %v472
    %474 = vmatpush1.msra.mxu0 %v473
    %475 = vmatprep.subr.mxu0 0.0
    %v476 = vand.u32 %v26, 4294901760
    %v477 = vsub.f32 %v26, %v476
    %478 = vmatpush1.msra.mxu0 %v477
    %479 = vmatprep.subr.mxu0 0.0
    %v480 = vand.u32 %v27, 4294901760
    %v481 = vsub.f32 %v27, %v480
    %482 = vmatpush1.msra.mxu0 %v481
    %483 = vmatprep.subr.mxu0 0.0
    %v484 = vand.u32 %v28, 4294901760
    %v485 = vsub.f32 %v28, %v484
    %486 = vmatpush1.msra.mxu0 %v485
    %487 = vmatprep.subr.mxu0 0.0
    %v488 = vand.u32 %v29, 4294901760
    %v489 = vsub.f32 %v29, %v488
    %490 = vmatpush1.msra.mxu0 %v489
    %491 = vmatprep.subr.mxu0 0.0
    %v492 = vand.u32 %v30, 4294901760
    %v493 = vsub.f32 %v30, %v492
    %494 = vmatpush1.msra.mxu0 %v493
    %495 = vmatprep.subr.mxu0 0.0
    %v496 = vand.u32 %v31, 4294901760
    %v497 = vsub.f32 %v31, %v496
    %498 = vmatpush1.msra.mxu0 %v497
    %499 = vmatprep.subr.mxu0 0.0
    %v500 = vand.u32 %v32, 4294901760
    %v501 = vsub.f32 %v32, %v500
    %502 = vmatpush1.msra.mxu0 %v501
    %503 = vmatprep.subr.mxu0 0.0
    %v504 = vand.u32 %v33, 4294901760
    %v505 = vsub.f32 %v33, %v504
    %506 = vmatpush1.msra.mxu0 %v505
    %507 = vmatprep.subr.mxu0 0.0
    %v508 = vand.u32 %v34, 4294901760
    %v509 = vsub.f32 %v34, %v508
    %510 = vmatpush1.msra.mxu0 %v509
    %511 = vmatprep.subr.mxu0 0.0
    %v512 = vand.u32 %v35, 4294901760
    %v513 = vsub.f32 %v35, %v512
    %514 = vmatpush1.msra.mxu0 %v513
    %515 = vmatprep.subr.mxu0 0.0
    %v516 = vand.u32 %v36, 4294901760
    %v517 = vsub.f32 %v36, %v516
    %518 = vmatpush1.msra.mxu0 %v517
    %519 = vmatprep.subr.mxu0 0.0
    %v520 = vand.u32 %v37, 4294901760
    %v521 = vsub.f32 %v37, %v520
    %522 = vmatpush1.msra.mxu0 %v521
    %523 = vmatprep.subr.mxu0 0.0
    %v524 = vand.u32 %v38, 4294901760
    %v525 = vsub.f32 %v38, %v524
    %526 = vmatpush1.msra.mxu0 %v525
    %527 = vmatprep.subr.mxu0 0.0
    %v528 = vand.u32 %v39, 4294901760
    %v529 = vsub.f32 %v39, %v528
    %530 = vmatpush1.msra.mxu0 %v529
    %531 = vmatprep.subr.mxu0 0.0
    %v532 = vand.u32 %v40, 4294901760
    %v533 = vsub.f32 %v40, %v532
    %534 = vmatpush1.msra.mxu0 %v533
    %535 = vmatprep.subr.mxu0 0.0
    %v536 = vand.u32 %v41, 4294901760
    %v537 = vsub.f32 %v41, %v536
    %538 = vmatpush1.msra.mxu0 %v537
    %539 = vmatprep.subr.mxu0 0.0
    %v540 = vand.u32 %v42, 4294901760
    %v541 = vsub.f32 %v42, %v540
    %542 = vmatpush1.msra.mxu0 %v541
    %543 = vmatprep.subr.mxu0 0.0
    %v544 = vand.u32 %v43, 4294901760
    %v545 = vsub.f32 %v43, %v544
    %546 = vmatpush1.msra.mxu0 %v545
    %547 = vmatprep.subr.mxu0 0.0
    %v548 = vand.u32 %v44, 4294901760
    %v549 = vsub.f32 %v44, %v548
    %550 = vmatpush1.msra.mxu0 %v549
    %551 = vmatprep.subr.mxu0 0.0
    %v552 = vand.u32 %v45, 4294901760
    %v553 = vsub.f32 %v45, %v552
    %554 = vmatpush1.msra.mxu0 %v553
    %555 = vmatprep.subr.mxu0 0.0
    %v556 = vand.u32 %v46, 4294901760
    %v557 = vsub.f32 %v46, %v556
    %558 = vmatpush1.msra.mxu0 %v557
    %559 = vmatprep.subr.mxu0 0.0
    %v560 = vand.u32 %v47, 4294901760
    %v561 = vsub.f32 %v47, %v560
    %562 = vmatpush1.msra.mxu0 %v561
    %563 = vmatprep.subr.mxu0 0.0
    %v564 = vand.u32 %v48, 4294901760
    %v565 = vsub.f32 %v48, %v564
    %566 = vmatpush1.msra.mxu0 %v565
    %567 = vmatprep.subr.mxu0 0.0
    %v568 = vand.u32 %v49, 4294901760
    %v569 = vsub.f32 %v49, %v568
    %570 = vmatpush1.msra.mxu0 %v569
    %571 = vmatprep.subr.mxu0 0.0
    %v572 = vand.u32 %v50, 4294901760
    %v573 = vsub.f32 %v50, %v572
    %574 = vmatpush1.msra.mxu0 %v573
    %575 = vmatprep.subr.mxu0 0.0
    %v576 = vand.u32 %v51, 4294901760
    %v577 = vsub.f32 %v51, %v576
    %578 = vmatpush1.msra.mxu0 %v577
    %579 = vmatprep.subr.mxu0 0.0
    %v580 = vand.u32 %v52, 4294901760
    %v581 = vsub.f32 %v52, %v580
    %582 = vmatpush1.msra.mxu0 %v581
    %583 = vmatprep.subr.mxu0 0.0
    %v584 = vand.u32 %v53, 4294901760
    %v585 = vsub.f32 %v53, %v584
    %586 = vmatpush1.msra.mxu0 %v585
    %v587 = vand.u32 %v102, 4294901760
    %v588 = vsub.f32 %v102, %v587
    %589 = vmatprep.mubr.f32.mxu0 %v588
    %v590 = vand.u32 %v98, 4294901760
    %v591 = vsub.f32 %v98, %v590
    %592 = vmatmul.mubr.f32.gmra.mrb[0].mxu0 %v591
    %v593 = vpop.f32.mrb[0].mxu0
    %v594 = vadd.f32 %v456, %v593
    %v595 = vpop.f32.mrb[0].mxu0
    %596 = vdwg.mxu0
    %597 = vmatprep.subr.mxu0 0.0
    %v598 = vand.u32 %v22, 4294901760
    %599 = vmatpush1.msra.mxu0 %v598
    %600 = vmatprep.subr.mxu0 0.0
    %v601 = vand.u32 %v23, 4294901760
    %602 = vmatpush1.msra.mxu0 %v601
    %603 = vmatprep.subr.mxu0 0.0
    %v604 = vand.u32 %v24, 4294901760
    %605 = vmatpush1.msra.mxu0 %v604
    %606 = vmatprep.subr.mxu0 0.0
    %v607 = vand.u32 %v25, 4294901760
    %608 = vmatpush1.msra.mxu0 %v607
    %609 = vmatprep.subr.mxu0 0.0
    %v610 = vand.u32 %v26, 4294901760
    %611 = vmatpush1.msra.mxu0 %v610
    %612 = vmatprep.subr.mxu0 0.0
    %v613 = vand.u32 %v27, 4294901760
    %614 = vmatpush1.msra.mxu0 %v613
    %615 = vmatprep.subr.mxu0 0.0
    %v616 = vand.u32 %v28, 4294901760
    %617 = vmatpush1.msra.mxu0 %v616
    %618 = vmatprep.subr.mxu0 0.0
    %v619 = vand.u32 %v29, 4294901760
    %620 = vmatpush1.msra.mxu0 %v619
    %621 = vmatprep.subr.mxu0 0.0
    %v622 = vand.u32 %v30, 4294901760
    %623 = vmatpush1.msra.mxu0 %v622
    %624 = vmatprep.subr.mxu0 0.0
    %v625 = vand.u32 %v31, 4294901760
    %626 = vmatpush1.msra.mxu0 %v625
    %627 = vmatprep.subr.mxu0 0.0
    %v628 = vand.u32 %v32, 4294901760
    %629 = vmatpush1.msra.mxu0 %v628
    %630 = vmatprep.subr.mxu0 0.0
    %v631 = vand.u32 %v33, 4294901760
    %632 = vmatpush1.msra.mxu0 %v631
    %633 = vmatprep.subr.mxu0 0.0
    %v634 = vand.u32 %v34, 4294901760
    %635 = vmatpush1.msra.mxu0 %v634
    %636 = vmatprep.subr.mxu0 0.0
    %v637 = vand.u32 %v35, 4294901760
    %638 = vmatpush1.msra.mxu0 %v637
    %639 = vmatprep.subr.mxu0 0.0
    %v640 = vand.u32 %v36, 4294901760
    %641 = vmatpush1.msra.mxu0 %v640
    %642 = vmatprep.subr.mxu0 0.0
    %v643 = vand.u32 %v37, 4294901760
    %644 = vmatpush1.msra.mxu0 %v643
    %645 = vmatprep.subr.mxu0 0.0
    %v646 = vand.u32 %v38, 4294901760
    %647 = vmatpush1.msra.mxu0 %v646
    %648 = vmatprep.subr.mxu0 0.0
    %v649 = vand.u32 %v39, 4294901760
    %650 = vmatpush1.msra.mxu0 %v649
    %651 = vmatprep.subr.mxu0 0.0
    %v652 = vand.u32 %v40, 4294901760
    %653 = vmatpush1.msra.mxu0 %v652
    %654 = vmatprep.subr.mxu0 0.0
    %v655 = vand.u32 %v41, 4294901760
    %656 = vmatpush1.msra.mxu0 %v655
    %657 = vmatprep.subr.mxu0 0.0
    %v658 = vand.u32 %v42, 4294901760
    %659 = vmatpush1.msra.mxu0 %v658
    %660 = vmatprep.subr.mxu0 0.0
    %v661 = vand.u32 %v43, 4294901760
    %662 = vmatpush1.msra.mxu0 %v661
    %663 = vmatprep.subr.mxu0 0.0
    %v664 = vand.u32 %v44, 4294901760
    %665 = vmatpush1.msra.mxu0 %v664
    %666 = vmatprep.subr.mxu0 0.0
    %v667 = vand.u32 %v45, 4294901760
    %668 = vmatpush1.msra.mxu0 %v667
    %669 = vmatprep.subr.mxu0 0.0
    %v670 = vand.u32 %v46, 4294901760
    %671 = vmatpush1.msra.mxu0 %v670
    %672 = vmatprep.subr.mxu0 0.0
    %v673 = vand.u32 %v47, 4294901760
    %674 = vmatpush1.msra.mxu0 %v673
    %675 = vmatprep.subr.mxu0 0.0
    %v676 = vand.u32 %v48, 4294901760
    %677 = vmatpush1.msra.mxu0 %v676
    %678 = vmatprep.subr.mxu0 0.0
    %v679 = vand.u32 %v49, 4294901760
    %680 = vmatpush1.msra.mxu0 %v679
    %681 = vmatprep.subr.mxu0 0.0
    %v682 = vand.u32 %v50, 4294901760
    %683 = vmatpush1.msra.mxu0 %v682
    %684 = vmatprep.subr.mxu0 0.0
    %v685 = vand.u32 %v51, 4294901760
    %686 = vmatpush1.msra.mxu0 %v685
    %687 = vmatprep.subr.mxu0 0.0
    %v688 = vand.u32 %v52, 4294901760
    %689 = vmatpush1.msra.mxu0 %v688
    %690 = vmatprep.subr.mxu0 0.0
    %v691 = vand.u32 %v53, 4294901760
    %692 = vmatpush1.msra.mxu0 %v691
    %v693 = vand.u32 %v102, 4294901760
    %v694 = vsub.f32 %v102, %v693
    %v695 = vand.u32 %v694, 4294901760
    %696 = vmatprep.mubr.f32.mxu0 %v695
    %v697 = vand.u32 %v98, 4294901760
    %v698 = vsub.f32 %v98, %v697
    %v699 = vand.u32 %v698, 4294901760
    %700 = vmatmul.mubr.f32.gmra.mrb[0].mxu0 %v699
    %v701 = vpop.f32.mrb[0].mxu0
    %v702 = vadd.f32 %v594, %v701
    %v703 = vpop.f32.mrb[0].mxu0
    %704 = vdwg.mxu0
    %705 = vmatprep.subr.mxu0 0.0
    %v706 = vand.u32 %v22, 4294901760
    %v707 = vsub.f32 %v22, %v706
    %v708 = vand.u32 %v707, 4294901760
    %709 = vmatpush1.msra.mxu0 %v708
    %710 = vmatprep.subr.mxu0 0.0
    %v711 = vand.u32 %v23, 4294901760
    %v712 = vsub.f32 %v23, %v711
    %v713 = vand.u32 %v712, 4294901760
    %714 = vmatpush1.msra.mxu0 %v713
    %715 = vmatprep.subr.mxu0 0.0
    %v716 = vand.u32 %v24, 4294901760
    %v717 = vsub.f32 %v24, %v716
    %v718 = vand.u32 %v717, 4294901760
    %719 = vmatpush1.msra.mxu0 %v718
    %720 = vmatprep.subr.mxu0 0.0
    %v721 = vand.u32 %v25, 4294901760
    %v722 = vsub.f32 %v25, %v721
    %v723 = vand.u32 %v722, 4294901760
    %724 = vmatpush1.msra.mxu0 %v723
    %725 = vmatprep.subr.mxu0 0.0
    %v726 = vand.u32 %v26, 4294901760
    %v727 = vsub.f32 %v26, %v726
    %v728 = vand.u32 %v727, 4294901760
    %729 = vmatpush1.msra.mxu0 %v728
    %730 = vmatprep.subr.mxu0 0.0
    %v731 = vand.u32 %v27, 4294901760
    %v732 = vsub.f32 %v27, %v731
    %v733 = vand.u32 %v732, 4294901760
    %734 = vmatpush1.msra.mxu0 %v733
    %735 = vmatprep.subr.mxu0 0.0
    %v736 = vand.u32 %v28, 4294901760
    %v737 = vsub.f32 %v28, %v736
    %v738 = vand.u32 %v737, 4294901760
    %739 = vmatpush1.msra.mxu0 %v738
    %740 = vmatprep.subr.mxu0 0.0
    %v741 = vand.u32 %v29, 4294901760
    %v742 = vsub.f32 %v29, %v741
    %v743 = vand.u32 %v742, 4294901760
    %744 = vmatpush1.msra.mxu0 %v743
    %745 = vmatprep.subr.mxu0 0.0
    %v746 = vand.u32 %v30, 4294901760
    %v747 = vsub.f32 %v30, %v746
    %v748 = vand.u32 %v747, 4294901760
    %749 = vmatpush1.msra.mxu0 %v748
    %750 = vmatprep.subr.mxu0 0.0
    %v751 = vand.u32 %v31, 4294901760
    %v752 = vsub.f32 %v31, %v751
    %v753 = vand.u32 %v752, 4294901760
    %754 = vmatpush1.msra.mxu0 %v753
    %755 = vmatprep.subr.mxu0 0.0
    %v756 = vand.u32 %v32, 4294901760
    %v757 = vsub.f32 %v32, %v756
    %v758 = vand.u32 %v757, 4294901760
    %759 = vmatpush1.msra.mxu0 %v758
    %760 = vmatprep.subr.mxu0 0.0
    %v761 = vand.u32 %v33, 4294901760
    %v762 = vsub.f32 %v33, %v761
    %v763 = vand.u32 %v762, 4294901760
    %764 = vmatpush1.msra.mxu0 %v763
    %765 = vmatprep.subr.mxu0 0.0
    %v766 = vand.u32 %v34, 4294901760
    %v767 = vsub.f32 %v34, %v766
    %v768 = vand.u32 %v767, 4294901760
    %769 = vmatpush1.msra.mxu0 %v768
    %770 = vmatprep.subr.mxu0 0.0
    %v771 = vand.u32 %v35, 4294901760
    %v772 = vsub.f32 %v35, %v771
    %v773 = vand.u32 %v772, 4294901760
    %774 = vmatpush1.msra.mxu0 %v773
    %775 = vmatprep.subr.mxu0 0.0
    %v776 = vand.u32 %v36, 4294901760
    %v777 = vsub.f32 %v36, %v776
    %v778 = vand.u32 %v777, 4294901760
    %779 = vmatpush1.msra.mxu0 %v778
    %780 = vmatprep.subr.mxu0 0.0
    %v781 = vand.u32 %v37, 4294901760
    %v782 = vsub.f32 %v37, %v781
    %v783 = vand.u32 %v782, 4294901760
    %784 = vmatpush1.msra.mxu0 %v783
    %785 = vmatprep.subr.mxu0 0.0
    %v786 = vand.u32 %v38, 4294901760
    %v787 = vsub.f32 %v38, %v786
    %v788 = vand.u32 %v787, 4294901760
    %789 = vmatpush1.msra.mxu0 %v788
    %790 = vmatprep.subr.mxu0 0.0
    %v791 = vand.u32 %v39, 4294901760
    %v792 = vsub.f32 %v39, %v791
    %v793 = vand.u32 %v792, 4294901760
    %794 = vmatpush1.msra.mxu0 %v793
    %795 = vmatprep.subr.mxu0 0.0
    %v796 = vand.u32 %v40, 4294901760
    %v797 = vsub.f32 %v40, %v796
    %v798 = vand.u32 %v797, 4294901760
    %799 = vmatpush1.msra.mxu0 %v798
    %800 = vmatprep.subr.mxu0 0.0
    %v801 = vand.u32 %v41, 4294901760
    %v802 = vsub.f32 %v41, %v801
    %v803 = vand.u32 %v802, 4294901760
    %804 = vmatpush1.msra.mxu0 %v803
    %805 = vmatprep.subr.mxu0 0.0
    %v806 = vand.u32 %v42, 4294901760
    %v807 = vsub.f32 %v42, %v806
    %v808 = vand.u32 %v807, 4294901760
    %809 = vmatpush1.msra.mxu0 %v808
    %810 = vmatprep.subr.mxu0 0.0
    %v811 = vand.u32 %v43, 4294901760
    %v812 = vsub.f32 %v43, %v811
    %v813 = vand.u32 %v812, 4294901760
    %814 = vmatpush1.msra.mxu0 %v813
    %815 = vmatprep.subr.mxu0 0.0
    %v816 = vand.u32 %v44, 4294901760
    %v817 = vsub.f32 %v44, %v816
    %v818 = vand.u32 %v817, 4294901760
    %819 = vmatpush1.msra.mxu0 %v818
    %820 = vmatprep.subr.mxu0 0.0
    %v821 = vand.u32 %v45, 4294901760
    %v822 = vsub.f32 %v45, %v821
    %v823 = vand.u32 %v822, 4294901760
    %824 = vmatpush1.msra.mxu0 %v823
    %825 = vmatprep.subr.mxu0 0.0
    %v826 = vand.u32 %v46, 4294901760
    %v827 = vsub.f32 %v46, %v826
    %v828 = vand.u32 %v827, 4294901760
    %829 = vmatpush1.msra.mxu0 %v828
    %830 = vmatprep.subr.mxu0 0.0
    %v831 = vand.u32 %v47, 4294901760
    %v832 = vsub.f32 %v47, %v831
    %v833 = vand.u32 %v832, 4294901760
    %834 = vmatpush1.msra.mxu0 %v833
    %835 = vmatprep.subr.mxu0 0.0
    %v836 = vand.u32 %v48, 4294901760
    %v837 = vsub.f32 %v48, %v836
    %v838 = vand.u32 %v837, 4294901760
    %839 = vmatpush1.msra.mxu0 %v838
    %840 = vmatprep.subr.mxu0 0.0
    %v841 = vand.u32 %v49, 4294901760
    %v842 = vsub.f32 %v49, %v841
    %v843 = vand.u32 %v842, 4294901760
    %844 = vmatpush1.msra.mxu0 %v843
    %845 = vmatprep.subr.mxu0 0.0
    %v846 = vand.u32 %v50, 4294901760
    %v847 = vsub.f32 %v50, %v846
    %v848 = vand.u32 %v847, 4294901760
    %849 = vmatpush1.msra.mxu0 %v848
    %850 = vmatprep.subr.mxu0 0.0
    %v851 = vand.u32 %v51, 4294901760
    %v852 = vsub.f32 %v51, %v851
    %v853 = vand.u32 %v852, 4294901760
    %854 = vmatpush1.msra.mxu0 %v853
    %855 = vmatprep.subr.mxu0 0.0
    %v856 = vand.u32 %v52, 4294901760
    %v857 = vsub.f32 %v52, %v856
    %v858 = vand.u32 %v857, 4294901760
    %859 = vmatpush1.msra.mxu0 %v858
    %860 = vmatprep.subr.mxu0 0.0
    %v861 = vand.u32 %v53, 4294901760
    %v862 = vsub.f32 %v53, %v861
    %v863 = vand.u32 %v862, 4294901760
    %864 = vmatpush1.msra.mxu0 %v863
    %v865 = vand.u32 %v102, 4294901760
    %866 = vmatprep.mubr.f32.mxu0 %v865
    %v867 = vand.u32 %v98, 4294901760
    %868 = vmatmul.mubr.f32.gmra.mrb[0].mxu0 %v867
    %v869 = vpop.f32.mrb[0].mxu0
    %v870 = vadd.f32 %v702, %v869
    %v871 = vpop.f32.mrb[0].mxu0
    %872 = vdwg.mxu0
    %873 = vmatprep.subr.mxu0 0.0
    %v874 = vand.u32 %v22, 4294901760
    %875 = vmatpush1.msra.mxu0 %v874
    %876 = vmatprep.subr.mxu0 0.0
    %v877 = vand.u32 %v23, 4294901760
    %878 = vmatpush1.msra.mxu0 %v877
    %879 = vmatprep.subr.mxu0 0.0
    %v880 = vand.u32 %v24, 4294901760
    %881 = vmatpush1.msra.mxu0 %v880
    %882 = vmatprep.subr.mxu0 0.0
    %v883 = vand.u32 %v25, 4294901760
    %884 = vmatpush1.msra.mxu0 %v883
    %885 = vmatprep.subr.mxu0 0.0
    %v886 = vand.u32 %v26, 4294901760
    %887 = vmatpush1.msra.mxu0 %v886
    %888 = vmatprep.subr.mxu0 0.0
    %v889 = vand.u32 %v27, 4294901760
    %890 = vmatpush1.msra.mxu0 %v889
    %891 = vmatprep.subr.mxu0 0.0
    %v892 = vand.u32 %v28, 4294901760
    %893 = vmatpush1.msra.mxu0 %v892
    %894 = vmatprep.subr.mxu0 0.0
    %v895 = vand.u32 %v29, 4294901760
    %896 = vmatpush1.msra.mxu0 %v895
    %897 = vmatprep.subr.mxu0 0.0
    %v898 = vand.u32 %v30, 4294901760
    %899 = vmatpush1.msra.mxu0 %v898
    %900 = vmatprep.subr.mxu0 0.0
    %v901 = vand.u32 %v31, 4294901760
    %902 = vmatpush1.msra.mxu0 %v901
    %903 = vmatprep.subr.mxu0 0.0
    %v904 = vand.u32 %v32, 4294901760
    %905 = vmatpush1.msra.mxu0 %v904
    %906 = vmatprep.subr.mxu0 0.0
    %v907 = vand.u32 %v33, 4294901760
    %908 = vmatpush1.msra.mxu0 %v907
    %909 = vmatprep.subr.mxu0 0.0
    %v910 = vand.u32 %v34, 4294901760
    %911 = vmatpush1.msra.mxu0 %v910
    %912 = vmatprep.subr.mxu0 0.0
    %v913 = vand.u32 %v35, 4294901760
    %914 = vmatpush1.msra.mxu0 %v913
    %915 = vmatprep.subr.mxu0 0.0
    %v916 = vand.u32 %v36, 4294901760
    %917 = vmatpush1.msra.mxu0 %v916
    %918 = vmatprep.subr.mxu0 0.0
    %v919 = vand.u32 %v37, 4294901760
    %920 = vmatpush1.msra.mxu0 %v919
    %921 = vmatprep.subr.mxu0 0.0
    %v922 = vand.u32 %v38, 4294901760
    %923 = vmatpush1.msra.mxu0 %v922
    %924 = vmatprep.subr.mxu0 0.0
    %v925 = vand.u32 %v39, 4294901760
    %926 = vmatpush1.msra.mxu0 %v925
    %927 = vmatprep.subr.mxu0 0.0
    %v928 = vand.u32 %v40, 4294901760
    %929 = vmatpush1.msra.mxu0 %v928
    %930 = vmatprep.subr.mxu0 0.0
    %v931 = vand.u32 %v41, 4294901760
    %932 = vmatpush1.msra.mxu0 %v931
    %933 = vmatprep.subr.mxu0 0.0
    %v934 = vand.u32 %v42, 4294901760
    %935 = vmatpush1.msra.mxu0 %v934
    %936 = vmatprep.subr.mxu0 0.0
    %v937 = vand.u32 %v43, 4294901760
    %938 = vmatpush1.msra.mxu0 %v937
    %939 = vmatprep.subr.mxu0 0.0
    %v940 = vand.u32 %v44, 4294901760
    %941 = vmatpush1.msra.mxu0 %v940
    %942 = vmatprep.subr.mxu0 0.0
    %v943 = vand.u32 %v45, 4294901760
    %944 = vmatpush1.msra.mxu0 %v943
    %945 = vmatprep.subr.mxu0 0.0
    %v946 = vand.u32 %v46, 4294901760
    %947 = vmatpush1.msra.mxu0 %v946
    %948 = vmatprep.subr.mxu0 0.0
    %v949 = vand.u32 %v47, 4294901760
    %950 = vmatpush1.msra.mxu0 %v949
    %951 = vmatprep.subr.mxu0 0.0
    %v952 = vand.u32 %v48, 4294901760
    %953 = vmatpush1.msra.mxu0 %v952
    %954 = vmatprep.subr.mxu0 0.0
    %v955 = vand.u32 %v49, 4294901760
    %956 = vmatpush1.msra.mxu0 %v955
    %957 = vmatprep.subr.mxu0 0.0
    %v958 = vand.u32 %v50, 4294901760
    %959 = vmatpush1.msra.mxu0 %v958
    %960 = vmatprep.subr.mxu0 0.0
    %v961 = vand.u32 %v51, 4294901760
    %962 = vmatpush1.msra.mxu0 %v961
    %963 = vmatprep.subr.mxu0 0.0
    %v964 = vand.u32 %v52, 4294901760
    %965 = vmatpush1.msra.mxu0 %v964
    %966 = vmatprep.subr.mxu0 0.0
    %v967 = vand.u32 %v53, 4294901760
    %968 = vmatpush1.msra.mxu0 %v967
    %v969 = vand.u32 %v102, 4294901760
    %970 = vmatprep.mubr.f32.mxu0 %v969
    %v971 = vand.u32 %v98, 4294901760
    %972 = vmatmul.mubr.f32.gmra.mrb[0].mxu0 %v971
    %v973 = vpop.f32.mrb[0].mxu0
    %v974 = vadd.f32 %v870, %v973
    %v975 = vpop.f32.mrb[0].mxu0
    %976 = vdwg.mxu0
    %977 = vmatprep.subr.mxu0 0.0
    %v978 = vand.u32 %v54, 4294901760
    %979 = vmatpush1.msra.mxu0 %v978
    %980 = vmatprep.subr.mxu0 0.0
    %v981 = vand.u32 %v55, 4294901760
    %982 = vmatpush1.msra.mxu0 %v981
    %983 = vmatprep.subr.mxu0 0.0
    %v984 = vand.u32 %v56, 4294901760
    %985 = vmatpush1.msra.mxu0 %v984
    %986 = vmatprep.subr.mxu0 0.0
    %v987 = vand.u32 %v57, 4294901760
    %988 = vmatpush1.msra.mxu0 %v987
    %989 = vmatprep.subr.mxu0 0.0
    %v990 = vand.u32 %v58, 4294901760
    %991 = vmatpush1.msra.mxu0 %v990
    %992 = vmatprep.subr.mxu0 0.0
    %v993 = vand.u32 %v59, 4294901760
    %994 = vmatpush1.msra.mxu0 %v993
    %995 = vmatprep.subr.mxu0 0.0
    %v996 = vand.u32 %v60, 4294901760
    %997 = vmatpush1.msra.mxu0 %v996
    %998 = vmatprep.subr.mxu0 0.0
    %v999 = vand.u32 %v61, 4294901760
    %1000 = vmatpush1.msra.mxu0 %v999
    %1001 = vmatprep.subr.mxu0 0.0
    %v1002 = vand.u32 %v62, 4294901760
    %1003 = vmatpush1.msra.mxu0 %v1002
    %1004 = vmatprep.subr.mxu0 0.0
    %v1005 = vand.u32 %v63, 4294901760
    %1006 = vmatpush1.msra.mxu0 %v1005
    %1007 = vmatprep.subr.mxu0 0.0
    %v1008 = vand.u32 %v64, 4294901760
    %1009 = vmatpush1.msra.mxu0 %v1008
    %1010 = vmatprep.subr.mxu0 0.0
    %v1011 = vand.u32 %v65, 4294901760
    %1012 = vmatpush1.msra.mxu0 %v1011
    %1013 = vmatprep.subr.mxu0 0.0
    %v1014 = vand.u32 %v66, 4294901760
    %1015 = vmatpush1.msra.mxu0 %v1014
    %1016 = vmatprep.subr.mxu0 0.0
    %v1017 = vand.u32 %v67, 4294901760
    %1018 = vmatpush1.msra.mxu0 %v1017
    %1019 = vmatprep.subr.mxu0 0.0
    %v1020 = vand.u32 %v68, 4294901760
    %1021 = vmatpush1.msra.mxu0 %v1020
    %1022 = vmatprep.subr.mxu0 0.0
    %v1023 = vand.u32 %v69, 4294901760
    %1024 = vmatpush1.msra.mxu0 %v1023
    %1025 = vmatprep.subr.mxu0 0.0
    %v1026 = vand.u32 %v70, 4294901760
    %1027 = vmatpush1.msra.mxu0 %v1026
    %1028 = vmatprep.subr.mxu0 0.0
    %v1029 = vand.u32 %v71, 4294901760
    %1030 = vmatpush1.msra.mxu0 %v1029
    %1031 = vmatprep.subr.mxu0 0.0
    %v1032 = vand.u32 %v72, 4294901760
    %1033 = vmatpush1.msra.mxu0 %v1032
    %1034 = vmatprep.subr.mxu0 0.0
    %v1035 = vand.u32 %v73, 4294901760
    %1036 = vmatpush1.msra.mxu0 %v1035
    %1037 = vmatprep.subr.mxu0 0.0
    %v1038 = vand.u32 %v74, 4294901760
    %1039 = vmatpush1.msra.mxu0 %v1038
    %1040 = vmatprep.subr.mxu0 0.0
    %v1041 = vand.u32 %v75, 4294901760
    %1042 = vmatpush1.msra.mxu0 %v1041
    %1043 = vmatprep.subr.mxu0 0.0
    %v1044 = vand.u32 %v76, 4294901760
    %1045 = vmatpush1.msra.mxu0 %v1044
    %1046 = vmatprep.subr.mxu0 0.0
    %v1047 = vand.u32 %v77, 4294901760
    %1048 = vmatpush1.msra.mxu0 %v1047
    %1049 = vmatprep.subr.mxu0 0.0
    %v1050 = vand.u32 %v78, 4294901760
    %1051 = vmatpush1.msra.mxu0 %v1050
    %1052 = vmatprep.subr.mxu0 0.0
    %v1053 = vand.u32 %v79, 4294901760
    %1054 = vmatpush1.msra.mxu0 %v1053
    %1055 = vmatprep.subr.mxu0 0.0
    %v1056 = vand.u32 %v80, 4294901760
    %1057 = vmatpush1.msra.mxu0 %v1056
    %1058 = vmatprep.subr.mxu0 0.0
    %v1059 = vand.u32 %v81, 4294901760
    %1060 = vmatpush1.msra.mxu0 %v1059
    %1061 = vmatprep.subr.mxu0 0.0
    %v1062 = vand.u32 %v82, 4294901760
    %1063 = vmatpush1.msra.mxu0 %v1062
    %1064 = vmatprep.subr.mxu0 0.0
    %v1065 = vand.u32 %v83, 4294901760
    %1066 = vmatpush1.msra.mxu0 %v1065
    %1067 = vmatprep.subr.mxu0 0.0
    %v1068 = vand.u32 %v84, 4294901760
    %1069 = vmatpush1.msra.mxu0 %v1068
    %1070 = vmatprep.subr.mxu0 0.0
    %v1071 = vand.u32 %v85, 4294901760
    %1072 = vmatpush1.msra.mxu0 %v1071
    %v1073 = vand.u32 %v110, 4294901760
    %v1074 = vsub.f32 %v110, %v1073
    %v1075 = vand.u32 %v1074, 4294901760
    %v1076 = vsub.f32 %v1074, %v1075
    %v1077 = vand.u32 %v1076, 4294901760
    %1078 = vmatprep.mubr.f32.mxu0 %v1077
    %v1079 = vand.u32 %v106, 4294901760
    %v1080 = vsub.f32 %v106, %v1079
    %v1081 = vand.u32 %v1080, 4294901760
    %v1082 = vsub.f32 %v1080, %v1081
    %v1083 = vand.u32 %v1082, 4294901760
    %1084 = vmatmul.mubr.f32.gmra.mrb[0].mxu0 %v1083
    %v1085 = vpop.f32.mrb[0].mxu0
    %v1086 = vadd.f32 %v974, %v1085
    %v1087 = vpop.f32.mrb[0].mxu0
    %1088 = vdwg.mxu0
    %1089 = vmatprep.subr.mxu0 0.0
    %v1090 = vand.u32 %v54, 4294901760
    %v1091 = vsub.f32 %v54, %v1090
    %v1092 = vand.u32 %v1091, 4294901760
    %v1093 = vsub.f32 %v1091, %v1092
    %v1094 = vand.u32 %v1093, 4294901760
    %1095 = vmatpush1.msra.mxu0 %v1094
    %1096 = vmatprep.subr.mxu0 0.0
    %v1097 = vand.u32 %v55, 4294901760
    %v1098 = vsub.f32 %v55, %v1097
    %v1099 = vand.u32 %v1098, 4294901760
    %v1100 = vsub.f32 %v1098, %v1099
    %v1101 = vand.u32 %v1100, 4294901760
    %1102 = vmatpush1.msra.mxu0 %v1101
    %1103 = vmatprep.subr.mxu0 0.0
    %v1104 = vand.u32 %v56, 4294901760
    %v1105 = vsub.f32 %v56, %v1104
    %v1106 = vand.u32 %v1105, 4294901760
    %v1107 = vsub.f32 %v1105, %v1106
    %v1108 = vand.u32 %v1107, 4294901760
    %1109 = vmatpush1.msra.mxu0 %v1108
    %1110 = vmatprep.subr.mxu0 0.0
    %v1111 = vand.u32 %v57, 4294901760
    %v1112 = vsub.f32 %v57, %v1111
    %v1113 = vand.u32 %v1112, 4294901760
    %v1114 = vsub.f32 %v1112, %v1113
    %v1115 = vand.u32 %v1114, 4294901760
    %1116 = vmatpush1.msra.mxu0 %v1115
    %1117 = vmatprep.subr.mxu0 0.0
    %v1118 = vand.u32 %v58, 4294901760
    %v1119 = vsub.f32 %v58, %v1118
    %v1120 = vand.u32 %v1119, 4294901760
    %v1121 = vsub.f32 %v1119, %v1120
    %v1122 = vand.u32 %v1121, 4294901760
    %1123 = vmatpush1.msra.mxu0 %v1122
    %1124 = vmatprep.subr.mxu0 0.0
    %v1125 = vand.u32 %v59, 4294901760
    %v1126 = vsub.f32 %v59, %v1125
    %v1127 = vand.u32 %v1126, 4294901760
    %v1128 = vsub.f32 %v1126, %v1127
    %v1129 = vand.u32 %v1128, 4294901760
    %1130 = vmatpush1.msra.mxu0 %v1129
    %1131 = vmatprep.subr.mxu0 0.0
    %v1132 = vand.u32 %v60, 4294901760
    %v1133 = vsub.f32 %v60, %v1132
    %v1134 = vand.u32 %v1133, 4294901760
    %v1135 = vsub.f32 %v1133, %v1134
    %v1136 = vand.u32 %v1135, 4294901760
    %1137 = vmatpush1.msra.mxu0 %v1136
    %1138 = vmatprep.subr.mxu0 0.0
    %v1139 = vand.u32 %v61, 4294901760
    %v1140 = vsub.f32 %v61, %v1139
    %v1141 = vand.u32 %v1140, 4294901760
    %v1142 = vsub.f32 %v1140, %v1141
    %v1143 = vand.u32 %v1142, 4294901760
    %1144 = vmatpush1.msra.mxu0 %v1143
    %1145 = vmatprep.subr.mxu0 0.0
    %v1146 = vand.u32 %v62, 4294901760
    %v1147 = vsub.f32 %v62, %v1146
    %v1148 = vand.u32 %v1147, 4294901760
    %v1149 = vsub.f32 %v1147, %v1148
    %v1150 = vand.u32 %v1149, 4294901760
    %1151 = vmatpush1.msra.mxu0 %v1150
    %1152 = vmatprep.subr.mxu0 0.0
    %v1153 = vand.u32 %v63, 4294901760
    %v1154 = vsub.f32 %v63, %v1153
    %v1155 = vand.u32 %v1154, 4294901760
    %v1156 = vsub.f32 %v1154, %v1155
    %v1157 = vand.u32 %v1156, 4294901760
    %1158 = vmatpush1.msra.mxu0 %v1157
    %1159 = vmatprep.subr.mxu0 0.0
    %v1160 = vand.u32 %v64, 4294901760
    %v1161 = vsub.f32 %v64, %v1160
    %v1162 = vand.u32 %v1161, 4294901760
    %v1163 = vsub.f32 %v1161, %v1162
    %v1164 = vand.u32 %v1163, 4294901760
    %1165 = vmatpush1.msra.mxu0 %v1164
    %1166 = vmatprep.subr.mxu0 0.0
    %v1167 = vand.u32 %v65, 4294901760
    %v1168 = vsub.f32 %v65, %v1167
    %v1169 = vand.u32 %v1168, 4294901760
    %v1170 = vsub.f32 %v1168, %v1169
    %v1171 = vand.u32 %v1170, 4294901760
    %1172 = vmatpush1.msra.mxu0 %v1171
    %1173 = vmatprep.subr.mxu0 0.0
    %v1174 = vand.u32 %v66, 4294901760
    %v1175 = vsub.f32 %v66, %v1174
    %v1176 = vand.u32 %v1175, 4294901760
    %v1177 = vsub.f32 %v1175, %v1176
    %v1178 = vand.u32 %v1177, 4294901760
    %1179 = vmatpush1.msra.mxu0 %v1178
    %1180 = vmatprep.subr.mxu0 0.0
    %v1181 = vand.u32 %v67, 4294901760
    %v1182 = vsub.f32 %v67, %v1181
    %v1183 = vand.u32 %v1182, 4294901760
    %v1184 = vsub.f32 %v1182, %v1183
    %v1185 = vand.u32 %v1184, 4294901760
    %1186 = vmatpush1.msra.mxu0 %v1185
    %1187 = vmatprep.subr.mxu0 0.0
    %v1188 = vand.u32 %v68, 4294901760
    %v1189 = vsub.f32 %v68, %v1188
    %v1190 = vand.u32 %v1189, 4294901760
    %v1191 = vsub.f32 %v1189, %v1190
    %v1192 = vand.u32 %v1191, 4294901760
    %1193 = vmatpush1.msra.mxu0 %v1192
    %1194 = vmatprep.subr.mxu0 0.0
    %v1195 = vand.u32 %v69, 4294901760
    %v1196 = vsub.f32 %v69, %v1195
    %v1197 = vand.u32 %v1196, 4294901760
    %v1198 = vsub.f32 %v1196, %v1197
    %v1199 = vand.u32 %v1198, 4294901760
    %1200 = vmatpush1.msra.mxu0 %v1199
    %1201 = vmatprep.subr.mxu0 0.0
    %v1202 = vand.u32 %v70, 4294901760
    %v1203 = vsub.f32 %v70, %v1202
    %v1204 = vand.u32 %v1203, 4294901760
    %v1205 = vsub.f32 %v1203, %v1204
    %v1206 = vand.u32 %v1205, 4294901760
    %1207 = vmatpush1.msra.mxu0 %v1206
    %1208 = vmatprep.subr.mxu0 0.0
    %v1209 = vand.u32 %v71, 4294901760
    %v1210 = vsub.f32 %v71, %v1209
    %v1211 = vand.u32 %v1210, 4294901760
    %v1212 = vsub.f32 %v1210, %v1211
    %v1213 = vand.u32 %v1212, 4294901760
    %1214 = vmatpush1.msra.mxu0 %v1213
    %1215 = vmatprep.subr.mxu0 0.0
    %v1216 = vand.u32 %v72, 4294901760
    %v1217 = vsub.f32 %v72, %v1216
    %v1218 = vand.u32 %v1217, 4294901760
    %v1219 = vsub.f32 %v1217, %v1218
    %v1220 = vand.u32 %v1219, 4294901760
    %1221 = vmatpush1.msra.mxu0 %v1220
    %1222 = vmatprep.subr.mxu0 0.0
    %v1223 = vand.u32 %v73, 4294901760
    %v1224 = vsub.f32 %v73, %v1223
    %v1225 = vand.u32 %v1224, 4294901760
    %v1226 = vsub.f32 %v1224, %v1225
    %v1227 = vand.u32 %v1226, 4294901760
    %1228 = vmatpush1.msra.mxu0 %v1227
    %1229 = vmatprep.subr.mxu0 0.0
    %v1230 = vand.u32 %v74, 4294901760
    %v1231 = vsub.f32 %v74, %v1230
    %v1232 = vand.u32 %v1231, 4294901760
    %v1233 = vsub.f32 %v1231, %v1232
    %v1234 = vand.u32 %v1233, 4294901760
    %1235 = vmatpush1.msra.mxu0 %v1234
    %1236 = vmatprep.subr.mxu0 0.0
    %v1237 = vand.u32 %v75, 4294901760
    %v1238 = vsub.f32 %v75, %v1237
    %v1239 = vand.u32 %v1238, 4294901760
    %v1240 = vsub.f32 %v1238, %v1239
    %v1241 = vand.u32 %v1240, 4294901760
    %1242 = vmatpush1.msra.mxu0 %v1241
    %1243 = vmatprep.subr.mxu0 0.0
    %v1244 = vand.u32 %v76, 4294901760
    %v1245 = vsub.f32 %v76, %v1244
    %v1246 = vand.u32 %v1245, 4294901760
    %v1247 = vsub.f32 %v1245, %v1246
    %v1248 = vand.u32 %v1247, 4294901760
    %1249 = vmatpush1.msra.mxu0 %v1248
    %1250 = vmatprep.subr.mxu0 0.0
    %v1251 = vand.u32 %v77, 4294901760
    %v1252 = vsub.f32 %v77, %v1251
    %v1253 = vand.u32 %v1252, 4294901760
    %v1254 = vsub.f32 %v1252, %v1253
    %v1255 = vand.u32 %v1254, 4294901760
    %1256 = vmatpush1.msra.mxu0 %v1255
    %1257 = vmatprep.subr.mxu0 0.0
    %v1258 = vand.u32 %v78, 4294901760
    %v1259 = vsub.f32 %v78, %v1258
    %v1260 = vand.u32 %v1259, 4294901760
    %v1261 = vsub.f32 %v1259, %v1260
    %v1262 = vand.u32 %v1261, 4294901760
    %1263 = vmatpush1.msra.mxu0 %v1262
    %1264 = vmatprep.subr.mxu0 0.0
    %v1265 = vand.u32 %v79, 4294901760
    %v1266 = vsub.f32 %v79, %v1265
    %v1267 = vand.u32 %v1266, 4294901760
    %v1268 = vsub.f32 %v1266, %v1267
    %v1269 = vand.u32 %v1268, 4294901760
    %1270 = vmatpush1.msra.mxu0 %v1269
    %1271 = vmatprep.subr.mxu0 0.0
    %v1272 = vand.u32 %v80, 4294901760
    %v1273 = vsub.f32 %v80, %v1272
    %v1274 = vand.u32 %v1273, 4294901760
    %v1275 = vsub.f32 %v1273, %v1274
    %v1276 = vand.u32 %v1275, 4294901760
    %1277 = vmatpush1.msra.mxu0 %v1276
    %1278 = vmatprep.subr.mxu0 0.0
    %v1279 = vand.u32 %v81, 4294901760
    %v1280 = vsub.f32 %v81, %v1279
    %v1281 = vand.u32 %v1280, 4294901760
    %v1282 = vsub.f32 %v1280, %v1281
    %v1283 = vand.u32 %v1282, 4294901760
    %1284 = vmatpush1.msra.mxu0 %v1283
    %1285 = vmatprep.subr.mxu0 0.0
    %v1286 = vand.u32 %v82, 4294901760
    %v1287 = vsub.f32 %v82, %v1286
    %v1288 = vand.u32 %v1287, 4294901760
    %v1289 = vsub.f32 %v1287, %v1288
    %v1290 = vand.u32 %v1289, 4294901760
    %1291 = vmatpush1.msra.mxu0 %v1290
    %1292 = vmatprep.subr.mxu0 0.0
    %v1293 = vand.u32 %v83, 4294901760
    %v1294 = vsub.f32 %v83, %v1293
    %v1295 = vand.u32 %v1294, 4294901760
    %v1296 = vsub.f32 %v1294, %v1295
    %v1297 = vand.u32 %v1296, 4294901760
    %1298 = vmatpush1.msra.mxu0 %v1297
    %1299 = vmatprep.subr.mxu0 0.0
    %v1300 = vand.u32 %v84, 4294901760
    %v1301 = vsub.f32 %v84, %v1300
    %v1302 = vand.u32 %v1301, 4294901760
    %v1303 = vsub.f32 %v1301, %v1302
    %v1304 = vand.u32 %v1303, 4294901760
    %1305 = vmatpush1.msra.mxu0 %v1304
    %1306 = vmatprep.subr.mxu0 0.0
    %v1307 = vand.u32 %v85, 4294901760
    %v1308 = vsub.f32 %v85, %v1307
    %v1309 = vand.u32 %v1308, 4294901760
    %v1310 = vsub.f32 %v1308, %v1309
    %v1311 = vand.u32 %v1310, 4294901760
    %1312 = vmatpush1.msra.mxu0 %v1311
    %v1313 = vand.u32 %v110, 4294901760
    %1314 = vmatprep.mubr.f32.mxu0 %v1313
    %v1315 = vand.u32 %v106, 4294901760
    %1316 = vmatmul.mubr.f32.gmra.mrb[0].mxu0 %v1315
    %v1317 = vpop.f32.mrb[0].mxu0
    %v1318 = vadd.f32 %v1086, %v1317
    %v1319 = vpop.f32.mrb[0].mxu0
    %1320 = vdwg.mxu0
    %1321 = vmatprep.subr.mxu0 0.0
    %v1322 = vand.u32 %v54, 4294901760
    %v1323 = vsub.f32 %v54, %v1322
    %1324 = vmatpush1.msra.mxu0 %v1323
    %1325 = vmatprep.subr.mxu0 0.0
    %v1326 = vand.u32 %v55, 4294901760
    %v1327 = vsub.f32 %v55, %v1326
    %1328 = vmatpush1.msra.mxu0 %v1327
    %1329 = vmatprep.subr.mxu0 0.0
    %v1330 = vand.u32 %v56, 4294901760
    %v1331 = vsub.f32 %v56, %v1330
    %1332 = vmatpush1.msra.mxu0 %v1331
    %1333 = vmatprep.subr.mxu0 0.0
    %v1334 = vand.u32 %v57, 4294901760
    %v1335 = vsub.f32 %v57, %v1334
    %1336 = vmatpush1.msra.mxu0 %v1335
    %1337 = vmatprep.subr.mxu0 0.0
    %v1338 = vand.u32 %v58, 4294901760
    %v1339 = vsub.f32 %v58, %v1338
    %1340 = vmatpush1.msra.mxu0 %v1339
    %1341 = vmatprep.subr.mxu0 0.0
    %v1342 = vand.u32 %v59, 4294901760
    %v1343 = vsub.f32 %v59, %v1342
    %1344 = vmatpush1.msra.mxu0 %v1343
    %1345 = vmatprep.subr.mxu0 0.0
    %v1346 = vand.u32 %v60, 4294901760
    %v1347 = vsub.f32 %v60, %v1346
    %1348 = vmatpush1.msra.mxu0 %v1347
    %1349 = vmatprep.subr.mxu0 0.0
    %v1350 = vand.u32 %v61, 4294901760
    %v1351 = vsub.f32 %v61, %v1350
    %1352 = vmatpush1.msra.mxu0 %v1351
    %1353 = vmatprep.subr.mxu0 0.0
    %v1354 = vand.u32 %v62, 4294901760
    %v1355 = vsub.f32 %v62, %v1354
    %1356 = vmatpush1.msra.mxu0 %v1355
    %1357 = vmatprep.subr.mxu0 0.0
    %v1358 = vand.u32 %v63, 4294901760
    %v1359 = vsub.f32 %v63, %v1358
    %1360 = vmatpush1.msra.mxu0 %v1359
    %1361 = vmatprep.subr.mxu0 0.0
    %v1362 = vand.u32 %v64, 4294901760
    %v1363 = vsub.f32 %v64, %v1362
    %1364 = vmatpush1.msra.mxu0 %v1363
    %1365 = vmatprep.subr.mxu0 0.0
    %v1366 = vand.u32 %v65, 4294901760
    %v1367 = vsub.f32 %v65, %v1366
    %1368 = vmatpush1.msra.mxu0 %v1367
    %1369 = vmatprep.subr.mxu0 0.0
    %v1370 = vand.u32 %v66, 4294901760
    %v1371 = vsub.f32 %v66, %v1370
    %1372 = vmatpush1.msra.mxu0 %v1371
    %1373 = vmatprep.subr.mxu0 0.0
    %v1374 = vand.u32 %v67, 4294901760
    %v1375 = vsub.f32 %v67, %v1374
    %1376 = vmatpush1.msra.mxu0 %v1375
    %1377 = vmatprep.subr.mxu0 0.0
    %v1378 = vand.u32 %v68, 4294901760
    %v1379 = vsub.f32 %v68, %v1378
    %1380 = vmatpush1.msra.mxu0 %v1379
    %1381 = vmatprep.subr.mxu0 0.0
    %v1382 = vand.u32 %v69, 4294901760
    %v1383 = vsub.f32 %v69, %v1382
    %1384 = vmatpush1.msra.mxu0 %v1383
    %1385 = vmatprep.subr.mxu0 0.0
    %v1386 = vand.u32 %v70, 4294901760
    %v1387 = vsub.f32 %v70, %v1386
    %1388 = vmatpush1.msra.mxu0 %v1387
    %1389 = vmatprep.subr.mxu0 0.0
    %v1390 = vand.u32 %v71, 4294901760
    %v1391 = vsub.f32 %v71, %v1390
    %1392 = vmatpush1.msra.mxu0 %v1391
    %1393 = vmatprep.subr.mxu0 0.0
    %v1394 = vand.u32 %v72, 4294901760
    %v1395 = vsub.f32 %v72, %v1394
    %1396 = vmatpush1.msra.mxu0 %v1395
    %1397 = vmatprep.subr.mxu0 0.0
    %v1398 = vand.u32 %v73, 4294901760
    %v1399 = vsub.f32 %v73, %v1398
    %1400 = vmatpush1.msra.mxu0 %v1399
    %1401 = vmatprep.subr.mxu0 0.0
    %v1402 = vand.u32 %v74, 4294901760
    %v1403 = vsub.f32 %v74, %v1402
    %1404 = vmatpush1.msra.mxu0 %v1403
    %1405 = vmatprep.subr.mxu0 0.0
    %v1406 = vand.u32 %v75, 4294901760
    %v1407 = vsub.f32 %v75, %v1406
    %1408 = vmatpush1.msra.mxu0 %v1407
    %1409 = vmatprep.subr.mxu0 0.0
    %v1410 = vand.u32 %v76, 4294901760
    %v1411 = vsub.f32 %v76, %v1410
    %1412 = vmatpush1.msra.mxu0 %v1411
    %1413 = vmatprep.subr.mxu0 0.0
    %v1414 = vand.u32 %v77, 4294901760
    %v1415 = vsub.f32 %v77, %v1414
    %1416 = vmatpush1.msra.mxu0 %v1415
    %1417 = vmatprep.subr.mxu0 0.0
    %v1418 = vand.u32 %v78, 4294901760
    %v1419 = vsub.f32 %v78, %v1418
    %1420 = vmatpush1.msra.mxu0 %v1419
    %1421 = vmatprep.subr.mxu0 0.0
    %v1422 = vand.u32 %v79, 4294901760
    %v1423 = vsub.f32 %v79, %v1422
    %1424 = vmatpush1.msra.mxu0 %v1423
    %1425 = vmatprep.subr.mxu0 0.0
    %v1426 = vand.u32 %v80, 4294901760
    %v1427 = vsub.f32 %v80, %v1426
    %1428 = vmatpush1.msra.mxu0 %v1427
    %1429 = vmatprep.subr.mxu0 0.0
    %v1430 = vand.u32 %v81, 4294901760
    %v1431 = vsub.f32 %v81, %v1430
    %1432 = vmatpush1.msra.mxu0 %v1431
    %1433 = vmatprep.subr.mxu0 0.0
    %v1434 = vand.u32 %v82, 4294901760
    %v1435 = vsub.f32 %v82, %v1434
    %1436 = vmatpush1.msra.mxu0 %v1435
    %1437 = vmatprep.subr.mxu0 0.0
    %v1438 = vand.u32 %v83, 4294901760
    %v1439 = vsub.f32 %v83, %v1438
    %1440 = vmatpush1.msra.mxu0 %v1439
    %1441 = vmatprep.subr.mxu0 0.0
    %v1442 = vand.u32 %v84, 4294901760
    %v1443 = vsub.f32 %v84, %v1442
    %1444 = vmatpush1.msra.mxu0 %v1443
    %1445 = vmatprep.subr.mxu0 0.0
    %v1446 = vand.u32 %v85, 4294901760
    %v1447 = vsub.f32 %v85, %v1446
    %1448 = vmatpush1.msra.mxu0 %v1447
    %v1449 = vand.u32 %v110, 4294901760
    %v1450 = vsub.f32 %v110, %v1449
    %1451 = vmatprep.mubr.f32.mxu0 %v1450
    %v1452 = vand.u32 %v106, 4294901760
    %v1453 = vsub.f32 %v106, %v1452
    %1454 = vmatmul.mubr.f32.gmra.mrb[0].mxu0 %v1453
    %v1455 = vpop.f32.mrb[0].mxu0
    %v1456 = vadd.f32 %v1318, %v1455
    %v1457 = vpop.f32.mrb[0].mxu0
    %1458 = vdwg.mxu0
    %1459 = vmatprep.subr.mxu0 0.0
    %v1460 = vand.u32 %v54, 4294901760
    %1461 = vmatpush1.msra.mxu0 %v1460
    %1462 = vmatprep.subr.mxu0 0.0
    %v1463 = vand.u32 %v55, 4294901760
    %1464 = vmatpush1.msra.mxu0 %v1463
    %1465 = vmatprep.subr.mxu0 0.0
    %v1466 = vand.u32 %v56, 4294901760
    %1467 = vmatpush1.msra.mxu0 %v1466
    %1468 = vmatprep.subr.mxu0 0.0
    %v1469 = vand.u32 %v57, 4294901760
    %1470 = vmatpush1.msra.mxu0 %v1469
    %1471 = vmatprep.subr.mxu0 0.0
    %v1472 = vand.u32 %v58, 4294901760
    %1473 = vmatpush1.msra.mxu0 %v1472
    %1474 = vmatprep.subr.mxu0 0.0
    %v1475 = vand.u32 %v59, 4294901760
    %1476 = vmatpush1.msra.mxu0 %v1475
    %1477 = vmatprep.subr.mxu0 0.0
    %v1478 = vand.u32 %v60, 4294901760
    %1479 = vmatpush1.msra.mxu0 %v1478
    %1480 = vmatprep.subr.mxu0 0.0
    %v1481 = vand.u32 %v61, 4294901760
    %1482 = vmatpush1.msra.mxu0 %v1481
    %1483 = vmatprep.subr.mxu0 0.0
    %v1484 = vand.u32 %v62, 4294901760
    %1485 = vmatpush1.msra.mxu0 %v1484
    %1486 = vmatprep.subr.mxu0 0.0
    %v1487 = vand.u32 %v63, 4294901760
    %1488 = vmatpush1.msra.mxu0 %v1487
    %1489 = vmatprep.subr.mxu0 0.0
    %v1490 = vand.u32 %v64, 4294901760
    %1491 = vmatpush1.msra.mxu0 %v1490
    %1492 = vmatprep.subr.mxu0 0.0
    %v1493 = vand.u32 %v65, 4294901760
    %1494 = vmatpush1.msra.mxu0 %v1493
    %1495 = vmatprep.subr.mxu0 0.0
    %v1496 = vand.u32 %v66, 4294901760
    %1497 = vmatpush1.msra.mxu0 %v1496
    %1498 = vmatprep.subr.mxu0 0.0
    %v1499 = vand.u32 %v67, 4294901760
    %1500 = vmatpush1.msra.mxu0 %v1499
    %1501 = vmatprep.subr.mxu0 0.0
    %v1502 = vand.u32 %v68, 4294901760
    %1503 = vmatpush1.msra.mxu0 %v1502
    %1504 = vmatprep.subr.mxu0 0.0
    %v1505 = vand.u32 %v69, 4294901760
    %1506 = vmatpush1.msra.mxu0 %v1505
    %1507 = vmatprep.subr.mxu0 0.0
    %v1508 = vand.u32 %v70, 4294901760
    %1509 = vmatpush1.msra.mxu0 %v1508
    %1510 = vmatprep.subr.mxu0 0.0
    %v1511 = vand.u32 %v71, 4294901760
    %1512 = vmatpush1.msra.mxu0 %v1511
    %1513 = vmatprep.subr.mxu0 0.0
    %v1514 = vand.u32 %v72, 4294901760
    %1515 = vmatpush1.msra.mxu0 %v1514
    %1516 = vmatprep.subr.mxu0 0.0
    %v1517 = vand.u32 %v73, 4294901760
    %1518 = vmatpush1.msra.mxu0 %v1517
    %1519 = vmatprep.subr.mxu0 0.0
    %v1520 = vand.u32 %v74, 4294901760
    %1521 = vmatpush1.msra.mxu0 %v1520
    %1522 = vmatprep.subr.mxu0 0.0
    %v1523 = vand.u32 %v75, 4294901760
    %1524 = vmatpush1.msra.mxu0 %v1523
    %1525 = vmatprep.subr.mxu0 0.0
    %v1526 = vand.u32 %v76, 4294901760
    %1527 = vmatpush1.msra.mxu0 %v1526
    %1528 = vmatprep.subr.mxu0 0.0
    %v1529 = vand.u32 %v77, 4294901760
    %1530 = vmatpush1.msra.mxu0 %v1529
    %1531 = vmatprep.subr.mxu0 0.0
    %v1532 = vand.u32 %v78, 4294901760
    %1533 = vmatpush1.msra.mxu0 %v1532
    %1534 = vmatprep.subr.mxu0 0.0
    %v1535 = vand.u32 %v79, 4294901760
    %1536 = vmatpush1.msra.mxu0 %v1535
    %1537 = vmatprep.subr.mxu0 0.0
    %v1538 = vand.u32 %v80, 4294901760
    %1539 = vmatpush1.msra.mxu0 %v1538
    %1540 = vmatprep.subr.mxu0 0.0
    %v1541 = vand.u32 %v81, 4294901760
    %1542 = vmatpush1.msra.mxu0 %v1541
    %1543 = vmatprep.subr.mxu0 0.0
    %v1544 = vand.u32 %v82, 4294901760
    %1545 = vmatpush1.msra.mxu0 %v1544
    %1546 = vmatprep.subr.mxu0 0.0
    %v1547 = vand.u32 %v83, 4294901760
    %1548 = vmatpush1.msra.mxu0 %v1547
    %1549 = vmatprep.subr.mxu0 0.0
    %v1550 = vand.u32 %v84, 4294901760
    %1551 = vmatpush1.msra.mxu0 %v1550
    %1552 = vmatprep.subr.mxu0 0.0
    %v1553 = vand.u32 %v85, 4294901760
    %1554 = vmatpush1.msra.mxu0 %v1553
    %v1555 = vand.u32 %v110, 4294901760
    %v1556 = vsub.f32 %v110, %v1555
    %v1557 = vand.u32 %v1556, 4294901760
    %1558 = vmatprep.mubr.f32.mxu0 %v1557
    %v1559 = vand.u32 %v106, 4294901760
    %v1560 = vsub.f32 %v106, %v1559
    %v1561 = vand.u32 %v1560, 4294901760
    %1562 = vmatmul.mubr.f32.gmra.mrb[0].mxu0 %v1561
    %v1563 = vpop.f32.mrb[0].mxu0
    %v1564 = vadd.f32 %v1456, %v1563
    %v1565 = vpop.f32.mrb[0].mxu0
    %1566 = vdwg.mxu0
    %1567 = vmatprep.subr.mxu0 0.0
    %v1568 = vand.u32 %v54, 4294901760
    %v1569 = vsub.f32 %v54, %v1568
    %v1570 = vand.u32 %v1569, 4294901760
    %1571 = vmatpush1.msra.mxu0 %v1570
    %1572 = vmatprep.subr.mxu0 0.0
    %v1573 = vand.u32 %v55, 4294901760
    %v1574 = vsub.f32 %v55, %v1573
    %v1575 = vand.u32 %v1574, 4294901760
    %1576 = vmatpush1.msra.mxu0 %v1575
    %1577 = vmatprep.subr.mxu0 0.0
    %v1578 = vand.u32 %v56, 4294901760
    %v1579 = vsub.f32 %v56, %v1578
    %v1580 = vand.u32 %v1579, 4294901760
    %1581 = vmatpush1.msra.mxu0 %v1580
    %1582 = vmatprep.subr.mxu0 0.0
    %v1583 = vand.u32 %v57, 4294901760
    %v1584 = vsub.f32 %v57, %v1583
    %v1585 = vand.u32 %v1584, 4294901760
    %1586 = vmatpush1.msra.mxu0 %v1585
    %1587 = vmatprep.subr.mxu0 0.0
    %v1588 = vand.u32 %v58, 4294901760
    %v1589 = vsub.f32 %v58, %v1588
    %v1590 = vand.u32 %v1589, 4294901760
    %1591 = vmatpush1.msra.mxu0 %v1590
    %1592 = vmatprep.subr.mxu0 0.0
    %v1593 = vand.u32 %v59, 4294901760
    %v1594 = vsub.f32 %v59, %v1593
    %v1595 = vand.u32 %v1594, 4294901760
    %1596 = vmatpush1.msra.mxu0 %v1595
    %1597 = vmatprep.subr.mxu0 0.0
    %v1598 = vand.u32 %v60, 4294901760
    %v1599 = vsub.f32 %v60, %v1598
    %v1600 = vand.u32 %v1599, 4294901760
    %1601 = vmatpush1.msra.mxu0 %v1600
    %1602 = vmatprep.subr.mxu0 0.0
    %v1603 = vand.u32 %v61, 4294901760
    %v1604 = vsub.f32 %v61, %v1603
    %v1605 = vand.u32 %v1604, 4294901760
    %1606 = vmatpush1.msra.mxu0 %v1605
    %1607 = vmatprep.subr.mxu0 0.0
    %v1608 = vand.u32 %v62, 4294901760
    %v1609 = vsub.f32 %v62, %v1608
    %v1610 = vand.u32 %v1609, 4294901760
    %1611 = vmatpush1.msra.mxu0 %v1610
    %1612 = vmatprep.subr.mxu0 0.0
    %v1613 = vand.u32 %v63, 4294901760
    %v1614 = vsub.f32 %v63, %v1613
    %v1615 = vand.u32 %v1614, 4294901760
    %1616 = vmatpush1.msra.mxu0 %v1615
    %1617 = vmatprep.subr.mxu0 0.0
    %v1618 = vand.u32 %v64, 4294901760
    %v1619 = vsub.f32 %v64, %v1618
    %v1620 = vand.u32 %v1619, 4294901760
    %1621 = vmatpush1.msra.mxu0 %v1620
    %1622 = vmatprep.subr.mxu0 0.0
    %v1623 = vand.u32 %v65, 4294901760
    %v1624 = vsub.f32 %v65, %v1623
    %v1625 = vand.u32 %v1624, 4294901760
    %1626 = vmatpush1.msra.mxu0 %v1625
    %1627 = vmatprep.subr.mxu0 0.0
    %v1628 = vand.u32 %v66, 4294901760
    %v1629 = vsub.f32 %v66, %v1628
    %v1630 = vand.u32 %v1629, 4294901760
    %1631 = vmatpush1.msra.mxu0 %v1630
    %1632 = vmatprep.subr.mxu0 0.0
    %v1633 = vand.u32 %v67, 4294901760
    %v1634 = vsub.f32 %v67, %v1633
    %v1635 = vand.u32 %v1634, 4294901760
    %1636 = vmatpush1.msra.mxu0 %v1635
    %1637 = vmatprep.subr.mxu0 0.0
    %v1638 = vand.u32 %v68, 4294901760
    %v1639 = vsub.f32 %v68, %v1638
    %v1640 = vand.u32 %v1639, 4294901760
    %1641 = vmatpush1.msra.mxu0 %v1640
    %1642 = vmatprep.subr.mxu0 0.0
    %v1643 = vand.u32 %v69, 4294901760
    %v1644 = vsub.f32 %v69, %v1643
    %v1645 = vand.u32 %v1644, 4294901760
    %1646 = vmatpush1.msra.mxu0 %v1645
    %1647 = vmatprep.subr.mxu0 0.0
    %v1648 = vand.u32 %v70, 4294901760
    %v1649 = vsub.f32 %v70, %v1648
    %v1650 = vand.u32 %v1649, 4294901760
    %1651 = vmatpush1.msra.mxu0 %v1650
    %1652 = vmatprep.subr.mxu0 0.0
    %v1653 = vand.u32 %v71, 4294901760
    %v1654 = vsub.f32 %v71, %v1653
    %v1655 = vand.u32 %v1654, 4294901760
    %1656 = vmatpush1.msra.mxu0 %v1655
    %1657 = vmatprep.subr.mxu0 0.0
    %v1658 = vand.u32 %v72, 4294901760
    %v1659 = vsub.f32 %v72, %v1658
    %v1660 = vand.u32 %v1659, 4294901760
    %1661 = vmatpush1.msra.mxu0 %v1660
    %1662 = vmatprep.subr.mxu0 0.0
    %v1663 = vand.u32 %v73, 4294901760
    %v1664 = vsub.f32 %v73, %v1663
    %v1665 = vand.u32 %v1664, 4294901760
    %1666 = vmatpush1.msra.mxu0 %v1665
    %1667 = vmatprep.subr.mxu0 0.0
    %v1668 = vand.u32 %v74, 4294901760
    %v1669 = vsub.f32 %v74, %v1668
    %v1670 = vand.u32 %v1669, 4294901760
    %1671 = vmatpush1.msra.mxu0 %v1670
    %1672 = vmatprep.subr.mxu0 0.0
    %v1673 = vand.u32 %v75, 4294901760
    %v1674 = vsub.f32 %v75, %v1673
    %v1675 = vand.u32 %v1674, 4294901760
    %1676 = vmatpush1.msra.mxu0 %v1675
    %1677 = vmatprep.subr.mxu0 0.0
    %v1678 = vand.u32 %v76, 4294901760
    %v1679 = vsub.f32 %v76, %v1678
    %v1680 = vand.u32 %v1679, 4294901760
    %1681 = vmatpush1.msra.mxu0 %v1680
    %1682 = vmatprep.subr.mxu0 0.0
    %v1683 = vand.u32 %v77, 4294901760
    %v1684 = vsub.f32 %v77, %v1683
    %v1685 = vand.u32 %v1684, 4294901760
    %1686 = vmatpush1.msra.mxu0 %v1685
    %1687 = vmatprep.subr.mxu0 0.0
    %v1688 = vand.u32 %v78, 4294901760
    %v1689 = vsub.f32 %v78, %v1688
    %v1690 = vand.u32 %v1689, 4294901760
    %1691 = vmatpush1.msra.mxu0 %v1690
    %1692 = vmatprep.subr.mxu0 0.0
    %v1693 = vand.u32 %v79, 4294901760
    %v1694 = vsub.f32 %v79, %v1693
    %v1695 = vand.u32 %v1694, 4294901760
    %1696 = vmatpush1.msra.mxu0 %v1695
    %1697 = vmatprep.subr.mxu0 0.0
    %v1698 = vand.u32 %v80, 4294901760
    %v1699 = vsub.f32 %v80, %v1698
    %v1700 = vand.u32 %v1699, 4294901760
    %1701 = vmatpush1.msra.mxu0 %v1700
    %1702 = vmatprep.subr.mxu0 0.0
    %v1703 = vand.u32 %v81, 4294901760
    %v1704 = vsub.f32 %v81, %v1703
    %v1705 = vand.u32 %v1704, 4294901760
    %1706 = vmatpush1.msra.mxu0 %v1705
    %1707 = vmatprep.subr.mxu0 0.0
    %v1708 = vand.u32 %v82, 4294901760
    %v1709 = vsub.f32 %v82, %v1708
    %v1710 = vand.u32 %v1709, 4294901760
    %1711 = vmatpush1.msra.mxu0 %v1710
    %1712 = vmatprep.subr.mxu0 0.0
    %v1713 = vand.u32 %v83, 4294901760
    %v1714 = vsub.f32 %v83, %v1713
    %v1715 = vand.u32 %v1714, 4294901760
    %1716 = vmatpush1.msra.mxu0 %v1715
    %1717 = vmatprep.subr.mxu0 0.0
    %v1718 = vand.u32 %v84, 4294901760
    %v1719 = vsub.f32 %v84, %v1718
    %v1720 = vand.u32 %v1719, 4294901760
    %1721 = vmatpush1.msra.mxu0 %v1720
    %1722 = vmatprep.subr.mxu0 0.0
    %v1723 = vand.u32 %v85, 4294901760
    %v1724 = vsub.f32 %v85, %v1723
    %v1725 = vand.u32 %v1724, 4294901760
    %1726 = vmatpush1.msra.mxu0 %v1725
    %v1727 = vand.u32 %v110, 4294901760
    %1728 = vmatprep.mubr.f32.mxu0 %v1727
    %v1729 = vand.u32 %v106, 4294901760
    %1730 = vmatmul.mubr.f32.gmra.mrb[0].mxu0 %v1729
    %v1731 = vpop.f32.mrb[0].mxu0
    %v1732 = vadd.f32 %v1564, %v1731
    %v1733 = vpop.f32.mrb[0].mxu0
    %1734 = vdwg.mxu0
    %1735 = vmatprep.subr.mxu0 0.0
    %v1736 = vand.u32 %v54, 4294901760
    %1737 = vmatpush1.msra.mxu0 %v1736
    %1738 = vmatprep.subr.mxu0 0.0
    %v1739 = vand.u32 %v55, 4294901760
    %1740 = vmatpush1.msra.mxu0 %v1739
    %1741 = vmatprep.subr.mxu0 0.0
    %v1742 = vand.u32 %v56, 4294901760
    %1743 = vmatpush1.msra.mxu0 %v1742
    %1744 = vmatprep.subr.mxu0 0.0
    %v1745 = vand.u32 %v57, 4294901760
    %1746 = vmatpush1.msra.mxu0 %v1745
    %1747 = vmatprep.subr.mxu0 0.0
    %v1748 = vand.u32 %v58, 4294901760
    %1749 = vmatpush1.msra.mxu0 %v1748
    %1750 = vmatprep.subr.mxu0 0.0
    %v1751 = vand.u32 %v59, 4294901760
    %1752 = vmatpush1.msra.mxu0 %v1751
    %1753 = vmatprep.subr.mxu0 0.0
    %v1754 = vand.u32 %v60, 4294901760
    %1755 = vmatpush1.msra.mxu0 %v1754
    %1756 = vmatprep.subr.mxu0 0.0
    %v1757 = vand.u32 %v61, 4294901760
    %1758 = vmatpush1.msra.mxu0 %v1757
    %1759 = vmatprep.subr.mxu0 0.0
    %v1760 = vand.u32 %v62, 4294901760
    %1761 = vmatpush1.msra.mxu0 %v1760
    %1762 = vmatprep.subr.mxu0 0.0
    %v1763 = vand.u32 %v63, 4294901760
    %1764 = vmatpush1.msra.mxu0 %v1763
    %1765 = vmatprep.subr.mxu0 0.0
    %v1766 = vand.u32 %v64, 4294901760
    %1767 = vmatpush1.msra.mxu0 %v1766
    %1768 = vmatprep.subr.mxu0 0.0
    %v1769 = vand.u32 %v65, 4294901760
    %1770 = vmatpush1.msra.mxu0 %v1769
    %1771 = vmatprep.subr.mxu0 0.0
    %v1772 = vand.u32 %v66, 4294901760
    %1773 = vmatpush1.msra.mxu0 %v1772
    %1774 = vmatprep.subr.mxu0 0.0
    %v1775 = vand.u32 %v67, 4294901760
    %1776 = vmatpush1.msra.mxu0 %v1775
    %1777 = vmatprep.subr.mxu0 0.0
    %v1778 = vand.u32 %v68, 4294901760
    %1779 = vmatpush1.msra.mxu0 %v1778
    %1780 = vmatprep.subr.mxu0 0.0
    %v1781 = vand.u32 %v69, 4294901760
    %1782 = vmatpush1.msra.mxu0 %v1781
    %1783 = vmatprep.subr.mxu0 0.0
    %v1784 = vand.u32 %v70, 4294901760
    %1785 = vmatpush1.msra.mxu0 %v1784
    %1786 = vmatprep.subr.mxu0 0.0
    %v1787 = vand.u32 %v71, 4294901760
    %1788 = vmatpush1.msra.mxu0 %v1787
    %1789 = vmatprep.subr.mxu0 0.0
    %v1790 = vand.u32 %v72, 4294901760
    %1791 = vmatpush1.msra.mxu0 %v1790
    %1792 = vmatprep.subr.mxu0 0.0
    %v1793 = vand.u32 %v73, 4294901760
    %1794 = vmatpush1.msra.mxu0 %v1793
    %1795 = vmatprep.subr.mxu0 0.0
    %v1796 = vand.u32 %v74, 4294901760
    %1797 = vmatpush1.msra.mxu0 %v1796
    %1798 = vmatprep.subr.mxu0 0.0
    %v1799 = vand.u32 %v75, 4294901760
    %1800 = vmatpush1.msra.mxu0 %v1799
    %1801 = vmatprep.subr.mxu0 0.0
    %v1802 = vand.u32 %v76, 4294901760
    %1803 = vmatpush1.msra.mxu0 %v1802
    %1804 = vmatprep.subr.mxu0 0.0
    %v1805 = vand.u32 %v77, 4294901760
    %1806 = vmatpush1.msra.mxu0 %v1805
    %1807 = vmatprep.subr.mxu0 0.0
    %v1808 = vand.u32 %v78, 4294901760
    %1809 = vmatpush1.msra.mxu0 %v1808
    %1810 = vmatprep.subr.mxu0 0.0
    %v1811 = vand.u32 %v79, 4294901760
    %1812 = vmatpush1.msra.mxu0 %v1811
    %1813 = vmatprep.subr.mxu0 0.0
    %v1814 = vand.u32 %v80, 4294901760
    %1815 = vmatpush1.msra.mxu0 %v1814
    %1816 = vmatprep.subr.mxu0 0.0
    %v1817 = vand.u32 %v81, 4294901760
    %1818 = vmatpush1.msra.mxu0 %v1817
    %1819 = vmatprep.subr.mxu0 0.0
    %v1820 = vand.u32 %v82, 4294901760
    %1821 = vmatpush1.msra.mxu0 %v1820
    %1822 = vmatprep.subr.mxu0 0.0
    %v1823 = vand.u32 %v83, 4294901760
    %1824 = vmatpush1.msra.mxu0 %v1823
    %1825 = vmatprep.subr.mxu0 0.0
    %v1826 = vand.u32 %v84, 4294901760
    %1827 = vmatpush1.msra.mxu0 %v1826
    %1828 = vmatprep.subr.mxu0 0.0
    %v1829 = vand.u32 %v85, 4294901760
    %1830 = vmatpush1.msra.mxu0 %v1829
    %v1831 = vand.u32 %v110, 4294901760
    %1832 = vmatprep.mubr.f32.mxu0 %v1831
    %v1833 = vand.u32 %v106, 4294901760
    %1834 = vmatmul.mubr.f32.gmra.mrb[0].mxu0 %v1833
    %v1835 = vpop.f32.mrb[0].mxu0
    %v1836 = vadd.f32 %v1732, %v1835
    %v1837 = vpop.f32.mrb[0].mxu0
    %1838 = vdwg.mxu0
    %v1839 = vrcp.pop 32.0
    %v1840 = vmul.f32 %v1836, %v1839
    %vm1841 = vcmask 130048
    %v1843 = vsel %vm1841, %v1840, 0
    %v1845 = vand.u32 %v87, 4294901760
    %1846 = vmatprep.subr.mxu0 %v1845
    %v1847 = vand.u32 %v86, 4294901760
    %1848 = vmatpush1.msra.mxu0 %v1847
    %v1849 = vand.u32 %v91, 4294901760
    %1850 = vmatprep.subr.mxu0 %v1849
    %v1851 = vand.u32 %v90, 4294901760
    %1852 = vmatpush1.msra.mxu0 %v1851
    %1853 = vmatprep.subr.mxu0 0.0
    %1854 = vmatpush1.msra.mxu0 0.0
    %1855 = vmatprep.subr.mxu0 0.0
    %1856 = vmatpush1.msra.mxu0 0.0
    %1857 = vmatprep.subr.mxu0 0.0
    %1858 = vmatpush1.msra.mxu0 0.0
    %1859 = vmatprep.subr.mxu0 0.0
    %1860 = vmatpush1.msra.mxu0 0.0
    %1861 = vmatprep.subr.mxu0 0.0
    %1862 = vmatpush1.msra.mxu0 0.0
    %1863 = vmatprep.subr.mxu0 0.0
    %1864 = vmatpush1.msra.mxu0 0.0
    %1865 = vmatprep.subr.mxu0 0.0
    %1866 = vmatpush1.msra.mxu0 0.0
    %1867 = vmatprep.subr.mxu0 0.0
    %1868 = vmatpush1.msra.mxu0 0.0
    %1869 = vmatprep.subr.mxu0 0.0
    %1870 = vmatpush1.msra.mxu0 0.0
    %1871 = vmatprep.subr.mxu0 0.0
    %1872 = vmatpush1.msra.mxu0 0.0
    %1873 = vmatprep.subr.mxu0 0.0
    %1874 = vmatpush1.msra.mxu0 0.0
    %1875 = vmatprep.subr.mxu0 0.0
    %1876 = vmatpush1.msra.mxu0 0.0
    %1877 = vmatprep.subr.mxu0 0.0
    %1878 = vmatpush1.msra.mxu0 0.0
    %1879 = vmatprep.subr.mxu0 0.0
    %1880 = vmatpush1.msra.mxu0 0.0
    %1881 = vmatprep.subr.mxu0 0.0
    %1882 = vmatpush1.msra.mxu0 0.0
    %1883 = vmatprep.subr.mxu0 0.0
    %1884 = vmatpush1.msra.mxu0 0.0
    %1885 = vmatprep.subr.mxu0 0.0
    %1886 = vmatpush1.msra.mxu0 0.0
    %1887 = vmatprep.subr.mxu0 0.0
    %1888 = vmatpush1.msra.mxu0 0.0
    %1889 = vmatprep.subr.mxu0 0.0
    %1890 = vmatpush1.msra.mxu0 0.0
    %1891 = vmatprep.subr.mxu0 0.0
    %1892 = vmatpush1.msra.mxu0 0.0
    %1893 = vmatprep.subr.mxu0 0.0
    %1894 = vmatpush1.msra.mxu0 0.0
    %1895 = vmatprep.subr.mxu0 0.0
    %1896 = vmatpush1.msra.mxu0 0.0
    %1897 = vmatprep.subr.mxu0 0.0
    %1898 = vmatpush1.msra.mxu0 0.0
    %1899 = vmatprep.subr.mxu0 0.0
    %1900 = vmatpush1.msra.mxu0 0.0
    %1901 = vmatprep.subr.mxu0 0.0
    %1902 = vmatpush1.msra.mxu0 0.0
    %1903 = vmatprep.subr.mxu0 0.0
    %1904 = vmatpush1.msra.mxu0 0.0
    %1905 = vmatprep.subr.mxu0 0.0
    %1906 = vmatpush1.msra.mxu0 0.0
    %1907 = vmatprep.subr.mxu0 0.0
    %1908 = vmatpush1.msra.mxu0 0.0
    %1909 = vmatprep.subr.mxu0 0.0
    %1910 = vmatpush1.msra.mxu0 0.0
    %1911 = vmatprep.subr.mxu0 0.0
    %1912 = vmatpush1.msra.mxu0 0.0
    %1913 = vmatprep.mubr.f32.mxu0 0.0
    %v1914 = vand.u32 %v1843, 4294901760
    %v1915 = vsub.f32 %v1843, %v1914
    %v1916 = vand.u32 %v1915, 4294901760
    %v1917 = vsub.f32 %v1915, %v1916
    %v1918 = vand.u32 %v1917, 4294901760
    %1919 = vmatmul.mubr.f32.gmra.mrb[0].mxu0 %v1918
    %v1920 = vpop.f32.mrb[0].mxu0
    %v1921 = vadd.f32 0.0, %v1920
    %v1922 = vpop.f32.mrb[0].mxu0
    %v1923 = vadd.f32 0.0, %v1922
    %1924 = vdwg.mxu0
    %v1925 = vand.u32 %v87, 4294901760
    %v1926 = vsub.f32 %v87, %v1925
    %v1927 = vand.u32 %v1926, 4294901760
    %v1928 = vsub.f32 %v1926, %v1927
    %v1929 = vand.u32 %v1928, 4294901760
    %1930 = vmatprep.subr.mxu0 %v1929
    %v1931 = vand.u32 %v86, 4294901760
    %v1932 = vsub.f32 %v86, %v1931
    %v1933 = vand.u32 %v1932, 4294901760
    %v1934 = vsub.f32 %v1932, %v1933
    %v1935 = vand.u32 %v1934, 4294901760
    %1936 = vmatpush1.msra.mxu0 %v1935
    %v1937 = vand.u32 %v91, 4294901760
    %v1938 = vsub.f32 %v91, %v1937
    %v1939 = vand.u32 %v1938, 4294901760
    %v1940 = vsub.f32 %v1938, %v1939
    %v1941 = vand.u32 %v1940, 4294901760
    %1942 = vmatprep.subr.mxu0 %v1941
    %v1943 = vand.u32 %v90, 4294901760
    %v1944 = vsub.f32 %v90, %v1943
    %v1945 = vand.u32 %v1944, 4294901760
    %v1946 = vsub.f32 %v1944, %v1945
    %v1947 = vand.u32 %v1946, 4294901760
    %1948 = vmatpush1.msra.mxu0 %v1947
    %1949 = vmatprep.subr.mxu0 0.0
    %1950 = vmatpush1.msra.mxu0 0.0
    %1951 = vmatprep.subr.mxu0 0.0
    %1952 = vmatpush1.msra.mxu0 0.0
    %1953 = vmatprep.subr.mxu0 0.0
    %1954 = vmatpush1.msra.mxu0 0.0
    %1955 = vmatprep.subr.mxu0 0.0
    %1956 = vmatpush1.msra.mxu0 0.0
    %1957 = vmatprep.subr.mxu0 0.0
    %1958 = vmatpush1.msra.mxu0 0.0
    %1959 = vmatprep.subr.mxu0 0.0
    %1960 = vmatpush1.msra.mxu0 0.0
    %1961 = vmatprep.subr.mxu0 0.0
    %1962 = vmatpush1.msra.mxu0 0.0
    %1963 = vmatprep.subr.mxu0 0.0
    %1964 = vmatpush1.msra.mxu0 0.0
    %1965 = vmatprep.subr.mxu0 0.0
    %1966 = vmatpush1.msra.mxu0 0.0
    %1967 = vmatprep.subr.mxu0 0.0
    %1968 = vmatpush1.msra.mxu0 0.0
    %1969 = vmatprep.subr.mxu0 0.0
    %1970 = vmatpush1.msra.mxu0 0.0
    %1971 = vmatprep.subr.mxu0 0.0
    %1972 = vmatpush1.msra.mxu0 0.0
    %1973 = vmatprep.subr.mxu0 0.0
    %1974 = vmatpush1.msra.mxu0 0.0
    %1975 = vmatprep.subr.mxu0 0.0
    %1976 = vmatpush1.msra.mxu0 0.0
    %1977 = vmatprep.subr.mxu0 0.0
    %1978 = vmatpush1.msra.mxu0 0.0
    %1979 = vmatprep.subr.mxu0 0.0
    %1980 = vmatpush1.msra.mxu0 0.0
    %1981 = vmatprep.subr.mxu0 0.0
    %1982 = vmatpush1.msra.mxu0 0.0
    %1983 = vmatprep.subr.mxu0 0.0
    %1984 = vmatpush1.msra.mxu0 0.0
    %1985 = vmatprep.subr.mxu0 0.0
    %1986 = vmatpush1.msra.mxu0 0.0
    %1987 = vmatprep.subr.mxu0 0.0
    %1988 = vmatpush1.msra.mxu0 0.0
    %1989 = vmatprep.subr.mxu0 0.0
    %1990 = vmatpush1.msra.mxu0 0.0
    %1991 = vmatprep.subr.mxu0 0.0
    %1992 = vmatpush1.msra.mxu0 0.0
    %1993 = vmatprep.subr.mxu0 0.0
    %1994 = vmatpush1.msra.mxu0 0.0
    %1995 = vmatprep.subr.mxu0 0.0
    %1996 = vmatpush1.msra.mxu0 0.0
    %1997 = vmatprep.subr.mxu0 0.0
    %1998 = vmatpush1.msra.mxu0 0.0
    %1999 = vmatprep.subr.mxu0 0.0
    %2000 = vmatpush1.msra.mxu0 0.0
    %2001 = vmatprep.subr.mxu0 0.0
    %2002 = vmatpush1.msra.mxu0 0.0
    %2003 = vmatprep.subr.mxu0 0.0
    %2004 = vmatpush1.msra.mxu0 0.0
    %2005 = vmatprep.subr.mxu0 0.0
    %2006 = vmatpush1.msra.mxu0 0.0
    %2007 = vmatprep.subr.mxu0 0.0
    %2008 = vmatpush1.msra.mxu0 0.0
    %2009 = vmatprep.mubr.f32.mxu0 0.0
    %v2010 = vand.u32 %v1843, 4294901760
    %2011 = vmatmul.mubr.f32.gmra.mrb[0].mxu0 %v2010
    %v2012 = vpop.f32.mrb[0].mxu0
    %v2013 = vadd.f32 %v1921, %v2012
    %v2014 = vpop.f32.mrb[0].mxu0
    %v2015 = vadd.f32 %v1923, %v2014
    %2016 = vdwg.mxu0
    %v2017 = vand.u32 %v87, 4294901760
    %v2018 = vsub.f32 %v87, %v2017
    %2019 = vmatprep.subr.mxu0 %v2018
    %v2020 = vand.u32 %v86, 4294901760
    %v2021 = vsub.f32 %v86, %v2020
    %2022 = vmatpush1.msra.mxu0 %v2021
    %v2023 = vand.u32 %v91, 4294901760
    %v2024 = vsub.f32 %v91, %v2023
    %2025 = vmatprep.subr.mxu0 %v2024
    %v2026 = vand.u32 %v90, 4294901760
    %v2027 = vsub.f32 %v90, %v2026
    %2028 = vmatpush1.msra.mxu0 %v2027
    %2029 = vmatprep.subr.mxu0 0.0
    %2030 = vmatpush1.msra.mxu0 0.0
    %2031 = vmatprep.subr.mxu0 0.0
    %2032 = vmatpush1.msra.mxu0 0.0
    %2033 = vmatprep.subr.mxu0 0.0
    %2034 = vmatpush1.msra.mxu0 0.0
    %2035 = vmatprep.subr.mxu0 0.0
    %2036 = vmatpush1.msra.mxu0 0.0
    %2037 = vmatprep.subr.mxu0 0.0
    %2038 = vmatpush1.msra.mxu0 0.0
    %2039 = vmatprep.subr.mxu0 0.0
    %2040 = vmatpush1.msra.mxu0 0.0
    %2041 = vmatprep.subr.mxu0 0.0
    %2042 = vmatpush1.msra.mxu0 0.0
    %2043 = vmatprep.subr.mxu0 0.0
    %2044 = vmatpush1.msra.mxu0 0.0
    %2045 = vmatprep.subr.mxu0 0.0
    %2046 = vmatpush1.msra.mxu0 0.0
    %2047 = vmatprep.subr.mxu0 0.0
    %2048 = vmatpush1.msra.mxu0 0.0
    %2049 = vmatprep.subr.mxu0 0.0
    %2050 = vmatpush1.msra.mxu0 0.0
    %2051 = vmatprep.subr.mxu0 0.0
    %2052 = vmatpush1.msra.mxu0 0.0
    %2053 = vmatprep.subr.mxu0 0.0
    %2054 = vmatpush1.msra.mxu0 0.0
    %2055 = vmatprep.subr.mxu0 0.0
    %2056 = vmatpush1.msra.mxu0 0.0
    %2057 = vmatprep.subr.mxu0 0.0
    %2058 = vmatpush1.msra.mxu0 0.0
    %2059 = vmatprep.subr.mxu0 0.0
    %2060 = vmatpush1.msra.mxu0 0.0
    %2061 = vmatprep.subr.mxu0 0.0
    %2062 = vmatpush1.msra.mxu0 0.0
    %2063 = vmatprep.subr.mxu0 0.0
    %2064 = vmatpush1.msra.mxu0 0.0
    %2065 = vmatprep.subr.mxu0 0.0
    %2066 = vmatpush1.msra.mxu0 0.0
    %2067 = vmatprep.subr.mxu0 0.0
    %2068 = vmatpush1.msra.mxu0 0.0
    %2069 = vmatprep.subr.mxu0 0.0
    %2070 = vmatpush1.msra.mxu0 0.0
    %2071 = vmatprep.subr.mxu0 0.0
    %2072 = vmatpush1.msra.mxu0 0.0
    %2073 = vmatprep.subr.mxu0 0.0
    %2074 = vmatpush1.msra.mxu0 0.0
    %2075 = vmatprep.subr.mxu0 0.0
    %2076 = vmatpush1.msra.mxu0 0.0
    %2077 = vmatprep.subr.mxu0 0.0
    %2078 = vmatpush1.msra.mxu0 0.0
    %2079 = vmatprep.subr.mxu0 0.0
    %2080 = vmatpush1.msra.mxu0 0.0
    %2081 = vmatprep.subr.mxu0 0.0
    %2082 = vmatpush1.msra.mxu0 0.0
    %2083 = vmatprep.subr.mxu0 0.0
    %2084 = vmatpush1.msra.mxu0 0.0
    %2085 = vmatprep.subr.mxu0 0.0
    %2086 = vmatpush1.msra.mxu0 0.0
    %2087 = vmatprep.subr.mxu0 0.0
    %2088 = vmatpush1.msra.mxu0 0.0
    %2089 = vmatprep.mubr.f32.mxu0 0.0
    %v2090 = vand.u32 %v1843, 4294901760
    %v2091 = vsub.f32 %v1843, %v2090
    %2092 = vmatmul.mubr.f32.gmra.mrb[0].mxu0 %v2091
    %v2093 = vpop.f32.mrb[0].mxu0
    %v2094 = vadd.f32 %v2013, %v2093
    %v2095 = vpop.f32.mrb[0].mxu0
    %v2096 = vadd.f32 %v2015, %v2095
    %2097 = vdwg.mxu0
    %v2098 = vand.u32 %v87, 4294901760
    %2099 = vmatprep.subr.mxu0 %v2098
    %v2100 = vand.u32 %v86, 4294901760
    %2101 = vmatpush1.msra.mxu0 %v2100
    %v2102 = vand.u32 %v91, 4294901760
    %2103 = vmatprep.subr.mxu0 %v2102
    %v2104 = vand.u32 %v90, 4294901760
    %2105 = vmatpush1.msra.mxu0 %v2104
    %2106 = vmatprep.subr.mxu0 0.0
    %2107 = vmatpush1.msra.mxu0 0.0
    %2108 = vmatprep.subr.mxu0 0.0
    %2109 = vmatpush1.msra.mxu0 0.0
    %2110 = vmatprep.subr.mxu0 0.0
    %2111 = vmatpush1.msra.mxu0 0.0
    %2112 = vmatprep.subr.mxu0 0.0
    %2113 = vmatpush1.msra.mxu0 0.0
    %2114 = vmatprep.subr.mxu0 0.0
    %2115 = vmatpush1.msra.mxu0 0.0
    %2116 = vmatprep.subr.mxu0 0.0
    %2117 = vmatpush1.msra.mxu0 0.0
    %2118 = vmatprep.subr.mxu0 0.0
    %2119 = vmatpush1.msra.mxu0 0.0
    %2120 = vmatprep.subr.mxu0 0.0
    %2121 = vmatpush1.msra.mxu0 0.0
    %2122 = vmatprep.subr.mxu0 0.0
    %2123 = vmatpush1.msra.mxu0 0.0
    %2124 = vmatprep.subr.mxu0 0.0
    %2125 = vmatpush1.msra.mxu0 0.0
    %2126 = vmatprep.subr.mxu0 0.0
    %2127 = vmatpush1.msra.mxu0 0.0
    %2128 = vmatprep.subr.mxu0 0.0
    %2129 = vmatpush1.msra.mxu0 0.0
    %2130 = vmatprep.subr.mxu0 0.0
    %2131 = vmatpush1.msra.mxu0 0.0
    %2132 = vmatprep.subr.mxu0 0.0
    %2133 = vmatpush1.msra.mxu0 0.0
    %2134 = vmatprep.subr.mxu0 0.0
    %2135 = vmatpush1.msra.mxu0 0.0
    %2136 = vmatprep.subr.mxu0 0.0
    %2137 = vmatpush1.msra.mxu0 0.0
    %2138 = vmatprep.subr.mxu0 0.0
    %2139 = vmatpush1.msra.mxu0 0.0
    %2140 = vmatprep.subr.mxu0 0.0
    %2141 = vmatpush1.msra.mxu0 0.0
    %2142 = vmatprep.subr.mxu0 0.0
    %2143 = vmatpush1.msra.mxu0 0.0
    %2144 = vmatprep.subr.mxu0 0.0
    %2145 = vmatpush1.msra.mxu0 0.0
    %2146 = vmatprep.subr.mxu0 0.0
    %2147 = vmatpush1.msra.mxu0 0.0
    %2148 = vmatprep.subr.mxu0 0.0
    %2149 = vmatpush1.msra.mxu0 0.0
    %2150 = vmatprep.subr.mxu0 0.0
    %2151 = vmatpush1.msra.mxu0 0.0
    %2152 = vmatprep.subr.mxu0 0.0
    %2153 = vmatpush1.msra.mxu0 0.0
    %2154 = vmatprep.subr.mxu0 0.0
    %2155 = vmatpush1.msra.mxu0 0.0
    %2156 = vmatprep.subr.mxu0 0.0
    %2157 = vmatpush1.msra.mxu0 0.0
    %2158 = vmatprep.subr.mxu0 0.0
    %2159 = vmatpush1.msra.mxu0 0.0
    %2160 = vmatprep.subr.mxu0 0.0
    %2161 = vmatpush1.msra.mxu0 0.0
    %2162 = vmatprep.subr.mxu0 0.0
    %2163 = vmatpush1.msra.mxu0 0.0
    %2164 = vmatprep.subr.mxu0 0.0
    %2165 = vmatpush1.msra.mxu0 0.0
    %2166 = vmatprep.mubr.f32.mxu0 0.0
    %v2167 = vand.u32 %v1843, 4294901760
    %v2168 = vsub.f32 %v1843, %v2167
    %v2169 = vand.u32 %v2168, 4294901760
    %2170 = vmatmul.mubr.f32.gmra.mrb[0].mxu0 %v2169
    %v2171 = vpop.f32.mrb[0].mxu0
    %v2172 = vadd.f32 %v2094, %v2171
    %v2173 = vpop.f32.mrb[0].mxu0
    %v2174 = vadd.f32 %v2096, %v2173
    %2175 = vdwg.mxu0
    %v2176 = vand.u32 %v87, 4294901760
    %v2177 = vsub.f32 %v87, %v2176
    %v2178 = vand.u32 %v2177, 4294901760
    %2179 = vmatprep.subr.mxu0 %v2178
    %v2180 = vand.u32 %v86, 4294901760
    %v2181 = vsub.f32 %v86, %v2180
    %v2182 = vand.u32 %v2181, 4294901760
    %2183 = vmatpush1.msra.mxu0 %v2182
    %v2184 = vand.u32 %v91, 4294901760
    %v2185 = vsub.f32 %v91, %v2184
    %v2186 = vand.u32 %v2185, 4294901760
    %2187 = vmatprep.subr.mxu0 %v2186
    %v2188 = vand.u32 %v90, 4294901760
    %v2189 = vsub.f32 %v90, %v2188
    %v2190 = vand.u32 %v2189, 4294901760
    %2191 = vmatpush1.msra.mxu0 %v2190
    %2192 = vmatprep.subr.mxu0 0.0
    %2193 = vmatpush1.msra.mxu0 0.0
    %2194 = vmatprep.subr.mxu0 0.0
    %2195 = vmatpush1.msra.mxu0 0.0
    %2196 = vmatprep.subr.mxu0 0.0
    %2197 = vmatpush1.msra.mxu0 0.0
    %2198 = vmatprep.subr.mxu0 0.0
    %2199 = vmatpush1.msra.mxu0 0.0
    %2200 = vmatprep.subr.mxu0 0.0
    %2201 = vmatpush1.msra.mxu0 0.0
    %2202 = vmatprep.subr.mxu0 0.0
    %2203 = vmatpush1.msra.mxu0 0.0
    %2204 = vmatprep.subr.mxu0 0.0
    %2205 = vmatpush1.msra.mxu0 0.0
    %2206 = vmatprep.subr.mxu0 0.0
    %2207 = vmatpush1.msra.mxu0 0.0
    %2208 = vmatprep.subr.mxu0 0.0
    %2209 = vmatpush1.msra.mxu0 0.0
    %2210 = vmatprep.subr.mxu0 0.0
    %2211 = vmatpush1.msra.mxu0 0.0
    %2212 = vmatprep.subr.mxu0 0.0
    %2213 = vmatpush1.msra.mxu0 0.0
    %2214 = vmatprep.subr.mxu0 0.0
    %2215 = vmatpush1.msra.mxu0 0.0
    %2216 = vmatprep.subr.mxu0 0.0
    %2217 = vmatpush1.msra.mxu0 0.0
    %2218 = vmatprep.subr.mxu0 0.0
    %2219 = vmatpush1.msra.mxu0 0.0
    %2220 = vmatprep.subr.mxu0 0.0
    %2221 = vmatpush1.msra.mxu0 0.0
    %2222 = vmatprep.subr.mxu0 0.0
    %2223 = vmatpush1.msra.mxu0 0.0
    %2224 = vmatprep.subr.mxu0 0.0
    %2225 = vmatpush1.msra.mxu0 0.0
    %2226 = vmatprep.subr.mxu0 0.0
    %2227 = vmatpush1.msra.mxu0 0.0
    %2228 = vmatprep.subr.mxu0 0.0
    %2229 = vmatpush1.msra.mxu0 0.0
    %2230 = vmatprep.subr.mxu0 0.0
    %2231 = vmatpush1.msra.mxu0 0.0
    %2232 = vmatprep.subr.mxu0 0.0
    %2233 = vmatpush1.msra.mxu0 0.0
    %2234 = vmatprep.subr.mxu0 0.0
    %2235 = vmatpush1.msra.mxu0 0.0
    %2236 = vmatprep.subr.mxu0 0.0
    %2237 = vmatpush1.msra.mxu0 0.0
    %2238 = vmatprep.subr.mxu0 0.0
    %2239 = vmatpush1.msra.mxu0 0.0
    %2240 = vmatprep.subr.mxu0 0.0
    %2241 = vmatpush1.msra.mxu0 0.0
    %2242 = vmatprep.subr.mxu0 0.0
    %2243 = vmatpush1.msra.mxu0 0.0
    %2244 = vmatprep.subr.mxu0 0.0
    %2245 = vmatpush1.msra.mxu0 0.0
    %2246 = vmatprep.subr.mxu0 0.0
    %2247 = vmatpush1.msra.mxu0 0.0
    %2248 = vmatprep.subr.mxu0 0.0
    %2249 = vmatpush1.msra.mxu0 0.0
    %2250 = vmatprep.subr.mxu0 0.0
    %2251 = vmatpush1.msra.mxu0 0.0
    %2252 = vmatprep.mubr.f32.mxu0 0.0
    %v2253 = vand.u32 %v1843, 4294901760
    %2254 = vmatmul.mubr.f32.gmra.mrb[0].mxu0 %v2253
    %v2255 = vpop.f32.mrb[0].mxu0
    %v2256 = vadd.f32 %v2172, %v2255
    %v2257 = vpop.f32.mrb[0].mxu0
    %v2258 = vadd.f32 %v2174, %v2257
    %2259 = vdwg.mxu0
    %v2260 = vand.u32 %v87, 4294901760
    %2261 = vmatprep.subr.mxu0 %v2260
    %v2262 = vand.u32 %v86, 4294901760
    %2263 = vmatpush1.msra.mxu0 %v2262
    %v2264 = vand.u32 %v91, 4294901760
    %2265 = vmatprep.subr.mxu0 %v2264
    %v2266 = vand.u32 %v90, 4294901760
    %2267 = vmatpush1.msra.mxu0 %v2266
    %2268 = vmatprep.subr.mxu0 0.0
    %2269 = vmatpush1.msra.mxu0 0.0
    %2270 = vmatprep.subr.mxu0 0.0
    %2271 = vmatpush1.msra.mxu0 0.0
    %2272 = vmatprep.subr.mxu0 0.0
    %2273 = vmatpush1.msra.mxu0 0.0
    %2274 = vmatprep.subr.mxu0 0.0
    %2275 = vmatpush1.msra.mxu0 0.0
    %2276 = vmatprep.subr.mxu0 0.0
    %2277 = vmatpush1.msra.mxu0 0.0
    %2278 = vmatprep.subr.mxu0 0.0
    %2279 = vmatpush1.msra.mxu0 0.0
    %2280 = vmatprep.subr.mxu0 0.0
    %2281 = vmatpush1.msra.mxu0 0.0
    %2282 = vmatprep.subr.mxu0 0.0
    %2283 = vmatpush1.msra.mxu0 0.0
    %2284 = vmatprep.subr.mxu0 0.0
    %2285 = vmatpush1.msra.mxu0 0.0
    %2286 = vmatprep.subr.mxu0 0.0
    %2287 = vmatpush1.msra.mxu0 0.0
    %2288 = vmatprep.subr.mxu0 0.0
    %2289 = vmatpush1.msra.mxu0 0.0
    %2290 = vmatprep.subr.mxu0 0.0
    %2291 = vmatpush1.msra.mxu0 0.0
    %2292 = vmatprep.subr.mxu0 0.0
    %2293 = vmatpush1.msra.mxu0 0.0
    %2294 = vmatprep.subr.mxu0 0.0
    %2295 = vmatpush1.msra.mxu0 0.0
    %2296 = vmatprep.subr.mxu0 0.0
    %2297 = vmatpush1.msra.mxu0 0.0
    %2298 = vmatprep.subr.mxu0 0.0
    %2299 = vmatpush1.msra.mxu0 0.0
    %2300 = vmatprep.subr.mxu0 0.0
    %2301 = vmatpush1.msra.mxu0 0.0
    %2302 = vmatprep.subr.mxu0 0.0
    %2303 = vmatpush1.msra.mxu0 0.0
    %2304 = vmatprep.subr.mxu0 0.0
    %2305 = vmatpush1.msra.mxu0 0.0
    %2306 = vmatprep.subr.mxu0 0.0
    %2307 = vmatpush1.msra.mxu0 0.0
    %2308 = vmatprep.subr.mxu0 0.0
    %2309 = vmatpush1.msra.mxu0 0.0
    %2310 = vmatprep.subr.mxu0 0.0
    %2311 = vmatpush1.msra.mxu0 0.0
    %2312 = vmatprep.subr.mxu0 0.0
    %2313 = vmatpush1.msra.mxu0 0.0
    %2314 = vmatprep.subr.mxu0 0.0
    %2315 = vmatpush1.msra.mxu0 0.0
    %2316 = vmatprep.subr.mxu0 0.0
    %2317 = vmatpush1.msra.mxu0 0.0
    %2318 = vmatprep.subr.mxu0 0.0
    %2319 = vmatpush1.msra.mxu0 0.0
    %2320 = vmatprep.subr.mxu0 0.0
    %2321 = vmatpush1.msra.mxu0 0.0
    %2322 = vmatprep.subr.mxu0 0.0
    %2323 = vmatpush1.msra.mxu0 0.0
    %2324 = vmatprep.subr.mxu0 0.0
    %2325 = vmatpush1.msra.mxu0 0.0
    %2326 = vmatprep.subr.mxu0 0.0
    %2327 = vmatpush1.msra.mxu0 0.0
    %2328 = vmatprep.mubr.f32.mxu0 0.0
    %v2329 = vand.u32 %v1843, 4294901760
    %2330 = vmatmul.mubr.f32.gmra.mrb[0].mxu0 %v2329
    %v2331 = vpop.f32.mrb[0].mxu0
    %v2332 = vadd.f32 %v2256, %v2331
    %v2333 = vpop.f32.mrb[0].mxu0
    %v2334 = vadd.f32 %v2258, %v2333
    %2335 = vdwg.mxu0
    %v2336 = vand.u32 %v89, 4294901760
    %2337 = vmatprep.subr.mxu0 %v2336
    %v2338 = vand.u32 %v88, 4294901760
    %2339 = vmatpush1.msra.mxu0 %v2338
    %v2340 = vand.u32 %v93, 4294901760
    %2341 = vmatprep.subr.mxu0 %v2340
    %v2342 = vand.u32 %v92, 4294901760
    %2343 = vmatpush1.msra.mxu0 %v2342
    %2344 = vmatprep.subr.mxu0 0.0
    %2345 = vmatpush1.msra.mxu0 0.0
    %2346 = vmatprep.subr.mxu0 0.0
    %2347 = vmatpush1.msra.mxu0 0.0
    %2348 = vmatprep.subr.mxu0 0.0
    %2349 = vmatpush1.msra.mxu0 0.0
    %2350 = vmatprep.subr.mxu0 0.0
    %2351 = vmatpush1.msra.mxu0 0.0
    %2352 = vmatprep.subr.mxu0 0.0
    %2353 = vmatpush1.msra.mxu0 0.0
    %2354 = vmatprep.subr.mxu0 0.0
    %2355 = vmatpush1.msra.mxu0 0.0
    %2356 = vmatprep.subr.mxu0 0.0
    %2357 = vmatpush1.msra.mxu0 0.0
    %2358 = vmatprep.subr.mxu0 0.0
    %2359 = vmatpush1.msra.mxu0 0.0
    %2360 = vmatprep.subr.mxu0 0.0
    %2361 = vmatpush1.msra.mxu0 0.0
    %2362 = vmatprep.subr.mxu0 0.0
    %2363 = vmatpush1.msra.mxu0 0.0
    %2364 = vmatprep.subr.mxu0 0.0
    %2365 = vmatpush1.msra.mxu0 0.0
    %2366 = vmatprep.subr.mxu0 0.0
    %2367 = vmatpush1.msra.mxu0 0.0
    %2368 = vmatprep.subr.mxu0 0.0
    %2369 = vmatpush1.msra.mxu0 0.0
    %2370 = vmatprep.subr.mxu0 0.0
    %2371 = vmatpush1.msra.mxu0 0.0
    %2372 = vmatprep.subr.mxu0 0.0
    %2373 = vmatpush1.msra.mxu0 0.0
    %2374 = vmatprep.subr.mxu0 0.0
    %2375 = vmatpush1.msra.mxu0 0.0
    %2376 = vmatprep.subr.mxu0 0.0
    %2377 = vmatpush1.msra.mxu0 0.0
    %2378 = vmatprep.subr.mxu0 0.0
    %2379 = vmatpush1.msra.mxu0 0.0
    %2380 = vmatprep.subr.mxu0 0.0
    %2381 = vmatpush1.msra.mxu0 0.0
    %2382 = vmatprep.subr.mxu0 0.0
    %2383 = vmatpush1.msra.mxu0 0.0
    %2384 = vmatprep.subr.mxu0 0.0
    %2385 = vmatpush1.msra.mxu0 0.0
    %2386 = vmatprep.subr.mxu0 0.0
    %2387 = vmatpush1.msra.mxu0 0.0
    %2388 = vmatprep.subr.mxu0 0.0
    %2389 = vmatpush1.msra.mxu0 0.0
    %2390 = vmatprep.subr.mxu0 0.0
    %2391 = vmatpush1.msra.mxu0 0.0
    %2392 = vmatprep.subr.mxu0 0.0
    %2393 = vmatpush1.msra.mxu0 0.0
    %2394 = vmatprep.subr.mxu0 0.0
    %2395 = vmatpush1.msra.mxu0 0.0
    %2396 = vmatprep.subr.mxu0 0.0
    %2397 = vmatpush1.msra.mxu0 0.0
    %2398 = vmatprep.subr.mxu0 0.0
    %2399 = vmatpush1.msra.mxu0 0.0
    %2400 = vmatprep.subr.mxu0 0.0
    %2401 = vmatpush1.msra.mxu0 0.0
    %2402 = vmatprep.subr.mxu0 0.0
    %2403 = vmatpush1.msra.mxu0 0.0
    %2404 = vmatprep.mubr.f32.mxu0 0.0
    %v2405 = vand.u32 %v1843, 4294901760
    %v2406 = vsub.f32 %v1843, %v2405
    %v2407 = vand.u32 %v2406, 4294901760
    %v2408 = vsub.f32 %v2406, %v2407
    %v2409 = vand.u32 %v2408, 4294901760
    %2410 = vmatmul.mubr.f32.gmra.mrb[0].mxu0 %v2409
    %v2411 = vpop.f32.mrb[0].mxu0
    %v2412 = vadd.f32 0.0, %v2411
    %v2413 = vpop.f32.mrb[0].mxu0
    %v2414 = vadd.f32 0.0, %v2413
    %2415 = vdwg.mxu0
    %v2416 = vand.u32 %v89, 4294901760
    %v2417 = vsub.f32 %v89, %v2416
    %v2418 = vand.u32 %v2417, 4294901760
    %v2419 = vsub.f32 %v2417, %v2418
    %v2420 = vand.u32 %v2419, 4294901760
    %2421 = vmatprep.subr.mxu0 %v2420
    %v2422 = vand.u32 %v88, 4294901760
    %v2423 = vsub.f32 %v88, %v2422
    %v2424 = vand.u32 %v2423, 4294901760
    %v2425 = vsub.f32 %v2423, %v2424
    %v2426 = vand.u32 %v2425, 4294901760
    %2427 = vmatpush1.msra.mxu0 %v2426
    %v2428 = vand.u32 %v93, 4294901760
    %v2429 = vsub.f32 %v93, %v2428
    %v2430 = vand.u32 %v2429, 4294901760
    %v2431 = vsub.f32 %v2429, %v2430
    %v2432 = vand.u32 %v2431, 4294901760
    %2433 = vmatprep.subr.mxu0 %v2432
    %v2434 = vand.u32 %v92, 4294901760
    %v2435 = vsub.f32 %v92, %v2434
    %v2436 = vand.u32 %v2435, 4294901760
    %v2437 = vsub.f32 %v2435, %v2436
    %v2438 = vand.u32 %v2437, 4294901760
    %2439 = vmatpush1.msra.mxu0 %v2438
    %2440 = vmatprep.subr.mxu0 0.0
    %2441 = vmatpush1.msra.mxu0 0.0
    %2442 = vmatprep.subr.mxu0 0.0
    %2443 = vmatpush1.msra.mxu0 0.0
    %2444 = vmatprep.subr.mxu0 0.0
    %2445 = vmatpush1.msra.mxu0 0.0
    %2446 = vmatprep.subr.mxu0 0.0
    %2447 = vmatpush1.msra.mxu0 0.0
    %2448 = vmatprep.subr.mxu0 0.0
    %2449 = vmatpush1.msra.mxu0 0.0
    %2450 = vmatprep.subr.mxu0 0.0
    %2451 = vmatpush1.msra.mxu0 0.0
    %2452 = vmatprep.subr.mxu0 0.0
    %2453 = vmatpush1.msra.mxu0 0.0
    %2454 = vmatprep.subr.mxu0 0.0
    %2455 = vmatpush1.msra.mxu0 0.0
    %2456 = vmatprep.subr.mxu0 0.0
    %2457 = vmatpush1.msra.mxu0 0.0
    %2458 = vmatprep.subr.mxu0 0.0
    %2459 = vmatpush1.msra.mxu0 0.0
    %2460 = vmatprep.subr.mxu0 0.0
    %2461 = vmatpush1.msra.mxu0 0.0
    %2462 = vmatprep.subr.mxu0 0.0
    %2463 = vmatpush1.msra.mxu0 0.0
    %2464 = vmatprep.subr.mxu0 0.0
    %2465 = vmatpush1.msra.mxu0 0.0
    %2466 = vmatprep.subr.mxu0 0.0
    %2467 = vmatpush1.msra.mxu0 0.0
    %2468 = vmatprep.subr.mxu0 0.0
    %2469 = vmatpush1.msra.mxu0 0.0
    %2470 = vmatprep.subr.mxu0 0.0
    %2471 = vmatpush1.msra.mxu0 0.0
    %2472 = vmatprep.subr.mxu0 0.0
    %2473 = vmatpush1.msra.mxu0 0.0
    %2474 = vmatprep.subr.mxu0 0.0
    %2475 = vmatpush1.msra.mxu0 0.0
    %2476 = vmatprep.subr.mxu0 0.0
    %2477 = vmatpush1.msra.mxu0 0.0
    %2478 = vmatprep.subr.mxu0 0.0
    %2479 = vmatpush1.msra.mxu0 0.0
    %2480 = vmatprep.subr.mxu0 0.0
    %2481 = vmatpush1.msra.mxu0 0.0
    %2482 = vmatprep.subr.mxu0 0.0
    %2483 = vmatpush1.msra.mxu0 0.0
    %2484 = vmatprep.subr.mxu0 0.0
    %2485 = vmatpush1.msra.mxu0 0.0
    %2486 = vmatprep.subr.mxu0 0.0
    %2487 = vmatpush1.msra.mxu0 0.0
    %2488 = vmatprep.subr.mxu0 0.0
    %2489 = vmatpush1.msra.mxu0 0.0
    %2490 = vmatprep.subr.mxu0 0.0
    %2491 = vmatpush1.msra.mxu0 0.0
    %2492 = vmatprep.subr.mxu0 0.0
    %2493 = vmatpush1.msra.mxu0 0.0
    %2494 = vmatprep.subr.mxu0 0.0
    %2495 = vmatpush1.msra.mxu0 0.0
    %2496 = vmatprep.subr.mxu0 0.0
    %2497 = vmatpush1.msra.mxu0 0.0
    %2498 = vmatprep.subr.mxu0 0.0
    %2499 = vmatpush1.msra.mxu0 0.0
    %2500 = vmatprep.mubr.f32.mxu0 0.0
    %v2501 = vand.u32 %v1843, 4294901760
    %2502 = vmatmul.mubr.f32.gmra.mrb[0].mxu0 %v2501
    %v2503 = vpop.f32.mrb[0].mxu0
    %v2504 = vadd.f32 %v2412, %v2503
    %v2505 = vpop.f32.mrb[0].mxu0
    %v2506 = vadd.f32 %v2414, %v2505
    %2507 = vdwg.mxu0
    %v2508 = vand.u32 %v89, 4294901760
    %v2509 = vsub.f32 %v89, %v2508
    %2510 = vmatprep.subr.mxu0 %v2509
    %v2511 = vand.u32 %v88, 4294901760
    %v2512 = vsub.f32 %v88, %v2511
    %2513 = vmatpush1.msra.mxu0 %v2512
    %v2514 = vand.u32 %v93, 4294901760
    %v2515 = vsub.f32 %v93, %v2514
    %2516 = vmatprep.subr.mxu0 %v2515
    %v2517 = vand.u32 %v92, 4294901760
    %v2518 = vsub.f32 %v92, %v2517
    %2519 = vmatpush1.msra.mxu0 %v2518
    %2520 = vmatprep.subr.mxu0 0.0
    %2521 = vmatpush1.msra.mxu0 0.0
    %2522 = vmatprep.subr.mxu0 0.0
    %2523 = vmatpush1.msra.mxu0 0.0
    %2524 = vmatprep.subr.mxu0 0.0
    %2525 = vmatpush1.msra.mxu0 0.0
    %2526 = vmatprep.subr.mxu0 0.0
    %2527 = vmatpush1.msra.mxu0 0.0
    %2528 = vmatprep.subr.mxu0 0.0
    %2529 = vmatpush1.msra.mxu0 0.0
    %2530 = vmatprep.subr.mxu0 0.0
    %2531 = vmatpush1.msra.mxu0 0.0
    %2532 = vmatprep.subr.mxu0 0.0
    %2533 = vmatpush1.msra.mxu0 0.0
    %2534 = vmatprep.subr.mxu0 0.0
    %2535 = vmatpush1.msra.mxu0 0.0
    %2536 = vmatprep.subr.mxu0 0.0
    %2537 = vmatpush1.msra.mxu0 0.0
    %2538 = vmatprep.subr.mxu0 0.0
    %2539 = vmatpush1.msra.mxu0 0.0
    %2540 = vmatprep.subr.mxu0 0.0
    %2541 = vmatpush1.msra.mxu0 0.0
    %2542 = vmatprep.subr.mxu0 0.0
    %2543 = vmatpush1.msra.mxu0 0.0
    %2544 = vmatprep.subr.mxu0 0.0
    %2545 = vmatpush1.msra.mxu0 0.0
    %2546 = vmatprep.subr.mxu0 0.0
    %2547 = vmatpush1.msra.mxu0 0.0
    %2548 = vmatprep.subr.mxu0 0.0
    %2549 = vmatpush1.msra.mxu0 0.0
    %2550 = vmatprep.subr.mxu0 0.0
    %2551 = vmatpush1.msra.mxu0 0.0
    %2552 = vmatprep.subr.mxu0 0.0
    %2553 = vmatpush1.msra.mxu0 0.0
    %2554 = vmatprep.subr.mxu0 0.0
    %2555 = vmatpush1.msra.mxu0 0.0
    %2556 = vmatprep.subr.mxu0 0.0
    %2557 = vmatpush1.msra.mxu0 0.0
    %2558 = vmatprep.subr.mxu0 0.0
    %2559 = vmatpush1.msra.mxu0 0.0
    %2560 = vmatprep.subr.mxu0 0.0
    %2561 = vmatpush1.msra.mxu0 0.0
    %2562 = vmatprep.subr.mxu0 0.0
    %2563 = vmatpush1.msra.mxu0 0.0
    %2564 = vmatprep.subr.mxu0 0.0
    %2565 = vmatpush1.msra.mxu0 0.0
    %2566 = vmatprep.subr.mxu0 0.0
    %2567 = vmatpush1.msra.mxu0 0.0
    %2568 = vmatprep.subr.mxu0 0.0
    %2569 = vmatpush1.msra.mxu0 0.0
    %2570 = vmatprep.subr.mxu0 0.0
    %2571 = vmatpush1.msra.mxu0 0.0
    %2572 = vmatprep.subr.mxu0 0.0
    %2573 = vmatpush1.msra.mxu0 0.0
    %2574 = vmatprep.subr.mxu0 0.0
    %2575 = vmatpush1.msra.mxu0 0.0
    %2576 = vmatprep.subr.mxu0 0.0
    %2577 = vmatpush1.msra.mxu0 0.0
    %2578 = vmatprep.subr.mxu0 0.0
    %2579 = vmatpush1.msra.mxu0 0.0
    %2580 = vmatprep.mubr.f32.mxu0 0.0
    %v2581 = vand.u32 %v1843, 4294901760
    %v2582 = vsub.f32 %v1843, %v2581
    %2583 = vmatmul.mubr.f32.gmra.mrb[0].mxu0 %v2582
    %v2584 = vpop.f32.mrb[0].mxu0
    %v2585 = vadd.f32 %v2504, %v2584
    %v2586 = vpop.f32.mrb[0].mxu0
    %v2587 = vadd.f32 %v2506, %v2586
    %2588 = vdwg.mxu0
    %v2589 = vand.u32 %v89, 4294901760
    %2590 = vmatprep.subr.mxu0 %v2589
    %v2591 = vand.u32 %v88, 4294901760
    %2592 = vmatpush1.msra.mxu0 %v2591
    %v2593 = vand.u32 %v93, 4294901760
    %2594 = vmatprep.subr.mxu0 %v2593
    %v2595 = vand.u32 %v92, 4294901760
    %2596 = vmatpush1.msra.mxu0 %v2595
    %2597 = vmatprep.subr.mxu0 0.0
    %2598 = vmatpush1.msra.mxu0 0.0
    %2599 = vmatprep.subr.mxu0 0.0
    %2600 = vmatpush1.msra.mxu0 0.0
    %2601 = vmatprep.subr.mxu0 0.0
    %2602 = vmatpush1.msra.mxu0 0.0
    %2603 = vmatprep.subr.mxu0 0.0
    %2604 = vmatpush1.msra.mxu0 0.0
    %2605 = vmatprep.subr.mxu0 0.0
    %2606 = vmatpush1.msra.mxu0 0.0
    %2607 = vmatprep.subr.mxu0 0.0
    %2608 = vmatpush1.msra.mxu0 0.0
    %2609 = vmatprep.subr.mxu0 0.0
    %2610 = vmatpush1.msra.mxu0 0.0
    %2611 = vmatprep.subr.mxu0 0.0
    %2612 = vmatpush1.msra.mxu0 0.0
    %2613 = vmatprep.subr.mxu0 0.0
    %2614 = vmatpush1.msra.mxu0 0.0
    %2615 = vmatprep.subr.mxu0 0.0
    %2616 = vmatpush1.msra.mxu0 0.0
    %2617 = vmatprep.subr.mxu0 0.0
    %2618 = vmatpush1.msra.mxu0 0.0
    %2619 = vmatprep.subr.mxu0 0.0
    %2620 = vmatpush1.msra.mxu0 0.0
    %2621 = vmatprep.subr.mxu0 0.0
    %2622 = vmatpush1.msra.mxu0 0.0
    %2623 = vmatprep.subr.mxu0 0.0
    %2624 = vmatpush1.msra.mxu0 0.0
    %2625 = vmatprep.subr.mxu0 0.0
    %2626 = vmatpush1.msra.mxu0 0.0
    %2627 = vmatprep.subr.mxu0 0.0
    %2628 = vmatpush1.msra.mxu0 0.0
    %2629 = vmatprep.subr.mxu0 0.0
    %2630 = vmatpush1.msra.mxu0 0.0
    %2631 = vmatprep.subr.mxu0 0.0
    %2632 = vmatpush1.msra.mxu0 0.0
    %2633 = vmatprep.subr.mxu0 0.0
    %2634 = vmatpush1.msra.mxu0 0.0
    %2635 = vmatprep.subr.mxu0 0.0
    %2636 = vmatpush1.msra.mxu0 0.0
    %2637 = vmatprep.subr.mxu0 0.0
    %2638 = vmatpush1.msra.mxu0 0.0
    %2639 = vmatprep.subr.mxu0 0.0
    %2640 = vmatpush1.msra.mxu0 0.0
    %2641 = vmatprep.subr.mxu0 0.0
    %2642 = vmatpush1.msra.mxu0 0.0
    %2643 = vmatprep.subr.mxu0 0.0
    %2644 = vmatpush1.msra.mxu0 0.0
    %2645 = vmatprep.subr.mxu0 0.0
    %2646 = vmatpush1.msra.mxu0 0.0
    %2647 = vmatprep.subr.mxu0 0.0
    %2648 = vmatpush1.msra.mxu0 0.0
    %2649 = vmatprep.subr.mxu0 0.0
    %2650 = vmatpush1.msra.mxu0 0.0
    %2651 = vmatprep.subr.mxu0 0.0
    %2652 = vmatpush1.msra.mxu0 0.0
    %2653 = vmatprep.subr.mxu0 0.0
    %2654 = vmatpush1.msra.mxu0 0.0
    %2655 = vmatprep.subr.mxu0 0.0
    %2656 = vmatpush1.msra.mxu0 0.0
    %2657 = vmatprep.mubr.f32.mxu0 0.0
    %v2658 = vand.u32 %v1843, 4294901760
    %v2659 = vsub.f32 %v1843, %v2658
    %v2660 = vand.u32 %v2659, 4294901760
    %2661 = vmatmul.mubr.f32.gmra.mrb[0].mxu0 %v2660
    %v2662 = vpop.f32.mrb[0].mxu0
    %v2663 = vadd.f32 %v2585, %v2662
    %v2664 = vpop.f32.mrb[0].mxu0
    %v2665 = vadd.f32 %v2587, %v2664
    %2666 = vdwg.mxu0
    %v2667 = vand.u32 %v89, 4294901760
    %v2668 = vsub.f32 %v89, %v2667
    %v2669 = vand.u32 %v2668, 4294901760
    %2670 = vmatprep.subr.mxu0 %v2669
    %v2671 = vand.u32 %v88, 4294901760
    %v2672 = vsub.f32 %v88, %v2671
    %v2673 = vand.u32 %v2672, 4294901760
    %2674 = vmatpush1.msra.mxu0 %v2673
    %v2675 = vand.u32 %v93, 4294901760
    %v2676 = vsub.f32 %v93, %v2675
    %v2677 = vand.u32 %v2676, 4294901760
    %2678 = vmatprep.subr.mxu0 %v2677
    %v2679 = vand.u32 %v92, 4294901760
    %v2680 = vsub.f32 %v92, %v2679
    %v2681 = vand.u32 %v2680, 4294901760
    %2682 = vmatpush1.msra.mxu0 %v2681
    %2683 = vmatprep.subr.mxu0 0.0
    %2684 = vmatpush1.msra.mxu0 0.0
    %2685 = vmatprep.subr.mxu0 0.0
    %2686 = vmatpush1.msra.mxu0 0.0
    %2687 = vmatprep.subr.mxu0 0.0
    %2688 = vmatpush1.msra.mxu0 0.0
    %2689 = vmatprep.subr.mxu0 0.0
    %2690 = vmatpush1.msra.mxu0 0.0
    %2691 = vmatprep.subr.mxu0 0.0
    %2692 = vmatpush1.msra.mxu0 0.0
    %2693 = vmatprep.subr.mxu0 0.0
    %2694 = vmatpush1.msra.mxu0 0.0
    %2695 = vmatprep.subr.mxu0 0.0
    %2696 = vmatpush1.msra.mxu0 0.0
    %2697 = vmatprep.subr.mxu0 0.0
    %2698 = vmatpush1.msra.mxu0 0.0
    %2699 = vmatprep.subr.mxu0 0.0
    %2700 = vmatpush1.msra.mxu0 0.0
    %2701 = vmatprep.subr.mxu0 0.0
    %2702 = vmatpush1.msra.mxu0 0.0
    %2703 = vmatprep.subr.mxu0 0.0
    %2704 = vmatpush1.msra.mxu0 0.0
    %2705 = vmatprep.subr.mxu0 0.0
    %2706 = vmatpush1.msra.mxu0 0.0
    %2707 = vmatprep.subr.mxu0 0.0
    %2708 = vmatpush1.msra.mxu0 0.0
    %2709 = vmatprep.subr.mxu0 0.0
    %2710 = vmatpush1.msra.mxu0 0.0
    %2711 = vmatprep.subr.mxu0 0.0
    %2712 = vmatpush1.msra.mxu0 0.0
    %2713 = vmatprep.subr.mxu0 0.0
    %2714 = vmatpush1.msra.mxu0 0.0
    %2715 = vmatprep.subr.mxu0 0.0
    %2716 = vmatpush1.msra.mxu0 0.0
    %2717 = vmatprep.subr.mxu0 0.0
    %2718 = vmatpush1.msra.mxu0 0.0
    %2719 = vmatprep.subr.mxu0 0.0
    %2720 = vmatpush1.msra.mxu0 0.0
    %2721 = vmatprep.subr.mxu0 0.0
    %2722 = vmatpush1.msra.mxu0 0.0
    %2723 = vmatprep.subr.mxu0 0.0
    %2724 = vmatpush1.msra.mxu0 0.0
    %2725 = vmatprep.subr.mxu0 0.0
    %2726 = vmatpush1.msra.mxu0 0.0
    %2727 = vmatprep.subr.mxu0 0.0
    %2728 = vmatpush1.msra.mxu0 0.0
    %2729 = vmatprep.subr.mxu0 0.0
    %2730 = vmatpush1.msra.mxu0 0.0
    %2731 = vmatprep.subr.mxu0 0.0
    %2732 = vmatpush1.msra.mxu0 0.0
    %2733 = vmatprep.subr.mxu0 0.0
    %2734 = vmatpush1.msra.mxu0 0.0
    %2735 = vmatprep.subr.mxu0 0.0
    %2736 = vmatpush1.msra.mxu0 0.0
    %2737 = vmatprep.subr.mxu0 0.0
    %2738 = vmatpush1.msra.mxu0 0.0
    %2739 = vmatprep.subr.mxu0 0.0
    %2740 = vmatpush1.msra.mxu0 0.0
    %2741 = vmatprep.subr.mxu0 0.0
    %2742 = vmatpush1.msra.mxu0 0.0
    %2743 = vmatprep.mubr.f32.mxu0 0.0
    %v2744 = vand.u32 %v1843, 4294901760
    %2745 = vmatmul.mubr.f32.gmra.mrb[0].mxu0 %v2744
    %v2746 = vpop.f32.mrb[0].mxu0
    %v2747 = vadd.f32 %v2663, %v2746
    %v2748 = vpop.f32.mrb[0].mxu0
    %v2749 = vadd.f32 %v2665, %v2748
    %2750 = vdwg.mxu0
    %v2751 = vand.u32 %v89, 4294901760
    %2752 = vmatprep.subr.mxu0 %v2751
    %v2753 = vand.u32 %v88, 4294901760
    %2754 = vmatpush1.msra.mxu0 %v2753
    %v2755 = vand.u32 %v93, 4294901760
    %2756 = vmatprep.subr.mxu0 %v2755
    %v2757 = vand.u32 %v92, 4294901760
    %2758 = vmatpush1.msra.mxu0 %v2757
    %2759 = vmatprep.subr.mxu0 0.0
    %2760 = vmatpush1.msra.mxu0 0.0
    %2761 = vmatprep.subr.mxu0 0.0
    %2762 = vmatpush1.msra.mxu0 0.0
    %2763 = vmatprep.subr.mxu0 0.0
    %2764 = vmatpush1.msra.mxu0 0.0
    %2765 = vmatprep.subr.mxu0 0.0
    %2766 = vmatpush1.msra.mxu0 0.0
    %2767 = vmatprep.subr.mxu0 0.0
    %2768 = vmatpush1.msra.mxu0 0.0
    %2769 = vmatprep.subr.mxu0 0.0
    %2770 = vmatpush1.msra.mxu0 0.0
    %2771 = vmatprep.subr.mxu0 0.0
    %2772 = vmatpush1.msra.mxu0 0.0
    %2773 = vmatprep.subr.mxu0 0.0
    %2774 = vmatpush1.msra.mxu0 0.0
    %2775 = vmatprep.subr.mxu0 0.0
    %2776 = vmatpush1.msra.mxu0 0.0
    %2777 = vmatprep.subr.mxu0 0.0
    %2778 = vmatpush1.msra.mxu0 0.0
    %2779 = vmatprep.subr.mxu0 0.0
    %2780 = vmatpush1.msra.mxu0 0.0
    %2781 = vmatprep.subr.mxu0 0.0
    %2782 = vmatpush1.msra.mxu0 0.0
    %2783 = vmatprep.subr.mxu0 0.0
    %2784 = vmatpush1.msra.mxu0 0.0
    %2785 = vmatprep.subr.mxu0 0.0
    %2786 = vmatpush1.msra.mxu0 0.0
    %2787 = vmatprep.subr.mxu0 0.0
    %2788 = vmatpush1.msra.mxu0 0.0
    %2789 = vmatprep.subr.mxu0 0.0
    %2790 = vmatpush1.msra.mxu0 0.0
    %2791 = vmatprep.subr.mxu0 0.0
    %2792 = vmatpush1.msra.mxu0 0.0
    %2793 = vmatprep.subr.mxu0 0.0
    %2794 = vmatpush1.msra.mxu0 0.0
    %2795 = vmatprep.subr.mxu0 0.0
    %2796 = vmatpush1.msra.mxu0 0.0
    %2797 = vmatprep.subr.mxu0 0.0
    %2798 = vmatpush1.msra.mxu0 0.0
    %2799 = vmatprep.subr.mxu0 0.0
    %2800 = vmatpush1.msra.mxu0 0.0
    %2801 = vmatprep.subr.mxu0 0.0
    %2802 = vmatpush1.msra.mxu0 0.0
    %2803 = vmatprep.subr.mxu0 0.0
    %2804 = vmatpush1.msra.mxu0 0.0
    %2805 = vmatprep.subr.mxu0 0.0
    %2806 = vmatpush1.msra.mxu0 0.0
    %2807 = vmatprep.subr.mxu0 0.0
    %2808 = vmatpush1.msra.mxu0 0.0
    %2809 = vmatprep.subr.mxu0 0.0
    %2810 = vmatpush1.msra.mxu0 0.0
    %2811 = vmatprep.subr.mxu0 0.0
    %2812 = vmatpush1.msra.mxu0 0.0
    %2813 = vmatprep.subr.mxu0 0.0
    %2814 = vmatpush1.msra.mxu0 0.0
    %2815 = vmatprep.subr.mxu0 0.0
    %2816 = vmatpush1.msra.mxu0 0.0
    %2817 = vmatprep.subr.mxu0 0.0
    %2818 = vmatpush1.msra.mxu0 0.0
    %2819 = vmatprep.mubr.f32.mxu0 0.0
    %v2820 = vand.u32 %v1843, 4294901760
    %2821 = vmatmul.mubr.f32.gmra.mrb[0].mxu0 %v2820
    %v2822 = vpop.f32.mrb[0].mxu0
    %v2823 = vadd.f32 %v2747, %v2822
    %v2824 = vpop.f32.mrb[0].mxu0
    %v2825 = vadd.f32 %v2749, %v2824
    %2826 = vdwg.mxu0
    %v2831 = vcombine.low %v2332, %v2334
    %v2832 = vcombine.low %v2823, %v2825
    %v2834 = vunpack.c.l.s4 1966171168
    %v2835 = vunpack.c.0.s8 %v2834
    %v2836 = vlaneseq
    %v2837 = vshrl.u32 %v2836, 7
    %v2838 = vsub.s32 %v2835, %v2837
    %v2839 = vrot.slane %v2831, %v2838
    %v2841 = vunpack.c.l.s4 1966171168
    %v2842 = vunpack.c.0.s8 %v2841
    %v2843 = vlaneseq
    %v2844 = vshrl.u32 %v2843, 7
    %v2845 = vsub.s32 %v2842, %v2844
    %v2846 = vrot.slane %v2832, %v2845
    %v2847 = vcombine.low %v2839, %v2846
    %v2849 = vunpack.c.l.s4 1966171168
    %v2850 = vunpack.c.0.s8 %v2849
    %v2851 = vlaneseq
    %v2852 = vshrl.u32 %v2851, 7
    %v2853 = vsub.s32 %v2850, %v2852
    %v2854 = vrot.slane %v2847, %v2853
    %v2856 = vsub.f32 %v21, %v2854
    %v2857 = vmul.f32 %v2856, %v2856
    %v2859 = vlaneseq
    %v2860 = vshrl.u32 %v2859, 7
    %v2861 = vsub.s32 0, %v2860
    %v2862 = vrot.slane %v2857, %v2861
    %v2863 = vlaneseq
    %v2864 = vshrl.u32 %v2863, 7
    %v2865 = vsub.s32 1, %v2864
    %v2866 = vrot.slane %v2857, %v2865
    %v2867 = vlaneseq
    %v2868 = vshrl.u32 %v2867, 7
    %v2869 = vsub.s32 2, %v2868
    %v2870 = vrot.slane %v2857, %v2869
    %v2871 = vlaneseq
    %v2872 = vshrl.u32 %v2871, 7
    %v2873 = vsub.s32 3, %v2872
    %v2874 = vrot.slane %v2857, %v2873
    %2879 = vmatprep.subr.mxu0 0.0
    %v2880 = vand.u32 %v22, 4294901760
    %2881 = vmatpush1.msra.mxu0 %v2880
    %2882 = vmatprep.subr.mxu0 0.0
    %v2883 = vand.u32 %v23, 4294901760
    %2884 = vmatpush1.msra.mxu0 %v2883
    %2885 = vmatprep.subr.mxu0 0.0
    %v2886 = vand.u32 %v24, 4294901760
    %2887 = vmatpush1.msra.mxu0 %v2886
    %2888 = vmatprep.subr.mxu0 0.0
    %v2889 = vand.u32 %v25, 4294901760
    %2890 = vmatpush1.msra.mxu0 %v2889
    %2891 = vmatprep.subr.mxu0 0.0
    %v2892 = vand.u32 %v26, 4294901760
    %2893 = vmatpush1.msra.mxu0 %v2892
    %2894 = vmatprep.subr.mxu0 0.0
    %v2895 = vand.u32 %v27, 4294901760
    %2896 = vmatpush1.msra.mxu0 %v2895
    %2897 = vmatprep.subr.mxu0 0.0
    %v2898 = vand.u32 %v28, 4294901760
    %2899 = vmatpush1.msra.mxu0 %v2898
    %2900 = vmatprep.subr.mxu0 0.0
    %v2901 = vand.u32 %v29, 4294901760
    %2902 = vmatpush1.msra.mxu0 %v2901
    %2903 = vmatprep.subr.mxu0 0.0
    %v2904 = vand.u32 %v30, 4294901760
    %2905 = vmatpush1.msra.mxu0 %v2904
    %2906 = vmatprep.subr.mxu0 0.0
    %v2907 = vand.u32 %v31, 4294901760
    %2908 = vmatpush1.msra.mxu0 %v2907
    %2909 = vmatprep.subr.mxu0 0.0
    %v2910 = vand.u32 %v32, 4294901760
    %2911 = vmatpush1.msra.mxu0 %v2910
    %2912 = vmatprep.subr.mxu0 0.0
    %v2913 = vand.u32 %v33, 4294901760
    %2914 = vmatpush1.msra.mxu0 %v2913
    %2915 = vmatprep.subr.mxu0 0.0
    %v2916 = vand.u32 %v34, 4294901760
    %2917 = vmatpush1.msra.mxu0 %v2916
    %2918 = vmatprep.subr.mxu0 0.0
    %v2919 = vand.u32 %v35, 4294901760
    %2920 = vmatpush1.msra.mxu0 %v2919
    %2921 = vmatprep.subr.mxu0 0.0
    %v2922 = vand.u32 %v36, 4294901760
    %2923 = vmatpush1.msra.mxu0 %v2922
    %2924 = vmatprep.subr.mxu0 0.0
    %v2925 = vand.u32 %v37, 4294901760
    %2926 = vmatpush1.msra.mxu0 %v2925
    %2927 = vmatprep.subr.mxu0 0.0
    %v2928 = vand.u32 %v38, 4294901760
    %2929 = vmatpush1.msra.mxu0 %v2928
    %2930 = vmatprep.subr.mxu0 0.0
    %v2931 = vand.u32 %v39, 4294901760
    %2932 = vmatpush1.msra.mxu0 %v2931
    %2933 = vmatprep.subr.mxu0 0.0
    %v2934 = vand.u32 %v40, 4294901760
    %2935 = vmatpush1.msra.mxu0 %v2934
    %2936 = vmatprep.subr.mxu0 0.0
    %v2937 = vand.u32 %v41, 4294901760
    %2938 = vmatpush1.msra.mxu0 %v2937
    %2939 = vmatprep.subr.mxu0 0.0
    %v2940 = vand.u32 %v42, 4294901760
    %2941 = vmatpush1.msra.mxu0 %v2940
    %2942 = vmatprep.subr.mxu0 0.0
    %v2943 = vand.u32 %v43, 4294901760
    %2944 = vmatpush1.msra.mxu0 %v2943
    %2945 = vmatprep.subr.mxu0 0.0
    %v2946 = vand.u32 %v44, 4294901760
    %2947 = vmatpush1.msra.mxu0 %v2946
    %2948 = vmatprep.subr.mxu0 0.0
    %v2949 = vand.u32 %v45, 4294901760
    %2950 = vmatpush1.msra.mxu0 %v2949
    %2951 = vmatprep.subr.mxu0 0.0
    %v2952 = vand.u32 %v46, 4294901760
    %2953 = vmatpush1.msra.mxu0 %v2952
    %2954 = vmatprep.subr.mxu0 0.0
    %v2955 = vand.u32 %v47, 4294901760
    %2956 = vmatpush1.msra.mxu0 %v2955
    %2957 = vmatprep.subr.mxu0 0.0
    %v2958 = vand.u32 %v48, 4294901760
    %2959 = vmatpush1.msra.mxu0 %v2958
    %2960 = vmatprep.subr.mxu0 0.0
    %v2961 = vand.u32 %v49, 4294901760
    %2962 = vmatpush1.msra.mxu0 %v2961
    %2963 = vmatprep.subr.mxu0 0.0
    %v2964 = vand.u32 %v50, 4294901760
    %2965 = vmatpush1.msra.mxu0 %v2964
    %2966 = vmatprep.subr.mxu0 0.0
    %v2967 = vand.u32 %v51, 4294901760
    %2968 = vmatpush1.msra.mxu0 %v2967
    %2969 = vmatprep.subr.mxu0 0.0
    %v2970 = vand.u32 %v52, 4294901760
    %2971 = vmatpush1.msra.mxu0 %v2970
    %2972 = vmatprep.subr.mxu0 0.0
    %v2973 = vand.u32 %v53, 4294901760
    %2974 = vmatpush1.msra.mxu0 %v2973
    %v2975 = vand.u32 %v2866, 4294901760
    %v2976 = vsub.f32 %v2866, %v2975
    %v2977 = vand.u32 %v2976, 4294901760
    %v2978 = vsub.f32 %v2976, %v2977
    %v2979 = vand.u32 %v2978, 4294901760
    %2980 = vmatprep.mubr.f32.mxu0 %v2979
    %v2981 = vand.u32 %v2862, 4294901760
    %v2982 = vsub.f32 %v2862, %v2981
    %v2983 = vand.u32 %v2982, 4294901760
    %v2984 = vsub.f32 %v2982, %v2983
    %v2985 = vand.u32 %v2984, 4294901760
    %2986 = vmatmul.mubr.f32.gmra.mrb[0].mxu0 %v2985
    %v2987 = vpop.f32.mrb[0].mxu0
    %v2988 = vadd.f32 0.0, %v2987
    %v2989 = vpop.f32.mrb[0].mxu0
    %2990 = vdwg.mxu0
    %2991 = vmatprep.subr.mxu0 0.0
    %v2992 = vand.u32 %v22, 4294901760
    %v2993 = vsub.f32 %v22, %v2992
    %v2994 = vand.u32 %v2993, 4294901760
    %v2995 = vsub.f32 %v2993, %v2994
    %v2996 = vand.u32 %v2995, 4294901760
    %2997 = vmatpush1.msra.mxu0 %v2996
    %2998 = vmatprep.subr.mxu0 0.0
    %v2999 = vand.u32 %v23, 4294901760
    %v3000 = vsub.f32 %v23, %v2999
    %v3001 = vand.u32 %v3000, 4294901760
    %v3002 = vsub.f32 %v3000, %v3001
    %v3003 = vand.u32 %v3002, 4294901760
    %3004 = vmatpush1.msra.mxu0 %v3003
    %3005 = vmatprep.subr.mxu0 0.0
    %v3006 = vand.u32 %v24, 4294901760
    %v3007 = vsub.f32 %v24, %v3006
    %v3008 = vand.u32 %v3007, 4294901760
    %v3009 = vsub.f32 %v3007, %v3008
    %v3010 = vand.u32 %v3009, 4294901760
    %3011 = vmatpush1.msra.mxu0 %v3010
    %3012 = vmatprep.subr.mxu0 0.0
    %v3013 = vand.u32 %v25, 4294901760
    %v3014 = vsub.f32 %v25, %v3013
    %v3015 = vand.u32 %v3014, 4294901760
    %v3016 = vsub.f32 %v3014, %v3015
    %v3017 = vand.u32 %v3016, 4294901760
    %3018 = vmatpush1.msra.mxu0 %v3017
    %3019 = vmatprep.subr.mxu0 0.0
    %v3020 = vand.u32 %v26, 4294901760
    %v3021 = vsub.f32 %v26, %v3020
    %v3022 = vand.u32 %v3021, 4294901760
    %v3023 = vsub.f32 %v3021, %v3022
    %v3024 = vand.u32 %v3023, 4294901760
    %3025 = vmatpush1.msra.mxu0 %v3024
    %3026 = vmatprep.subr.mxu0 0.0
    %v3027 = vand.u32 %v27, 4294901760
    %v3028 = vsub.f32 %v27, %v3027
    %v3029 = vand.u32 %v3028, 4294901760
    %v3030 = vsub.f32 %v3028, %v3029
    %v3031 = vand.u32 %v3030, 4294901760
    %3032 = vmatpush1.msra.mxu0 %v3031
    %3033 = vmatprep.subr.mxu0 0.0
    %v3034 = vand.u32 %v28, 4294901760
    %v3035 = vsub.f32 %v28, %v3034
    %v3036 = vand.u32 %v3035, 4294901760
    %v3037 = vsub.f32 %v3035, %v3036
    %v3038 = vand.u32 %v3037, 4294901760
    %3039 = vmatpush1.msra.mxu0 %v3038
    %3040 = vmatprep.subr.mxu0 0.0
    %v3041 = vand.u32 %v29, 4294901760
    %v3042 = vsub.f32 %v29, %v3041
    %v3043 = vand.u32 %v3042, 4294901760
    %v3044 = vsub.f32 %v3042, %v3043
    %v3045 = vand.u32 %v3044, 4294901760
    %3046 = vmatpush1.msra.mxu0 %v3045
    %3047 = vmatprep.subr.mxu0 0.0
    %v3048 = vand.u32 %v30, 4294901760
    %v3049 = vsub.f32 %v30, %v3048
    %v3050 = vand.u32 %v3049, 4294901760
    %v3051 = vsub.f32 %v3049, %v3050
    %v3052 = vand.u32 %v3051, 4294901760
    %3053 = vmatpush1.msra.mxu0 %v3052
    %3054 = vmatprep.subr.mxu0 0.0
    %v3055 = vand.u32 %v31, 4294901760
    %v3056 = vsub.f32 %v31, %v3055
    %v3057 = vand.u32 %v3056, 4294901760
    %v3058 = vsub.f32 %v3056, %v3057
    %v3059 = vand.u32 %v3058, 4294901760
    %3060 = vmatpush1.msra.mxu0 %v3059
    %3061 = vmatprep.subr.mxu0 0.0
    %v3062 = vand.u32 %v32, 4294901760
    %v3063 = vsub.f32 %v32, %v3062
    %v3064 = vand.u32 %v3063, 4294901760
    %v3065 = vsub.f32 %v3063, %v3064
    %v3066 = vand.u32 %v3065, 4294901760
    %3067 = vmatpush1.msra.mxu0 %v3066
    %3068 = vmatprep.subr.mxu0 0.0
    %v3069 = vand.u32 %v33, 4294901760
    %v3070 = vsub.f32 %v33, %v3069
    %v3071 = vand.u32 %v3070, 4294901760
    %v3072 = vsub.f32 %v3070, %v3071
    %v3073 = vand.u32 %v3072, 4294901760
    %3074 = vmatpush1.msra.mxu0 %v3073
    %3075 = vmatprep.subr.mxu0 0.0
    %v3076 = vand.u32 %v34, 4294901760
    %v3077 = vsub.f32 %v34, %v3076
    %v3078 = vand.u32 %v3077, 4294901760
    %v3079 = vsub.f32 %v3077, %v3078
    %v3080 = vand.u32 %v3079, 4294901760
    %3081 = vmatpush1.msra.mxu0 %v3080
    %3082 = vmatprep.subr.mxu0 0.0
    %v3083 = vand.u32 %v35, 4294901760
    %v3084 = vsub.f32 %v35, %v3083
    %v3085 = vand.u32 %v3084, 4294901760
    %v3086 = vsub.f32 %v3084, %v3085
    %v3087 = vand.u32 %v3086, 4294901760
    %3088 = vmatpush1.msra.mxu0 %v3087
    %3089 = vmatprep.subr.mxu0 0.0
    %v3090 = vand.u32 %v36, 4294901760
    %v3091 = vsub.f32 %v36, %v3090
    %v3092 = vand.u32 %v3091, 4294901760
    %v3093 = vsub.f32 %v3091, %v3092
    %v3094 = vand.u32 %v3093, 4294901760
    %3095 = vmatpush1.msra.mxu0 %v3094
    %3096 = vmatprep.subr.mxu0 0.0
    %v3097 = vand.u32 %v37, 4294901760
    %v3098 = vsub.f32 %v37, %v3097
    %v3099 = vand.u32 %v3098, 4294901760
    %v3100 = vsub.f32 %v3098, %v3099
    %v3101 = vand.u32 %v3100, 4294901760
    %3102 = vmatpush1.msra.mxu0 %v3101
    %3103 = vmatprep.subr.mxu0 0.0
    %v3104 = vand.u32 %v38, 4294901760
    %v3105 = vsub.f32 %v38, %v3104
    %v3106 = vand.u32 %v3105, 4294901760
    %v3107 = vsub.f32 %v3105, %v3106
    %v3108 = vand.u32 %v3107, 4294901760
    %3109 = vmatpush1.msra.mxu0 %v3108
    %3110 = vmatprep.subr.mxu0 0.0
    %v3111 = vand.u32 %v39, 4294901760
    %v3112 = vsub.f32 %v39, %v3111
    %v3113 = vand.u32 %v3112, 4294901760
    %v3114 = vsub.f32 %v3112, %v3113
    %v3115 = vand.u32 %v3114, 4294901760
    %3116 = vmatpush1.msra.mxu0 %v3115
    %3117 = vmatprep.subr.mxu0 0.0
    %v3118 = vand.u32 %v40, 4294901760
    %v3119 = vsub.f32 %v40, %v3118
    %v3120 = vand.u32 %v3119, 4294901760
    %v3121 = vsub.f32 %v3119, %v3120
    %v3122 = vand.u32 %v3121, 4294901760
    %3123 = vmatpush1.msra.mxu0 %v3122
    %3124 = vmatprep.subr.mxu0 0.0
    %v3125 = vand.u32 %v41, 4294901760
    %v3126 = vsub.f32 %v41, %v3125
    %v3127 = vand.u32 %v3126, 4294901760
    %v3128 = vsub.f32 %v3126, %v3127
    %v3129 = vand.u32 %v3128, 4294901760
    %3130 = vmatpush1.msra.mxu0 %v3129
    %3131 = vmatprep.subr.mxu0 0.0
    %v3132 = vand.u32 %v42, 4294901760
    %v3133 = vsub.f32 %v42, %v3132
    %v3134 = vand.u32 %v3133, 4294901760
    %v3135 = vsub.f32 %v3133, %v3134
    %v3136 = vand.u32 %v3135, 4294901760
    %3137 = vmatpush1.msra.mxu0 %v3136
    %3138 = vmatprep.subr.mxu0 0.0
    %v3139 = vand.u32 %v43, 4294901760
    %v3140 = vsub.f32 %v43, %v3139
    %v3141 = vand.u32 %v3140, 4294901760
    %v3142 = vsub.f32 %v3140, %v3141
    %v3143 = vand.u32 %v3142, 4294901760
    %3144 = vmatpush1.msra.mxu0 %v3143
    %3145 = vmatprep.subr.mxu0 0.0
    %v3146 = vand.u32 %v44, 4294901760
    %v3147 = vsub.f32 %v44, %v3146
    %v3148 = vand.u32 %v3147, 4294901760
    %v3149 = vsub.f32 %v3147, %v3148
    %v3150 = vand.u32 %v3149, 4294901760
    %3151 = vmatpush1.msra.mxu0 %v3150
    %3152 = vmatprep.subr.mxu0 0.0
    %v3153 = vand.u32 %v45, 4294901760
    %v3154 = vsub.f32 %v45, %v3153
    %v3155 = vand.u32 %v3154, 4294901760
    %v3156 = vsub.f32 %v3154, %v3155
    %v3157 = vand.u32 %v3156, 4294901760
    %3158 = vmatpush1.msra.mxu0 %v3157
    %3159 = vmatprep.subr.mxu0 0.0
    %v3160 = vand.u32 %v46, 4294901760
    %v3161 = vsub.f32 %v46, %v3160
    %v3162 = vand.u32 %v3161, 4294901760
    %v3163 = vsub.f32 %v3161, %v3162
    %v3164 = vand.u32 %v3163, 4294901760
    %3165 = vmatpush1.msra.mxu0 %v3164
    %3166 = vmatprep.subr.mxu0 0.0
    %v3167 = vand.u32 %v47, 4294901760
    %v3168 = vsub.f32 %v47, %v3167
    %v3169 = vand.u32 %v3168, 4294901760
    %v3170 = vsub.f32 %v3168, %v3169
    %v3171 = vand.u32 %v3170, 4294901760
    %3172 = vmatpush1.msra.mxu0 %v3171
    %3173 = vmatprep.subr.mxu0 0.0
    %v3174 = vand.u32 %v48, 4294901760
    %v3175 = vsub.f32 %v48, %v3174
    %v3176 = vand.u32 %v3175, 4294901760
    %v3177 = vsub.f32 %v3175, %v3176
    %v3178 = vand.u32 %v3177, 4294901760
    %3179 = vmatpush1.msra.mxu0 %v3178
    %3180 = vmatprep.subr.mxu0 0.0
    %v3181 = vand.u32 %v49, 4294901760
    %v3182 = vsub.f32 %v49, %v3181
    %v3183 = vand.u32 %v3182, 4294901760
    %v3184 = vsub.f32 %v3182, %v3183
    %v3185 = vand.u32 %v3184, 4294901760
    %3186 = vmatpush1.msra.mxu0 %v3185
    %3187 = vmatprep.subr.mxu0 0.0
    %v3188 = vand.u32 %v50, 4294901760
    %v3189 = vsub.f32 %v50, %v3188
    %v3190 = vand.u32 %v3189, 4294901760
    %v3191 = vsub.f32 %v3189, %v3190
    %v3192 = vand.u32 %v3191, 4294901760
    %3193 = vmatpush1.msra.mxu0 %v3192
    %3194 = vmatprep.subr.mxu0 0.0
    %v3195 = vand.u32 %v51, 4294901760
    %v3196 = vsub.f32 %v51, %v3195
    %v3197 = vand.u32 %v3196, 4294901760
    %v3198 = vsub.f32 %v3196, %v3197
    %v3199 = vand.u32 %v3198, 4294901760
    %3200 = vmatpush1.msra.mxu0 %v3199
    %3201 = vmatprep.subr.mxu0 0.0
    %v3202 = vand.u32 %v52, 4294901760
    %v3203 = vsub.f32 %v52, %v3202
    %v3204 = vand.u32 %v3203, 4294901760
    %v3205 = vsub.f32 %v3203, %v3204
    %v3206 = vand.u32 %v3205, 4294901760
    %3207 = vmatpush1.msra.mxu0 %v3206
    %3208 = vmatprep.subr.mxu0 0.0
    %v3209 = vand.u32 %v53, 4294901760
    %v3210 = vsub.f32 %v53, %v3209
    %v3211 = vand.u32 %v3210, 4294901760
    %v3212 = vsub.f32 %v3210, %v3211
    %v3213 = vand.u32 %v3212, 4294901760
    %3214 = vmatpush1.msra.mxu0 %v3213
    %v3215 = vand.u32 %v2866, 4294901760
    %3216 = vmatprep.mubr.f32.mxu0 %v3215
    %v3217 = vand.u32 %v2862, 4294901760
    %3218 = vmatmul.mubr.f32.gmra.mrb[0].mxu0 %v3217
    %v3219 = vpop.f32.mrb[0].mxu0
    %v3220 = vadd.f32 %v2988, %v3219
    %v3221 = vpop.f32.mrb[0].mxu0
    %3222 = vdwg.mxu0
    %3223 = vmatprep.subr.mxu0 0.0
    %v3224 = vand.u32 %v22, 4294901760
    %v3225 = vsub.f32 %v22, %v3224
    %3226 = vmatpush1.msra.mxu0 %v3225
    %3227 = vmatprep.subr.mxu0 0.0
    %v3228 = vand.u32 %v23, 4294901760
    %v3229 = vsub.f32 %v23, %v3228
    %3230 = vmatpush1.msra.mxu0 %v3229
    %3231 = vmatprep.subr.mxu0 0.0
    %v3232 = vand.u32 %v24, 4294901760
    %v3233 = vsub.f32 %v24, %v3232
    %3234 = vmatpush1.msra.mxu0 %v3233
    %3235 = vmatprep.subr.mxu0 0.0
    %v3236 = vand.u32 %v25, 4294901760
    %v3237 = vsub.f32 %v25, %v3236
    %3238 = vmatpush1.msra.mxu0 %v3237
    %3239 = vmatprep.subr.mxu0 0.0
    %v3240 = vand.u32 %v26, 4294901760
    %v3241 = vsub.f32 %v26, %v3240
    %3242 = vmatpush1.msra.mxu0 %v3241
    %3243 = vmatprep.subr.mxu0 0.0
    %v3244 = vand.u32 %v27, 4294901760
    %v3245 = vsub.f32 %v27, %v3244
    %3246 = vmatpush1.msra.mxu0 %v3245
    %3247 = vmatprep.subr.mxu0 0.0
    %v3248 = vand.u32 %v28, 4294901760
    %v3249 = vsub.f32 %v28, %v3248
    %3250 = vmatpush1.msra.mxu0 %v3249
    %3251 = vmatprep.subr.mxu0 0.0
    %v3252 = vand.u32 %v29, 4294901760
    %v3253 = vsub.f32 %v29, %v3252
    %3254 = vmatpush1.msra.mxu0 %v3253
    %3255 = vmatprep.subr.mxu0 0.0
    %v3256 = vand.u32 %v30, 4294901760
    %v3257 = vsub.f32 %v30, %v3256
    %3258 = vmatpush1.msra.mxu0 %v3257
    %3259 = vmatprep.subr.mxu0 0.0
    %v3260 = vand.u32 %v31, 4294901760
    %v3261 = vsub.f32 %v31, %v3260
    %3262 = vmatpush1.msra.mxu0 %v3261
    %3263 = vmatprep.subr.mxu0 0.0
    %v3264 = vand.u32 %v32, 4294901760
    %v3265 = vsub.f32 %v32, %v3264
    %3266 = vmatpush1.msra.mxu0 %v3265
    %3267 = vmatprep.subr.mxu0 0.0
    %v3268 = vand.u32 %v33, 4294901760
    %v3269 = vsub.f32 %v33, %v3268
    %3270 = vmatpush1.msra.mxu0 %v3269
    %3271 = vmatprep.subr.mxu0 0.0
    %v3272 = vand.u32 %v34, 4294901760
    %v3273 = vsub.f32 %v34, %v3272
    %3274 = vmatpush1.msra.mxu0 %v3273
    %3275 = vmatprep.subr.mxu0 0.0
    %v3276 = vand.u32 %v35, 4294901760
    %v3277 = vsub.f32 %v35, %v3276
    %3278 = vmatpush1.msra.mxu0 %v3277
    %3279 = vmatprep.subr.mxu0 0.0
    %v3280 = vand.u32 %v36, 4294901760
    %v3281 = vsub.f32 %v36, %v3280
    %3282 = vmatpush1.msra.mxu0 %v3281
    %3283 = vmatprep.subr.mxu0 0.0
    %v3284 = vand.u32 %v37, 4294901760
    %v3285 = vsub.f32 %v37, %v3284
    %3286 = vmatpush1.msra.mxu0 %v3285
    %3287 = vmatprep.subr.mxu0 0.0
    %v3288 = vand.u32 %v38, 4294901760
    %v3289 = vsub.f32 %v38, %v3288
    %3290 = vmatpush1.msra.mxu0 %v3289
    %3291 = vmatprep.subr.mxu0 0.0
    %v3292 = vand.u32 %v39, 4294901760
    %v3293 = vsub.f32 %v39, %v3292
    %3294 = vmatpush1.msra.mxu0 %v3293
    %3295 = vmatprep.subr.mxu0 0.0
    %v3296 = vand.u32 %v40, 4294901760
    %v3297 = vsub.f32 %v40, %v3296
    %3298 = vmatpush1.msra.mxu0 %v3297
    %3299 = vmatprep.subr.mxu0 0.0
    %v3300 = vand.u32 %v41, 4294901760
    %v3301 = vsub.f32 %v41, %v3300
    %3302 = vmatpush1.msra.mxu0 %v3301
    %3303 = vmatprep.subr.mxu0 0.0
    %v3304 = vand.u32 %v42, 4294901760
    %v3305 = vsub.f32 %v42, %v3304
    %3306 = vmatpush1.msra.mxu0 %v3305
    %3307 = vmatprep.subr.mxu0 0.0
    %v3308 = vand.u32 %v43, 4294901760
    %v3309 = vsub.f32 %v43, %v3308
    %3310 = vmatpush1.msra.mxu0 %v3309
    %3311 = vmatprep.subr.mxu0 0.0
    %v3312 = vand.u32 %v44, 4294901760
    %v3313 = vsub.f32 %v44, %v3312
    %3314 = vmatpush1.msra.mxu0 %v3313
    %3315 = vmatprep.subr.mxu0 0.0
    %v3316 = vand.u32 %v45, 4294901760
    %v3317 = vsub.f32 %v45, %v3316
    %3318 = vmatpush1.msra.mxu0 %v3317
    %3319 = vmatprep.subr.mxu0 0.0
    %v3320 = vand.u32 %v46, 4294901760
    %v3321 = vsub.f32 %v46, %v3320
    %3322 = vmatpush1.msra.mxu0 %v3321
    %3323 = vmatprep.subr.mxu0 0.0
    %v3324 = vand.u32 %v47, 4294901760
    %v3325 = vsub.f32 %v47, %v3324
    %3326 = vmatpush1.msra.mxu0 %v3325
    %3327 = vmatprep.subr.mxu0 0.0
    %v3328 = vand.u32 %v48, 4294901760
    %v3329 = vsub.f32 %v48, %v3328
    %3330 = vmatpush1.msra.mxu0 %v3329
    %3331 = vmatprep.subr.mxu0 0.0
    %v3332 = vand.u32 %v49, 4294901760
    %v3333 = vsub.f32 %v49, %v3332
    %3334 = vmatpush1.msra.mxu0 %v3333
    %3335 = vmatprep.subr.mxu0 0.0
    %v3336 = vand.u32 %v50, 4294901760
    %v3337 = vsub.f32 %v50, %v3336
    %3338 = vmatpush1.msra.mxu0 %v3337
    %3339 = vmatprep.subr.mxu0 0.0
    %v3340 = vand.u32 %v51, 4294901760
    %v3341 = vsub.f32 %v51, %v3340
    %3342 = vmatpush1.msra.mxu0 %v3341
    %3343 = vmatprep.subr.mxu0 0.0
    %v3344 = vand.u32 %v52, 4294901760
    %v3345 = vsub.f32 %v52, %v3344
    %3346 = vmatpush1.msra.mxu0 %v3345
    %3347 = vmatprep.subr.mxu0 0.0
    %v3348 = vand.u32 %v53, 4294901760
    %v3349 = vsub.f32 %v53, %v3348
    %3350 = vmatpush1.msra.mxu0 %v3349
    %v3351 = vand.u32 %v2866, 4294901760
    %v3352 = vsub.f32 %v2866, %v3351
    %3353 = vmatprep.mubr.f32.mxu0 %v3352
    %v3354 = vand.u32 %v2862, 4294901760
    %v3355 = vsub.f32 %v2862, %v3354
    %3356 = vmatmul.mubr.f32.gmra.mrb[0].mxu0 %v3355
    %v3357 = vpop.f32.mrb[0].mxu0
    %v3358 = vadd.f32 %v3220, %v3357
    %v3359 = vpop.f32.mrb[0].mxu0
    %3360 = vdwg.mxu0
    %3361 = vmatprep.subr.mxu0 0.0
    %v3362 = vand.u32 %v22, 4294901760
    %3363 = vmatpush1.msra.mxu0 %v3362
    %3364 = vmatprep.subr.mxu0 0.0
    %v3365 = vand.u32 %v23, 4294901760
    %3366 = vmatpush1.msra.mxu0 %v3365
    %3367 = vmatprep.subr.mxu0 0.0
    %v3368 = vand.u32 %v24, 4294901760
    %3369 = vmatpush1.msra.mxu0 %v3368
    %3370 = vmatprep.subr.mxu0 0.0
    %v3371 = vand.u32 %v25, 4294901760
    %3372 = vmatpush1.msra.mxu0 %v3371
    %3373 = vmatprep.subr.mxu0 0.0
    %v3374 = vand.u32 %v26, 4294901760
    %3375 = vmatpush1.msra.mxu0 %v3374
    %3376 = vmatprep.subr.mxu0 0.0
    %v3377 = vand.u32 %v27, 4294901760
    %3378 = vmatpush1.msra.mxu0 %v3377
    %3379 = vmatprep.subr.mxu0 0.0
    %v3380 = vand.u32 %v28, 4294901760
    %3381 = vmatpush1.msra.mxu0 %v3380
    %3382 = vmatprep.subr.mxu0 0.0
    %v3383 = vand.u32 %v29, 4294901760
    %3384 = vmatpush1.msra.mxu0 %v3383
    %3385 = vmatprep.subr.mxu0 0.0
    %v3386 = vand.u32 %v30, 4294901760
    %3387 = vmatpush1.msra.mxu0 %v3386
    %3388 = vmatprep.subr.mxu0 0.0
    %v3389 = vand.u32 %v31, 4294901760
    %3390 = vmatpush1.msra.mxu0 %v3389
    %3391 = vmatprep.subr.mxu0 0.0
    %v3392 = vand.u32 %v32, 4294901760
    %3393 = vmatpush1.msra.mxu0 %v3392
    %3394 = vmatprep.subr.mxu0 0.0
    %v3395 = vand.u32 %v33, 4294901760
    %3396 = vmatpush1.msra.mxu0 %v3395
    %3397 = vmatprep.subr.mxu0 0.0
    %v3398 = vand.u32 %v34, 4294901760
    %3399 = vmatpush1.msra.mxu0 %v3398
    %3400 = vmatprep.subr.mxu0 0.0
    %v3401 = vand.u32 %v35, 4294901760
    %3402 = vmatpush1.msra.mxu0 %v3401
    %3403 = vmatprep.subr.mxu0 0.0
    %v3404 = vand.u32 %v36, 4294901760
    %3405 = vmatpush1.msra.mxu0 %v3404
    %3406 = vmatprep.subr.mxu0 0.0
    %v3407 = vand.u32 %v37, 4294901760
    %3408 = vmatpush1.msra.mxu0 %v3407
    %3409 = vmatprep.subr.mxu0 0.0
    %v3410 = vand.u32 %v38, 4294901760
    %3411 = vmatpush1.msra.mxu0 %v3410
    %3412 = vmatprep.subr.mxu0 0.0
    %v3413 = vand.u32 %v39, 4294901760
    %3414 = vmatpush1.msra.mxu0 %v3413
    %3415 = vmatprep.subr.mxu0 0.0
    %v3416 = vand.u32 %v40, 4294901760
    %3417 = vmatpush1.msra.mxu0 %v3416
    %3418 = vmatprep.subr.mxu0 0.0
    %v3419 = vand.u32 %v41, 4294901760
    %3420 = vmatpush1.msra.mxu0 %v3419
    %3421 = vmatprep.subr.mxu0 0.0
    %v3422 = vand.u32 %v42, 4294901760
    %3423 = vmatpush1.msra.mxu0 %v3422
    %3424 = vmatprep.subr.mxu0 0.0
    %v3425 = vand.u32 %v43, 4294901760
    %3426 = vmatpush1.msra.mxu0 %v3425
    %3427 = vmatprep.subr.mxu0 0.0
    %v3428 = vand.u32 %v44, 4294901760
    %3429 = vmatpush1.msra.mxu0 %v3428
    %3430 = vmatprep.subr.mxu0 0.0
    %v3431 = vand.u32 %v45, 4294901760
    %3432 = vmatpush1.msra.mxu0 %v3431
    %3433 = vmatprep.subr.mxu0 0.0
    %v3434 = vand.u32 %v46, 4294901760
    %3435 = vmatpush1.msra.mxu0 %v3434
    %3436 = vmatprep.subr.mxu0 0.0
    %v3437 = vand.u32 %v47, 4294901760
    %3438 = vmatpush1.msra.mxu0 %v3437
    %3439 = vmatprep.subr.mxu0 0.0
    %v3440 = vand.u32 %v48, 4294901760
    %3441 = vmatpush1.msra.mxu0 %v3440
    %3442 = vmatprep.subr.mxu0 0.0
    %v3443 = vand.u32 %v49, 4294901760
    %3444 = vmatpush1.msra.mxu0 %v3443
    %3445 = vmatprep.subr.mxu0 0.0
    %v3446 = vand.u32 %v50, 4294901760
    %3447 = vmatpush1.msra.mxu0 %v3446
    %3448 = vmatprep.subr.mxu0 0.0
    %v3449 = vand.u32 %v51, 4294901760
    %3450 = vmatpush1.msra.mxu0 %v3449
    %3451 = vmatprep.subr.mxu0 0.0
    %v3452 = vand.u32 %v52, 4294901760
    %3453 = vmatpush1.msra.mxu0 %v3452
    %3454 = vmatprep.subr.mxu0 0.0
    %v3455 = vand.u32 %v53, 4294901760
    %3456 = vmatpush1.msra.mxu0 %v3455
    %v3457 = vand.u32 %v2866, 4294901760
    %v3458 = vsub.f32 %v2866, %v3457
    %v3459 = vand.u32 %v3458, 4294901760
    %3460 = vmatprep.mubr.f32.mxu0 %v3459
    %v3461 = vand.u32 %v2862, 4294901760
    %v3462 = vsub.f32 %v2862, %v3461
    %v3463 = vand.u32 %v3462, 4294901760
    %3464 = vmatmul.mubr.f32.gmra.mrb[0].mxu0 %v3463
    %v3465 = vpop.f32.mrb[0].mxu0
    %v3466 = vadd.f32 %v3358, %v3465
    %v3467 = vpop.f32.mrb[0].mxu0
    %3468 = vdwg.mxu0
    %3469 = vmatprep.subr.mxu0 0.0
    %v3470 = vand.u32 %v22, 4294901760
    %v3471 = vsub.f32 %v22, %v3470
    %v3472 = vand.u32 %v3471, 4294901760
    %3473 = vmatpush1.msra.mxu0 %v3472
    %3474 = vmatprep.subr.mxu0 0.0
    %v3475 = vand.u32 %v23, 4294901760
    %v3476 = vsub.f32 %v23, %v3475
    %v3477 = vand.u32 %v3476, 4294901760
    %3478 = vmatpush1.msra.mxu0 %v3477
    %3479 = vmatprep.subr.mxu0 0.0
    %v3480 = vand.u32 %v24, 4294901760
    %v3481 = vsub.f32 %v24, %v3480
    %v3482 = vand.u32 %v3481, 4294901760
    %3483 = vmatpush1.msra.mxu0 %v3482
    %3484 = vmatprep.subr.mxu0 0.0
    %v3485 = vand.u32 %v25, 4294901760
    %v3486 = vsub.f32 %v25, %v3485
    %v3487 = vand.u32 %v3486, 4294901760
    %3488 = vmatpush1.msra.mxu0 %v3487
    %3489 = vmatprep.subr.mxu0 0.0
    %v3490 = vand.u32 %v26, 4294901760
    %v3491 = vsub.f32 %v26, %v3490
    %v3492 = vand.u32 %v3491, 4294901760
    %3493 = vmatpush1.msra.mxu0 %v3492
    %3494 = vmatprep.subr.mxu0 0.0
    %v3495 = vand.u32 %v27, 4294901760
    %v3496 = vsub.f32 %v27, %v3495
    %v3497 = vand.u32 %v3496, 4294901760
    %3498 = vmatpush1.msra.mxu0 %v3497
    %3499 = vmatprep.subr.mxu0 0.0
    %v3500 = vand.u32 %v28, 4294901760
    %v3501 = vsub.f32 %v28, %v3500
    %v3502 = vand.u32 %v3501, 4294901760
    %3503 = vmatpush1.msra.mxu0 %v3502
    %3504 = vmatprep.subr.mxu0 0.0
    %v3505 = vand.u32 %v29, 4294901760
    %v3506 = vsub.f32 %v29, %v3505
    %v3507 = vand.u32 %v3506, 4294901760
    %3508 = vmatpush1.msra.mxu0 %v3507
    %3509 = vmatprep.subr.mxu0 0.0
    %v3510 = vand.u32 %v30, 4294901760
    %v3511 = vsub.f32 %v30, %v3510
    %v3512 = vand.u32 %v3511, 4294901760
    %3513 = vmatpush1.msra.mxu0 %v3512
    %3514 = vmatprep.subr.mxu0 0.0
    %v3515 = vand.u32 %v31, 4294901760
    %v3516 = vsub.f32 %v31, %v3515
    %v3517 = vand.u32 %v3516, 4294901760
    %3518 = vmatpush1.msra.mxu0 %v3517
    %3519 = vmatprep.subr.mxu0 0.0
    %v3520 = vand.u32 %v32, 4294901760
    %v3521 = vsub.f32 %v32, %v3520
    %v3522 = vand.u32 %v3521, 4294901760
    %3523 = vmatpush1.msra.mxu0 %v3522
    %3524 = vmatprep.subr.mxu0 0.0
    %v3525 = vand.u32 %v33, 4294901760
    %v3526 = vsub.f32 %v33, %v3525
    %v3527 = vand.u32 %v3526, 4294901760
    %3528 = vmatpush1.msra.mxu0 %v3527
    %3529 = vmatprep.subr.mxu0 0.0
    %v3530 = vand.u32 %v34, 4294901760
    %v3531 = vsub.f32 %v34, %v3530
    %v3532 = vand.u32 %v3531, 4294901760
    %3533 = vmatpush1.msra.mxu0 %v3532
    %3534 = vmatprep.subr.mxu0 0.0
    %v3535 = vand.u32 %v35, 4294901760
    %v3536 = vsub.f32 %v35, %v3535
    %v3537 = vand.u32 %v3536, 4294901760
    %3538 = vmatpush1.msra.mxu0 %v3537
    %3539 = vmatprep.subr.mxu0 0.0
    %v3540 = vand.u32 %v36, 4294901760
    %v3541 = vsub.f32 %v36, %v3540
    %v3542 = vand.u32 %v3541, 4294901760
    %3543 = vmatpush1.msra.mxu0 %v3542
    %3544 = vmatprep.subr.mxu0 0.0
    %v3545 = vand.u32 %v37, 4294901760
    %v3546 = vsub.f32 %v37, %v3545
    %v3547 = vand.u32 %v3546, 4294901760
    %3548 = vmatpush1.msra.mxu0 %v3547
    %3549 = vmatprep.subr.mxu0 0.0
    %v3550 = vand.u32 %v38, 4294901760
    %v3551 = vsub.f32 %v38, %v3550
    %v3552 = vand.u32 %v3551, 4294901760
    %3553 = vmatpush1.msra.mxu0 %v3552
    %3554 = vmatprep.subr.mxu0 0.0
    %v3555 = vand.u32 %v39, 4294901760
    %v3556 = vsub.f32 %v39, %v3555
    %v3557 = vand.u32 %v3556, 4294901760
    %3558 = vmatpush1.msra.mxu0 %v3557
    %3559 = vmatprep.subr.mxu0 0.0
    %v3560 = vand.u32 %v40, 4294901760
    %v3561 = vsub.f32 %v40, %v3560
    %v3562 = vand.u32 %v3561, 4294901760
    %3563 = vmatpush1.msra.mxu0 %v3562
    %3564 = vmatprep.subr.mxu0 0.0
    %v3565 = vand.u32 %v41, 4294901760
    %v3566 = vsub.f32 %v41, %v3565
    %v3567 = vand.u32 %v3566, 4294901760
    %3568 = vmatpush1.msra.mxu0 %v3567
    %3569 = vmatprep.subr.mxu0 0.0
    %v3570 = vand.u32 %v42, 4294901760
    %v3571 = vsub.f32 %v42, %v3570
    %v3572 = vand.u32 %v3571, 4294901760
    %3573 = vmatpush1.msra.mxu0 %v3572
    %3574 = vmatprep.subr.mxu0 0.0
    %v3575 = vand.u32 %v43, 4294901760
    %v3576 = vsub.f32 %v43, %v3575
    %v3577 = vand.u32 %v3576, 4294901760
    %3578 = vmatpush1.msra.mxu0 %v3577
    %3579 = vmatprep.subr.mxu0 0.0
    %v3580 = vand.u32 %v44, 4294901760
    %v3581 = vsub.f32 %v44, %v3580
    %v3582 = vand.u32 %v3581, 4294901760
    %3583 = vmatpush1.msra.mxu0 %v3582
    %3584 = vmatprep.subr.mxu0 0.0
    %v3585 = vand.u32 %v45, 4294901760
    %v3586 = vsub.f32 %v45, %v3585
    %v3587 = vand.u32 %v3586, 4294901760
    %3588 = vmatpush1.msra.mxu0 %v3587
    %3589 = vmatprep.subr.mxu0 0.0
    %v3590 = vand.u32 %v46, 4294901760
    %v3591 = vsub.f32 %v46, %v3590
    %v3592 = vand.u32 %v3591, 4294901760
    %3593 = vmatpush1.msra.mxu0 %v3592
    %3594 = vmatprep.subr.mxu0 0.0
    %v3595 = vand.u32 %v47, 4294901760
    %v3596 = vsub.f32 %v47, %v3595
    %v3597 = vand.u32 %v3596, 4294901760
    %3598 = vmatpush1.msra.mxu0 %v3597
    %3599 = vmatprep.subr.mxu0 0.0
    %v3600 = vand.u32 %v48, 4294901760
    %v3601 = vsub.f32 %v48, %v3600
    %v3602 = vand.u32 %v3601, 4294901760
    %3603 = vmatpush1.msra.mxu0 %v3602
    %3604 = vmatprep.subr.mxu0 0.0
    %v3605 = vand.u32 %v49, 4294901760
    %v3606 = vsub.f32 %v49, %v3605
    %v3607 = vand.u32 %v3606, 4294901760
    %3608 = vmatpush1.msra.mxu0 %v3607
    %3609 = vmatprep.subr.mxu0 0.0
    %v3610 = vand.u32 %v50, 4294901760
    %v3611 = vsub.f32 %v50, %v3610
    %v3612 = vand.u32 %v3611, 4294901760
    %3613 = vmatpush1.msra.mxu0 %v3612
    %3614 = vmatprep.subr.mxu0 0.0
    %v3615 = vand.u32 %v51, 4294901760
    %v3616 = vsub.f32 %v51, %v3615
    %v3617 = vand.u32 %v3616, 4294901760
    %3618 = vmatpush1.msra.mxu0 %v3617
    %3619 = vmatprep.subr.mxu0 0.0
    %v3620 = vand.u32 %v52, 4294901760
    %v3621 = vsub.f32 %v52, %v3620
    %v3622 = vand.u32 %v3621, 4294901760
    %3623 = vmatpush1.msra.mxu0 %v3622
    %3624 = vmatprep.subr.mxu0 0.0
    %v3625 = vand.u32 %v53, 4294901760
    %v3626 = vsub.f32 %v53, %v3625
    %v3627 = vand.u32 %v3626, 4294901760
    %3628 = vmatpush1.msra.mxu0 %v3627
    %v3629 = vand.u32 %v2866, 4294901760
    %3630 = vmatprep.mubr.f32.mxu0 %v3629
    %v3631 = vand.u32 %v2862, 4294901760
    %3632 = vmatmul.mubr.f32.gmra.mrb[0].mxu0 %v3631
    %v3633 = vpop.f32.mrb[0].mxu0
    %v3634 = vadd.f32 %v3466, %v3633
    %v3635 = vpop.f32.mrb[0].mxu0
    %3636 = vdwg.mxu0
    %3637 = vmatprep.subr.mxu0 0.0
    %v3638 = vand.u32 %v22, 4294901760
    %3639 = vmatpush1.msra.mxu0 %v3638
    %3640 = vmatprep.subr.mxu0 0.0
    %v3641 = vand.u32 %v23, 4294901760
    %3642 = vmatpush1.msra.mxu0 %v3641
    %3643 = vmatprep.subr.mxu0 0.0
    %v3644 = vand.u32 %v24, 4294901760
    %3645 = vmatpush1.msra.mxu0 %v3644
    %3646 = vmatprep.subr.mxu0 0.0
    %v3647 = vand.u32 %v25, 4294901760
    %3648 = vmatpush1.msra.mxu0 %v3647
    %3649 = vmatprep.subr.mxu0 0.0
    %v3650 = vand.u32 %v26, 4294901760
    %3651 = vmatpush1.msra.mxu0 %v3650
    %3652 = vmatprep.subr.mxu0 0.0
    %v3653 = vand.u32 %v27, 4294901760
    %3654 = vmatpush1.msra.mxu0 %v3653
    %3655 = vmatprep.subr.mxu0 0.0
    %v3656 = vand.u32 %v28, 4294901760
    %3657 = vmatpush1.msra.mxu0 %v3656
    %3658 = vmatprep.subr.mxu0 0.0
    %v3659 = vand.u32 %v29, 4294901760
    %3660 = vmatpush1.msra.mxu0 %v3659
    %3661 = vmatprep.subr.mxu0 0.0
    %v3662 = vand.u32 %v30, 4294901760
    %3663 = vmatpush1.msra.mxu0 %v3662
    %3664 = vmatprep.subr.mxu0 0.0
    %v3665 = vand.u32 %v31, 4294901760
    %3666 = vmatpush1.msra.mxu0 %v3665
    %3667 = vmatprep.subr.mxu0 0.0
    %v3668 = vand.u32 %v32, 4294901760
    %3669 = vmatpush1.msra.mxu0 %v3668
    %3670 = vmatprep.subr.mxu0 0.0
    %v3671 = vand.u32 %v33, 4294901760
    %3672 = vmatpush1.msra.mxu0 %v3671
    %3673 = vmatprep.subr.mxu0 0.0
    %v3674 = vand.u32 %v34, 4294901760
    %3675 = vmatpush1.msra.mxu0 %v3674
    %3676 = vmatprep.subr.mxu0 0.0
    %v3677 = vand.u32 %v35, 4294901760
    %3678 = vmatpush1.msra.mxu0 %v3677
    %3679 = vmatprep.subr.mxu0 0.0
    %v3680 = vand.u32 %v36, 4294901760
    %3681 = vmatpush1.msra.mxu0 %v3680
    %3682 = vmatprep.subr.mxu0 0.0
    %v3683 = vand.u32 %v37, 4294901760
    %3684 = vmatpush1.msra.mxu0 %v3683
    %3685 = vmatprep.subr.mxu0 0.0
    %v3686 = vand.u32 %v38, 4294901760
    %3687 = vmatpush1.msra.mxu0 %v3686
    %3688 = vmatprep.subr.mxu0 0.0
    %v3689 = vand.u32 %v39, 4294901760
    %3690 = vmatpush1.msra.mxu0 %v3689
    %3691 = vmatprep.subr.mxu0 0.0
    %v3692 = vand.u32 %v40, 4294901760
    %3693 = vmatpush1.msra.mxu0 %v3692
    %3694 = vmatprep.subr.mxu0 0.0
    %v3695 = vand.u32 %v41, 4294901760
    %3696 = vmatpush1.msra.mxu0 %v3695
    %3697 = vmatprep.subr.mxu0 0.0
    %v3698 = vand.u32 %v42, 4294901760
    %3699 = vmatpush1.msra.mxu0 %v3698
    %3700 = vmatprep.subr.mxu0 0.0
    %v3701 = vand.u32 %v43, 4294901760
    %3702 = vmatpush1.msra.mxu0 %v3701
    %3703 = vmatprep.subr.mxu0 0.0
    %v3704 = vand.u32 %v44, 4294901760
    %3705 = vmatpush1.msra.mxu0 %v3704
    %3706 = vmatprep.subr.mxu0 0.0
    %v3707 = vand.u32 %v45, 4294901760
    %3708 = vmatpush1.msra.mxu0 %v3707
    %3709 = vmatprep.subr.mxu0 0.0
    %v3710 = vand.u32 %v46, 4294901760
    %3711 = vmatpush1.msra.mxu0 %v3710
    %3712 = vmatprep.subr.mxu0 0.0
    %v3713 = vand.u32 %v47, 4294901760
    %3714 = vmatpush1.msra.mxu0 %v3713
    %3715 = vmatprep.subr.mxu0 0.0
    %v3716 = vand.u32 %v48, 4294901760
    %3717 = vmatpush1.msra.mxu0 %v3716
    %3718 = vmatprep.subr.mxu0 0.0
    %v3719 = vand.u32 %v49, 4294901760
    %3720 = vmatpush1.msra.mxu0 %v3719
    %3721 = vmatprep.subr.mxu0 0.0
    %v3722 = vand.u32 %v50, 4294901760
    %3723 = vmatpush1.msra.mxu0 %v3722
    %3724 = vmatprep.subr.mxu0 0.0
    %v3725 = vand.u32 %v51, 4294901760
    %3726 = vmatpush1.msra.mxu0 %v3725
    %3727 = vmatprep.subr.mxu0 0.0
    %v3728 = vand.u32 %v52, 4294901760
    %3729 = vmatpush1.msra.mxu0 %v3728
    %3730 = vmatprep.subr.mxu0 0.0
    %v3731 = vand.u32 %v53, 4294901760
    %3732 = vmatpush1.msra.mxu0 %v3731
    %v3733 = vand.u32 %v2866, 4294901760
    %3734 = vmatprep.mubr.f32.mxu0 %v3733
    %v3735 = vand.u32 %v2862, 4294901760
    %3736 = vmatmul.mubr.f32.gmra.mrb[0].mxu0 %v3735
    %v3737 = vpop.f32.mrb[0].mxu0
    %v3738 = vadd.f32 %v3634, %v3737
    %v3739 = vpop.f32.mrb[0].mxu0
    %3740 = vdwg.mxu0
    %3741 = vmatprep.subr.mxu0 0.0
    %v3742 = vand.u32 %v54, 4294901760
    %3743 = vmatpush1.msra.mxu0 %v3742
    %3744 = vmatprep.subr.mxu0 0.0
    %v3745 = vand.u32 %v55, 4294901760
    %3746 = vmatpush1.msra.mxu0 %v3745
    %3747 = vmatprep.subr.mxu0 0.0
    %v3748 = vand.u32 %v56, 4294901760
    %3749 = vmatpush1.msra.mxu0 %v3748
    %3750 = vmatprep.subr.mxu0 0.0
    %v3751 = vand.u32 %v57, 4294901760
    %3752 = vmatpush1.msra.mxu0 %v3751
    %3753 = vmatprep.subr.mxu0 0.0
    %v3754 = vand.u32 %v58, 4294901760
    %3755 = vmatpush1.msra.mxu0 %v3754
    %3756 = vmatprep.subr.mxu0 0.0
    %v3757 = vand.u32 %v59, 4294901760
    %3758 = vmatpush1.msra.mxu0 %v3757
    %3759 = vmatprep.subr.mxu0 0.0
    %v3760 = vand.u32 %v60, 4294901760
    %3761 = vmatpush1.msra.mxu0 %v3760
    %3762 = vmatprep.subr.mxu0 0.0
    %v3763 = vand.u32 %v61, 4294901760
    %3764 = vmatpush1.msra.mxu0 %v3763
    %3765 = vmatprep.subr.mxu0 0.0
    %v3766 = vand.u32 %v62, 4294901760
    %3767 = vmatpush1.msra.mxu0 %v3766
    %3768 = vmatprep.subr.mxu0 0.0
    %v3769 = vand.u32 %v63, 4294901760
    %3770 = vmatpush1.msra.mxu0 %v3769
    %3771 = vmatprep.subr.mxu0 0.0
    %v3772 = vand.u32 %v64, 4294901760
    %3773 = vmatpush1.msra.mxu0 %v3772
    %3774 = vmatprep.subr.mxu0 0.0
    %v3775 = vand.u32 %v65, 4294901760
    %3776 = vmatpush1.msra.mxu0 %v3775
    %3777 = vmatprep.subr.mxu0 0.0
    %v3778 = vand.u32 %v66, 4294901760
    %3779 = vmatpush1.msra.mxu0 %v3778
    %3780 = vmatprep.subr.mxu0 0.0
    %v3781 = vand.u32 %v67, 4294901760
    %3782 = vmatpush1.msra.mxu0 %v3781
    %3783 = vmatprep.subr.mxu0 0.0
    %v3784 = vand.u32 %v68, 4294901760
    %3785 = vmatpush1.msra.mxu0 %v3784
    %3786 = vmatprep.subr.mxu0 0.0
    %v3787 = vand.u32 %v69, 4294901760
    %3788 = vmatpush1.msra.mxu0 %v3787
    %3789 = vmatprep.subr.mxu0 0.0
    %v3790 = vand.u32 %v70, 4294901760
    %3791 = vmatpush1.msra.mxu0 %v3790
    %3792 = vmatprep.subr.mxu0 0.0
    %v3793 = vand.u32 %v71, 4294901760
    %3794 = vmatpush1.msra.mxu0 %v3793
    %3795 = vmatprep.subr.mxu0 0.0
    %v3796 = vand.u32 %v72, 4294901760
    %3797 = vmatpush1.msra.mxu0 %v3796
    %3798 = vmatprep.subr.mxu0 0.0
    %v3799 = vand.u32 %v73, 4294901760
    %3800 = vmatpush1.msra.mxu0 %v3799
    %3801 = vmatprep.subr.mxu0 0.0
    %v3802 = vand.u32 %v74, 4294901760
    %3803 = vmatpush1.msra.mxu0 %v3802
    %3804 = vmatprep.subr.mxu0 0.0
    %v3805 = vand.u32 %v75, 4294901760
    %3806 = vmatpush1.msra.mxu0 %v3805
    %3807 = vmatprep.subr.mxu0 0.0
    %v3808 = vand.u32 %v76, 4294901760
    %3809 = vmatpush1.msra.mxu0 %v3808
    %3810 = vmatprep.subr.mxu0 0.0
    %v3811 = vand.u32 %v77, 4294901760
    %3812 = vmatpush1.msra.mxu0 %v3811
    %3813 = vmatprep.subr.mxu0 0.0
    %v3814 = vand.u32 %v78, 4294901760
    %3815 = vmatpush1.msra.mxu0 %v3814
    %3816 = vmatprep.subr.mxu0 0.0
    %v3817 = vand.u32 %v79, 4294901760
    %3818 = vmatpush1.msra.mxu0 %v3817
    %3819 = vmatprep.subr.mxu0 0.0
    %v3820 = vand.u32 %v80, 4294901760
    %3821 = vmatpush1.msra.mxu0 %v3820
    %3822 = vmatprep.subr.mxu0 0.0
    %v3823 = vand.u32 %v81, 4294901760
    %3824 = vmatpush1.msra.mxu0 %v3823
    %3825 = vmatprep.subr.mxu0 0.0
    %v3826 = vand.u32 %v82, 4294901760
    %3827 = vmatpush1.msra.mxu0 %v3826
    %3828 = vmatprep.subr.mxu0 0.0
    %v3829 = vand.u32 %v83, 4294901760
    %3830 = vmatpush1.msra.mxu0 %v3829
    %3831 = vmatprep.subr.mxu0 0.0
    %v3832 = vand.u32 %v84, 4294901760
    %3833 = vmatpush1.msra.mxu0 %v3832
    %3834 = vmatprep.subr.mxu0 0.0
    %v3835 = vand.u32 %v85, 4294901760
    %3836 = vmatpush1.msra.mxu0 %v3835
    %v3837 = vand.u32 %v2874, 4294901760
    %v3838 = vsub.f32 %v2874, %v3837
    %v3839 = vand.u32 %v3838, 4294901760
    %v3840 = vsub.f32 %v3838, %v3839
    %v3841 = vand.u32 %v3840, 4294901760
    %3842 = vmatprep.mubr.f32.mxu0 %v3841
    %v3843 = vand.u32 %v2870, 4294901760
    %v3844 = vsub.f32 %v2870, %v3843
    %v3845 = vand.u32 %v3844, 4294901760
    %v3846 = vsub.f32 %v3844, %v3845
    %v3847 = vand.u32 %v3846, 4294901760
    %3848 = vmatmul.mubr.f32.gmra.mrb[0].mxu0 %v3847
    %v3849 = vpop.f32.mrb[0].mxu0
    %v3850 = vadd.f32 %v3738, %v3849
    %v3851 = vpop.f32.mrb[0].mxu0
    %3852 = vdwg.mxu0
    %3853 = vmatprep.subr.mxu0 0.0
    %v3854 = vand.u32 %v54, 4294901760
    %v3855 = vsub.f32 %v54, %v3854
    %v3856 = vand.u32 %v3855, 4294901760
    %v3857 = vsub.f32 %v3855, %v3856
    %v3858 = vand.u32 %v3857, 4294901760
    %3859 = vmatpush1.msra.mxu0 %v3858
    %3860 = vmatprep.subr.mxu0 0.0
    %v3861 = vand.u32 %v55, 4294901760
    %v3862 = vsub.f32 %v55, %v3861
    %v3863 = vand.u32 %v3862, 4294901760
    %v3864 = vsub.f32 %v3862, %v3863
    %v3865 = vand.u32 %v3864, 4294901760
    %3866 = vmatpush1.msra.mxu0 %v3865
    %3867 = vmatprep.subr.mxu0 0.0
    %v3868 = vand.u32 %v56, 4294901760
    %v3869 = vsub.f32 %v56, %v3868
    %v3870 = vand.u32 %v3869, 4294901760
    %v3871 = vsub.f32 %v3869, %v3870
    %v3872 = vand.u32 %v3871, 4294901760
    %3873 = vmatpush1.msra.mxu0 %v3872
    %3874 = vmatprep.subr.mxu0 0.0
    %v3875 = vand.u32 %v57, 4294901760
    %v3876 = vsub.f32 %v57, %v3875
    %v3877 = vand.u32 %v3876, 4294901760
    %v3878 = vsub.f32 %v3876, %v3877
    %v3879 = vand.u32 %v3878, 4294901760
    %3880 = vmatpush1.msra.mxu0 %v3879
    %3881 = vmatprep.subr.mxu0 0.0
    %v3882 = vand.u32 %v58, 4294901760
    %v3883 = vsub.f32 %v58, %v3882
    %v3884 = vand.u32 %v3883, 4294901760
    %v3885 = vsub.f32 %v3883, %v3884
    %v3886 = vand.u32 %v3885, 4294901760
    %3887 = vmatpush1.msra.mxu0 %v3886
    %3888 = vmatprep.subr.mxu0 0.0
    %v3889 = vand.u32 %v59, 4294901760
    %v3890 = vsub.f32 %v59, %v3889
    %v3891 = vand.u32 %v3890, 4294901760
    %v3892 = vsub.f32 %v3890, %v3891
    %v3893 = vand.u32 %v3892, 4294901760
    %3894 = vmatpush1.msra.mxu0 %v3893
    %3895 = vmatprep.subr.mxu0 0.0
    %v3896 = vand.u32 %v60, 4294901760
    %v3897 = vsub.f32 %v60, %v3896
    %v3898 = vand.u32 %v3897, 4294901760
    %v3899 = vsub.f32 %v3897, %v3898
    %v3900 = vand.u32 %v3899, 4294901760
    %3901 = vmatpush1.msra.mxu0 %v3900
    %3902 = vmatprep.subr.mxu0 0.0
    %v3903 = vand.u32 %v61, 4294901760
    %v3904 = vsub.f32 %v61, %v3903
    %v3905 = vand.u32 %v3904, 4294901760
    %v3906 = vsub.f32 %v3904, %v3905
    %v3907 = vand.u32 %v3906, 4294901760
    %3908 = vmatpush1.msra.mxu0 %v3907
    %3909 = vmatprep.subr.mxu0 0.0
    %v3910 = vand.u32 %v62, 4294901760
    %v3911 = vsub.f32 %v62, %v3910
    %v3912 = vand.u32 %v3911, 4294901760
    %v3913 = vsub.f32 %v3911, %v3912
    %v3914 = vand.u32 %v3913, 4294901760
    %3915 = vmatpush1.msra.mxu0 %v3914
    %3916 = vmatprep.subr.mxu0 0.0
    %v3917 = vand.u32 %v63, 4294901760
    %v3918 = vsub.f32 %v63, %v3917
    %v3919 = vand.u32 %v3918, 4294901760
    %v3920 = vsub.f32 %v3918, %v3919
    %v3921 = vand.u32 %v3920, 4294901760
    %3922 = vmatpush1.msra.mxu0 %v3921
    %3923 = vmatprep.subr.mxu0 0.0
    %v3924 = vand.u32 %v64, 4294901760
    %v3925 = vsub.f32 %v64, %v3924
    %v3926 = vand.u32 %v3925, 4294901760
    %v3927 = vsub.f32 %v3925, %v3926
    %v3928 = vand.u32 %v3927, 4294901760
    %3929 = vmatpush1.msra.mxu0 %v3928
    %3930 = vmatprep.subr.mxu0 0.0
    %v3931 = vand.u32 %v65, 4294901760
    %v3932 = vsub.f32 %v65, %v3931
    %v3933 = vand.u32 %v3932, 4294901760
    %v3934 = vsub.f32 %v3932, %v3933
    %v3935 = vand.u32 %v3934, 4294901760
    %3936 = vmatpush1.msra.mxu0 %v3935
    %3937 = vmatprep.subr.mxu0 0.0
    %v3938 = vand.u32 %v66, 4294901760
    %v3939 = vsub.f32 %v66, %v3938
    %v3940 = vand.u32 %v3939, 4294901760
    %v3941 = vsub.f32 %v3939, %v3940
    %v3942 = vand.u32 %v3941, 4294901760
    %3943 = vmatpush1.msra.mxu0 %v3942
    %3944 = vmatprep.subr.mxu0 0.0
    %v3945 = vand.u32 %v67, 4294901760
    %v3946 = vsub.f32 %v67, %v3945
    %v3947 = vand.u32 %v3946, 4294901760
    %v3948 = vsub.f32 %v3946, %v3947
    %v3949 = vand.u32 %v3948, 4294901760
    %3950 = vmatpush1.msra.mxu0 %v3949
    %3951 = vmatprep.subr.mxu0 0.0
    %v3952 = vand.u32 %v68, 4294901760
    %v3953 = vsub.f32 %v68, %v3952
    %v3954 = vand.u32 %v3953, 4294901760
    %v3955 = vsub.f32 %v3953, %v3954
    %v3956 = vand.u32 %v3955, 4294901760
    %3957 = vmatpush1.msra.mxu0 %v3956
    %3958 = vmatprep.subr.mxu0 0.0
    %v3959 = vand.u32 %v69, 4294901760
    %v3960 = vsub.f32 %v69, %v3959
    %v3961 = vand.u32 %v3960, 4294901760
    %v3962 = vsub.f32 %v3960, %v3961
    %v3963 = vand.u32 %v3962, 4294901760
    %3964 = vmatpush1.msra.mxu0 %v3963
    %3965 = vmatprep.subr.mxu0 0.0
    %v3966 = vand.u32 %v70, 4294901760
    %v3967 = vsub.f32 %v70, %v3966
    %v3968 = vand.u32 %v3967, 4294901760
    %v3969 = vsub.f32 %v3967, %v3968
    %v3970 = vand.u32 %v3969, 4294901760
    %3971 = vmatpush1.msra.mxu0 %v3970
    %3972 = vmatprep.subr.mxu0 0.0
    %v3973 = vand.u32 %v71, 4294901760
    %v3974 = vsub.f32 %v71, %v3973
    %v3975 = vand.u32 %v3974, 4294901760
    %v3976 = vsub.f32 %v3974, %v3975
    %v3977 = vand.u32 %v3976, 4294901760
    %3978 = vmatpush1.msra.mxu0 %v3977
    %3979 = vmatprep.subr.mxu0 0.0
    %v3980 = vand.u32 %v72, 4294901760
    %v3981 = vsub.f32 %v72, %v3980
    %v3982 = vand.u32 %v3981, 4294901760
    %v3983 = vsub.f32 %v3981, %v3982
    %v3984 = vand.u32 %v3983, 4294901760
    %3985 = vmatpush1.msra.mxu0 %v3984
    %3986 = vmatprep.subr.mxu0 0.0
    %v3987 = vand.u32 %v73, 4294901760
    %v3988 = vsub.f32 %v73, %v3987
    %v3989 = vand.u32 %v3988, 4294901760
    %v3990 = vsub.f32 %v3988, %v3989
    %v3991 = vand.u32 %v3990, 4294901760
    %3992 = vmatpush1.msra.mxu0 %v3991
    %3993 = vmatprep.subr.mxu0 0.0
    %v3994 = vand.u32 %v74, 4294901760
    %v3995 = vsub.f32 %v74, %v3994
    %v3996 = vand.u32 %v3995, 4294901760
    %v3997 = vsub.f32 %v3995, %v3996
    %v3998 = vand.u32 %v3997, 4294901760
    %3999 = vmatpush1.msra.mxu0 %v3998
    %4000 = vmatprep.subr.mxu0 0.0
    %v4001 = vand.u32 %v75, 4294901760
    %v4002 = vsub.f32 %v75, %v4001
    %v4003 = vand.u32 %v4002, 4294901760
    %v4004 = vsub.f32 %v4002, %v4003
    %v4005 = vand.u32 %v4004, 4294901760
    %4006 = vmatpush1.msra.mxu0 %v4005
    %4007 = vmatprep.subr.mxu0 0.0
    %v4008 = vand.u32 %v76, 4294901760
    %v4009 = vsub.f32 %v76, %v4008
    %v4010 = vand.u32 %v4009, 4294901760
    %v4011 = vsub.f32 %v4009, %v4010
    %v4012 = vand.u32 %v4011, 4294901760
    %4013 = vmatpush1.msra.mxu0 %v4012
    %4014 = vmatprep.subr.mxu0 0.0
    %v4015 = vand.u32 %v77, 4294901760
    %v4016 = vsub.f32 %v77, %v4015
    %v4017 = vand.u32 %v4016, 4294901760
    %v4018 = vsub.f32 %v4016, %v4017
    %v4019 = vand.u32 %v4018, 4294901760
    %4020 = vmatpush1.msra.mxu0 %v4019
    %4021 = vmatprep.subr.mxu0 0.0
    %v4022 = vand.u32 %v78, 4294901760
    %v4023 = vsub.f32 %v78, %v4022
    %v4024 = vand.u32 %v4023, 4294901760
    %v4025 = vsub.f32 %v4023, %v4024
    %v4026 = vand.u32 %v4025, 4294901760
    %4027 = vmatpush1.msra.mxu0 %v4026
    %4028 = vmatprep.subr.mxu0 0.0
    %v4029 = vand.u32 %v79, 4294901760
    %v4030 = vsub.f32 %v79, %v4029
    %v4031 = vand.u32 %v4030, 4294901760
    %v4032 = vsub.f32 %v4030, %v4031
    %v4033 = vand.u32 %v4032, 4294901760
    %4034 = vmatpush1.msra.mxu0 %v4033
    %4035 = vmatprep.subr.mxu0 0.0
    %v4036 = vand.u32 %v80, 4294901760
    %v4037 = vsub.f32 %v80, %v4036
    %v4038 = vand.u32 %v4037, 4294901760
    %v4039 = vsub.f32 %v4037, %v4038
    %v4040 = vand.u32 %v4039, 4294901760
    %4041 = vmatpush1.msra.mxu0 %v4040
    %4042 = vmatprep.subr.mxu0 0.0
    %v4043 = vand.u32 %v81, 4294901760
    %v4044 = vsub.f32 %v81, %v4043
    %v4045 = vand.u32 %v4044, 4294901760
    %v4046 = vsub.f32 %v4044, %v4045
    %v4047 = vand.u32 %v4046, 4294901760
    %4048 = vmatpush1.msra.mxu0 %v4047
    %4049 = vmatprep.subr.mxu0 0.0
    %v4050 = vand.u32 %v82, 4294901760
    %v4051 = vsub.f32 %v82, %v4050
    %v4052 = vand.u32 %v4051, 4294901760
    %v4053 = vsub.f32 %v4051, %v4052
    %v4054 = vand.u32 %v4053, 4294901760
    %4055 = vmatpush1.msra.mxu0 %v4054
    %4056 = vmatprep.subr.mxu0 0.0
    %v4057 = vand.u32 %v83, 4294901760
    %v4058 = vsub.f32 %v83, %v4057
    %v4059 = vand.u32 %v4058, 4294901760
    %v4060 = vsub.f32 %v4058, %v4059
    %v4061 = vand.u32 %v4060, 4294901760
    %4062 = vmatpush1.msra.mxu0 %v4061
    %4063 = vmatprep.subr.mxu0 0.0
    %v4064 = vand.u32 %v84, 4294901760
    %v4065 = vsub.f32 %v84, %v4064
    %v4066 = vand.u32 %v4065, 4294901760
    %v4067 = vsub.f32 %v4065, %v4066
    %v4068 = vand.u32 %v4067, 4294901760
    %4069 = vmatpush1.msra.mxu0 %v4068
    %4070 = vmatprep.subr.mxu0 0.0
    %v4071 = vand.u32 %v85, 4294901760
    %v4072 = vsub.f32 %v85, %v4071
    %v4073 = vand.u32 %v4072, 4294901760
    %v4074 = vsub.f32 %v4072, %v4073
    %v4075 = vand.u32 %v4074, 4294901760
    %4076 = vmatpush1.msra.mxu0 %v4075
    %v4077 = vand.u32 %v2874, 4294901760
    %4078 = vmatprep.mubr.f32.mxu0 %v4077
    %v4079 = vand.u32 %v2870, 4294901760
    %4080 = vmatmul.mubr.f32.gmra.mrb[0].mxu0 %v4079
    %v4081 = vpop.f32.mrb[0].mxu0
    %v4082 = vadd.f32 %v3850, %v4081
    %v4083 = vpop.f32.mrb[0].mxu0
    %4084 = vdwg.mxu0
    %4085 = vmatprep.subr.mxu0 0.0
    %v4086 = vand.u32 %v54, 4294901760
    %v4087 = vsub.f32 %v54, %v4086
    %4088 = vmatpush1.msra.mxu0 %v4087
    %4089 = vmatprep.subr.mxu0 0.0
    %v4090 = vand.u32 %v55, 4294901760
    %v4091 = vsub.f32 %v55, %v4090
    %4092 = vmatpush1.msra.mxu0 %v4091
    %4093 = vmatprep.subr.mxu0 0.0
    %v4094 = vand.u32 %v56, 4294901760
    %v4095 = vsub.f32 %v56, %v4094
    %4096 = vmatpush1.msra.mxu0 %v4095
    %4097 = vmatprep.subr.mxu0 0.0
    %v4098 = vand.u32 %v57, 4294901760
    %v4099 = vsub.f32 %v57, %v4098
    %4100 = vmatpush1.msra.mxu0 %v4099
    %4101 = vmatprep.subr.mxu0 0.0
    %v4102 = vand.u32 %v58, 4294901760
    %v4103 = vsub.f32 %v58, %v4102
    %4104 = vmatpush1.msra.mxu0 %v4103
    %4105 = vmatprep.subr.mxu0 0.0
    %v4106 = vand.u32 %v59, 4294901760
    %v4107 = vsub.f32 %v59, %v4106
    %4108 = vmatpush1.msra.mxu0 %v4107
    %4109 = vmatprep.subr.mxu0 0.0
    %v4110 = vand.u32 %v60, 4294901760
    %v4111 = vsub.f32 %v60, %v4110
    %4112 = vmatpush1.msra.mxu0 %v4111
    %4113 = vmatprep.subr.mxu0 0.0
    %v4114 = vand.u32 %v61, 4294901760
    %v4115 = vsub.f32 %v61, %v4114
    %4116 = vmatpush1.msra.mxu0 %v4115
    %4117 = vmatprep.subr.mxu0 0.0
    %v4118 = vand.u32 %v62, 4294901760
    %v4119 = vsub.f32 %v62, %v4118
    %4120 = vmatpush1.msra.mxu0 %v4119
    %4121 = vmatprep.subr.mxu0 0.0
    %v4122 = vand.u32 %v63, 4294901760
    %v4123 = vsub.f32 %v63, %v4122
    %4124 = vmatpush1.msra.mxu0 %v4123
    %4125 = vmatprep.subr.mxu0 0.0
    %v4126 = vand.u32 %v64, 4294901760
    %v4127 = vsub.f32 %v64, %v4126
    %4128 = vmatpush1.msra.mxu0 %v4127
    %4129 = vmatprep.subr.mxu0 0.0
    %v4130 = vand.u32 %v65, 4294901760
    %v4131 = vsub.f32 %v65, %v4130
    %4132 = vmatpush1.msra.mxu0 %v4131
    %4133 = vmatprep.subr.mxu0 0.0
    %v4134 = vand.u32 %v66, 4294901760
    %v4135 = vsub.f32 %v66, %v4134
    %4136 = vmatpush1.msra.mxu0 %v4135
    %4137 = vmatprep.subr.mxu0 0.0
    %v4138 = vand.u32 %v67, 4294901760
    %v4139 = vsub.f32 %v67, %v4138
    %4140 = vmatpush1.msra.mxu0 %v4139
    %4141 = vmatprep.subr.mxu0 0.0
    %v4142 = vand.u32 %v68, 4294901760
    %v4143 = vsub.f32 %v68, %v4142
    %4144 = vmatpush1.msra.mxu0 %v4143
    %4145 = vmatprep.subr.mxu0 0.0
    %v4146 = vand.u32 %v69, 4294901760
    %v4147 = vsub.f32 %v69, %v4146
    %4148 = vmatpush1.msra.mxu0 %v4147
    %4149 = vmatprep.subr.mxu0 0.0
    %v4150 = vand.u32 %v70, 4294901760
    %v4151 = vsub.f32 %v70, %v4150
    %4152 = vmatpush1.msra.mxu0 %v4151
    %4153 = vmatprep.subr.mxu0 0.0
    %v4154 = vand.u32 %v71, 4294901760
    %v4155 = vsub.f32 %v71, %v4154
    %4156 = vmatpush1.msra.mxu0 %v4155
    %4157 = vmatprep.subr.mxu0 0.0
    %v4158 = vand.u32 %v72, 4294901760
    %v4159 = vsub.f32 %v72, %v4158
    %4160 = vmatpush1.msra.mxu0 %v4159
    %4161 = vmatprep.subr.mxu0 0.0
    %v4162 = vand.u32 %v73, 4294901760
    %v4163 = vsub.f32 %v73, %v4162
    %4164 = vmatpush1.msra.mxu0 %v4163
    %4165 = vmatprep.subr.mxu0 0.0
    %v4166 = vand.u32 %v74, 4294901760
    %v4167 = vsub.f32 %v74, %v4166
    %4168 = vmatpush1.msra.mxu0 %v4167
    %4169 = vmatprep.subr.mxu0 0.0
    %v4170 = vand.u32 %v75, 4294901760
    %v4171 = vsub.f32 %v75, %v4170
    %4172 = vmatpush1.msra.mxu0 %v4171
    %4173 = vmatprep.subr.mxu0 0.0
    %v4174 = vand.u32 %v76, 4294901760
    %v4175 = vsub.f32 %v76, %v4174
    %4176 = vmatpush1.msra.mxu0 %v4175
    %4177 = vmatprep.subr.mxu0 0.0
    %v4178 = vand.u32 %v77, 4294901760
    %v4179 = vsub.f32 %v77, %v4178
    %4180 = vmatpush1.msra.mxu0 %v4179
    %4181 = vmatprep.subr.mxu0 0.0
    %v4182 = vand.u32 %v78, 4294901760
    %v4183 = vsub.f32 %v78, %v4182
    %4184 = vmatpush1.msra.mxu0 %v4183
    %4185 = vmatprep.subr.mxu0 0.0
    %v4186 = vand.u32 %v79, 4294901760
    %v4187 = vsub.f32 %v79, %v4186
    %4188 = vmatpush1.msra.mxu0 %v4187
    %4189 = vmatprep.subr.mxu0 0.0
    %v4190 = vand.u32 %v80, 4294901760
    %v4191 = vsub.f32 %v80, %v4190
    %4192 = vmatpush1.msra.mxu0 %v4191
    %4193 = vmatprep.subr.mxu0 0.0
    %v4194 = vand.u32 %v81, 4294901760
    %v4195 = vsub.f32 %v81, %v4194
    %4196 = vmatpush1.msra.mxu0 %v4195
    %4197 = vmatprep.subr.mxu0 0.0
    %v4198 = vand.u32 %v82, 4294901760
    %v4199 = vsub.f32 %v82, %v4198
    %4200 = vmatpush1.msra.mxu0 %v4199
    %4201 = vmatprep.subr.mxu0 0.0
    %v4202 = vand.u32 %v83, 4294901760
    %v4203 = vsub.f32 %v83, %v4202
    %4204 = vmatpush1.msra.mxu0 %v4203
    %4205 = vmatprep.subr.mxu0 0.0
    %v4206 = vand.u32 %v84, 4294901760
    %v4207 = vsub.f32 %v84, %v4206
    %4208 = vmatpush1.msra.mxu0 %v4207
    %4209 = vmatprep.subr.mxu0 0.0
    %v4210 = vand.u32 %v85, 4294901760
    %v4211 = vsub.f32 %v85, %v4210
    %4212 = vmatpush1.msra.mxu0 %v4211
    %v4213 = vand.u32 %v2874, 4294901760
    %v4214 = vsub.f32 %v2874, %v4213
    %4215 = vmatprep.mubr.f32.mxu0 %v4214
    %v4216 = vand.u32 %v2870, 4294901760
    %v4217 = vsub.f32 %v2870, %v4216
    %4218 = vmatmul.mubr.f32.gmra.mrb[0].mxu0 %v4217
    %v4219 = vpop.f32.mrb[0].mxu0
    %v4220 = vadd.f32 %v4082, %v4219
    %v4221 = vpop.f32.mrb[0].mxu0
    %4222 = vdwg.mxu0
    %4223 = vmatprep.subr.mxu0 0.0
    %v4224 = vand.u32 %v54, 4294901760
    %4225 = vmatpush1.msra.mxu0 %v4224
    %4226 = vmatprep.subr.mxu0 0.0
    %v4227 = vand.u32 %v55, 4294901760
    %4228 = vmatpush1.msra.mxu0 %v4227
    %4229 = vmatprep.subr.mxu0 0.0
    %v4230 = vand.u32 %v56, 4294901760
    %4231 = vmatpush1.msra.mxu0 %v4230
    %4232 = vmatprep.subr.mxu0 0.0
    %v4233 = vand.u32 %v57, 4294901760
    %4234 = vmatpush1.msra.mxu0 %v4233
    %4235 = vmatprep.subr.mxu0 0.0
    %v4236 = vand.u32 %v58, 4294901760
    %4237 = vmatpush1.msra.mxu0 %v4236
    %4238 = vmatprep.subr.mxu0 0.0
    %v4239 = vand.u32 %v59, 4294901760
    %4240 = vmatpush1.msra.mxu0 %v4239
    %4241 = vmatprep.subr.mxu0 0.0
    %v4242 = vand.u32 %v60, 4294901760
    %4243 = vmatpush1.msra.mxu0 %v4242
    %4244 = vmatprep.subr.mxu0 0.0
    %v4245 = vand.u32 %v61, 4294901760
    %4246 = vmatpush1.msra.mxu0 %v4245
    %4247 = vmatprep.subr.mxu0 0.0
    %v4248 = vand.u32 %v62, 4294901760
    %4249 = vmatpush1.msra.mxu0 %v4248
    %4250 = vmatprep.subr.mxu0 0.0
    %v4251 = vand.u32 %v63, 4294901760
    %4252 = vmatpush1.msra.mxu0 %v4251
    %4253 = vmatprep.subr.mxu0 0.0
    %v4254 = vand.u32 %v64, 4294901760
    %4255 = vmatpush1.msra.mxu0 %v4254
    %4256 = vmatprep.subr.mxu0 0.0
    %v4257 = vand.u32 %v65, 4294901760
    %4258 = vmatpush1.msra.mxu0 %v4257
    %4259 = vmatprep.subr.mxu0 0.0
    %v4260 = vand.u32 %v66, 4294901760
    %4261 = vmatpush1.msra.mxu0 %v4260
    %4262 = vmatprep.subr.mxu0 0.0
    %v4263 = vand.u32 %v67, 4294901760
    %4264 = vmatpush1.msra.mxu0 %v4263
    %4265 = vmatprep.subr.mxu0 0.0
    %v4266 = vand.u32 %v68, 4294901760
    %4267 = vmatpush1.msra.mxu0 %v4266
    %4268 = vmatprep.subr.mxu0 0.0
    %v4269 = vand.u32 %v69, 4294901760
    %4270 = vmatpush1.msra.mxu0 %v4269
    %4271 = vmatprep.subr.mxu0 0.0
    %v4272 = vand.u32 %v70, 4294901760
    %4273 = vmatpush1.msra.mxu0 %v4272
    %4274 = vmatprep.subr.mxu0 0.0
    %v4275 = vand.u32 %v71, 4294901760
    %4276 = vmatpush1.msra.mxu0 %v4275
    %4277 = vmatprep.subr.mxu0 0.0
    %v4278 = vand.u32 %v72, 4294901760
    %4279 = vmatpush1.msra.mxu0 %v4278
    %4280 = vmatprep.subr.mxu0 0.0
    %v4281 = vand.u32 %v73, 4294901760
    %4282 = vmatpush1.msra.mxu0 %v4281
    %4283 = vmatprep.subr.mxu0 0.0
    %v4284 = vand.u32 %v74, 4294901760
    %4285 = vmatpush1.msra.mxu0 %v4284
    %4286 = vmatprep.subr.mxu0 0.0
    %v4287 = vand.u32 %v75, 4294901760
    %4288 = vmatpush1.msra.mxu0 %v4287
    %4289 = vmatprep.subr.mxu0 0.0
    %v4290 = vand.u32 %v76, 4294901760
    %4291 = vmatpush1.msra.mxu0 %v4290
    %4292 = vmatprep.subr.mxu0 0.0
    %v4293 = vand.u32 %v77, 4294901760
    %4294 = vmatpush1.msra.mxu0 %v4293
    %4295 = vmatprep.subr.mxu0 0.0
    %v4296 = vand.u32 %v78, 4294901760
    %4297 = vmatpush1.msra.mxu0 %v4296
    %4298 = vmatprep.subr.mxu0 0.0
    %v4299 = vand.u32 %v79, 4294901760
    %4300 = vmatpush1.msra.mxu0 %v4299
    %4301 = vmatprep.subr.mxu0 0.0
    %v4302 = vand.u32 %v80, 4294901760
    %4303 = vmatpush1.msra.mxu0 %v4302
    %4304 = vmatprep.subr.mxu0 0.0
    %v4305 = vand.u32 %v81, 4294901760
    %4306 = vmatpush1.msra.mxu0 %v4305
    %4307 = vmatprep.subr.mxu0 0.0
    %v4308 = vand.u32 %v82, 4294901760
    %4309 = vmatpush1.msra.mxu0 %v4308
    %4310 = vmatprep.subr.mxu0 0.0
    %v4311 = vand.u32 %v83, 4294901760
    %4312 = vmatpush1.msra.mxu0 %v4311
    %4313 = vmatprep.subr.mxu0 0.0
    %v4314 = vand.u32 %v84, 4294901760
    %4315 = vmatpush1.msra.mxu0 %v4314
    %4316 = vmatprep.subr.mxu0 0.0
    %v4317 = vand.u32 %v85, 4294901760
    %4318 = vmatpush1.msra.mxu0 %v4317
    %v4319 = vand.u32 %v2874, 4294901760
    %v4320 = vsub.f32 %v2874, %v4319
    %v4321 = vand.u32 %v4320, 4294901760
    %4322 = vmatprep.mubr.f32.mxu0 %v4321
    %v4323 = vand.u32 %v2870, 4294901760
    %v4324 = vsub.f32 %v2870, %v4323
    %v4325 = vand.u32 %v4324, 4294901760
    %4326 = vmatmul.mubr.f32.gmra.mrb[0].mxu0 %v4325
    %v4327 = vpop.f32.mrb[0].mxu0
    %v4328 = vadd.f32 %v4220, %v4327
    %v4329 = vpop.f32.mrb[0].mxu0
    %4330 = vdwg.mxu0
    %4331 = vmatprep.subr.mxu0 0.0
    %v4332 = vand.u32 %v54, 4294901760
    %v4333 = vsub.f32 %v54, %v4332
    %v4334 = vand.u32 %v4333, 4294901760
    %4335 = vmatpush1.msra.mxu0 %v4334
    %4336 = vmatprep.subr.mxu0 0.0
    %v4337 = vand.u32 %v55, 4294901760
    %v4338 = vsub.f32 %v55, %v4337
    %v4339 = vand.u32 %v4338, 4294901760
    %4340 = vmatpush1.msra.mxu0 %v4339
    %4341 = vmatprep.subr.mxu0 0.0
    %v4342 = vand.u32 %v56, 4294901760
    %v4343 = vsub.f32 %v56, %v4342
    %v4344 = vand.u32 %v4343, 4294901760
    %4345 = vmatpush1.msra.mxu0 %v4344
    %4346 = vmatprep.subr.mxu0 0.0
    %v4347 = vand.u32 %v57, 4294901760
    %v4348 = vsub.f32 %v57, %v4347
    %v4349 = vand.u32 %v4348, 4294901760
    %4350 = vmatpush1.msra.mxu0 %v4349
    %4351 = vmatprep.subr.mxu0 0.0
    %v4352 = vand.u32 %v58, 4294901760
    %v4353 = vsub.f32 %v58, %v4352
    %v4354 = vand.u32 %v4353, 4294901760
    %4355 = vmatpush1.msra.mxu0 %v4354
    %4356 = vmatprep.subr.mxu0 0.0
    %v4357 = vand.u32 %v59, 4294901760
    %v4358 = vsub.f32 %v59, %v4357
    %v4359 = vand.u32 %v4358, 4294901760
    %4360 = vmatpush1.msra.mxu0 %v4359
    %4361 = vmatprep.subr.mxu0 0.0
    %v4362 = vand.u32 %v60, 4294901760
    %v4363 = vsub.f32 %v60, %v4362
    %v4364 = vand.u32 %v4363, 4294901760
    %4365 = vmatpush1.msra.mxu0 %v4364
    %4366 = vmatprep.subr.mxu0 0.0
    %v4367 = vand.u32 %v61, 4294901760
    %v4368 = vsub.f32 %v61, %v4367
    %v4369 = vand.u32 %v4368, 4294901760
    %4370 = vmatpush1.msra.mxu0 %v4369
    %4371 = vmatprep.subr.mxu0 0.0
    %v4372 = vand.u32 %v62, 4294901760
    %v4373 = vsub.f32 %v62, %v4372
    %v4374 = vand.u32 %v4373, 4294901760
    %4375 = vmatpush1.msra.mxu0 %v4374
    %4376 = vmatprep.subr.mxu0 0.0
    %v4377 = vand.u32 %v63, 4294901760
    %v4378 = vsub.f32 %v63, %v4377
    %v4379 = vand.u32 %v4378, 4294901760
    %4380 = vmatpush1.msra.mxu0 %v4379
    %4381 = vmatprep.subr.mxu0 0.0
    %v4382 = vand.u32 %v64, 4294901760
    %v4383 = vsub.f32 %v64, %v4382
    %v4384 = vand.u32 %v4383, 4294901760
    %4385 = vmatpush1.msra.mxu0 %v4384
    %4386 = vmatprep.subr.mxu0 0.0
    %v4387 = vand.u32 %v65, 4294901760
    %v4388 = vsub.f32 %v65, %v4387
    %v4389 = vand.u32 %v4388, 4294901760
    %4390 = vmatpush1.msra.mxu0 %v4389
    %4391 = vmatprep.subr.mxu0 0.0
    %v4392 = vand.u32 %v66, 4294901760
    %v4393 = vsub.f32 %v66, %v4392
    %v4394 = vand.u32 %v4393, 4294901760
    %4395 = vmatpush1.msra.mxu0 %v4394
    %4396 = vmatprep.subr.mxu0 0.0
    %v4397 = vand.u32 %v67, 4294901760
    %v4398 = vsub.f32 %v67, %v4397
    %v4399 = vand.u32 %v4398, 4294901760
    %4400 = vmatpush1.msra.mxu0 %v4399
    %4401 = vmatprep.subr.mxu0 0.0
    %v4402 = vand.u32 %v68, 4294901760
    %v4403 = vsub.f32 %v68, %v4402
    %v4404 = vand.u32 %v4403, 4294901760
    %4405 = vmatpush1.msra.mxu0 %v4404
    %4406 = vmatprep.subr.mxu0 0.0
    %v4407 = vand.u32 %v69, 4294901760
    %v4408 = vsub.f32 %v69, %v4407
    %v4409 = vand.u32 %v4408, 4294901760
    %4410 = vmatpush1.msra.mxu0 %v4409
    %4411 = vmatprep.subr.mxu0 0.0
    %v4412 = vand.u32 %v70, 4294901760
    %v4413 = vsub.f32 %v70, %v4412
    %v4414 = vand.u32 %v4413, 4294901760
    %4415 = vmatpush1.msra.mxu0 %v4414
    %4416 = vmatprep.subr.mxu0 0.0
    %v4417 = vand.u32 %v71, 4294901760
    %v4418 = vsub.f32 %v71, %v4417
    %v4419 = vand.u32 %v4418, 4294901760
    %4420 = vmatpush1.msra.mxu0 %v4419
    %4421 = vmatprep.subr.mxu0 0.0
    %v4422 = vand.u32 %v72, 4294901760
    %v4423 = vsub.f32 %v72, %v4422
    %v4424 = vand.u32 %v4423, 4294901760
    %4425 = vmatpush1.msra.mxu0 %v4424
    %4426 = vmatprep.subr.mxu0 0.0
    %v4427 = vand.u32 %v73, 4294901760
    %v4428 = vsub.f32 %v73, %v4427
    %v4429 = vand.u32 %v4428, 4294901760
    %4430 = vmatpush1.msra.mxu0 %v4429
    %4431 = vmatprep.subr.mxu0 0.0
    %v4432 = vand.u32 %v74, 4294901760
    %v4433 = vsub.f32 %v74, %v4432
    %v4434 = vand.u32 %v4433, 4294901760
    %4435 = vmatpush1.msra.mxu0 %v4434
    %4436 = vmatprep.subr.mxu0 0.0
    %v4437 = vand.u32 %v75, 4294901760
    %v4438 = vsub.f32 %v75, %v4437
    %v4439 = vand.u32 %v4438, 4294901760
    %4440 = vmatpush1.msra.mxu0 %v4439
    %4441 = vmatprep.subr.mxu0 0.0
    %v4442 = vand.u32 %v76, 4294901760
    %v4443 = vsub.f32 %v76, %v4442
    %v4444 = vand.u32 %v4443, 4294901760
    %4445 = vmatpush1.msra.mxu0 %v4444
    %4446 = vmatprep.subr.mxu0 0.0
    %v4447 = vand.u32 %v77, 4294901760
    %v4448 = vsub.f32 %v77, %v4447
    %v4449 = vand.u32 %v4448, 4294901760
    %4450 = vmatpush1.msra.mxu0 %v4449
    %4451 = vmatprep.subr.mxu0 0.0
    %v4452 = vand.u32 %v78, 4294901760
    %v4453 = vsub.f32 %v78, %v4452
    %v4454 = vand.u32 %v4453, 4294901760
    %4455 = vmatpush1.msra.mxu0 %v4454
    %4456 = vmatprep.subr.mxu0 0.0
    %v4457 = vand.u32 %v79, 4294901760
    %v4458 = vsub.f32 %v79, %v4457
    %v4459 = vand.u32 %v4458, 4294901760
    %4460 = vmatpush1.msra.mxu0 %v4459
    %4461 = vmatprep.subr.mxu0 0.0
    %v4462 = vand.u32 %v80, 4294901760
    %v4463 = vsub.f32 %v80, %v4462
    %v4464 = vand.u32 %v4463, 4294901760
    %4465 = vmatpush1.msra.mxu0 %v4464
    %4466 = vmatprep.subr.mxu0 0.0
    %v4467 = vand.u32 %v81, 4294901760
    %v4468 = vsub.f32 %v81, %v4467
    %v4469 = vand.u32 %v4468, 4294901760
    %4470 = vmatpush1.msra.mxu0 %v4469
    %4471 = vmatprep.subr.mxu0 0.0
    %v4472 = vand.u32 %v82, 4294901760
    %v4473 = vsub.f32 %v82, %v4472
    %v4474 = vand.u32 %v4473, 4294901760
    %4475 = vmatpush1.msra.mxu0 %v4474
    %4476 = vmatprep.subr.mxu0 0.0
    %v4477 = vand.u32 %v83, 4294901760
    %v4478 = vsub.f32 %v83, %v4477
    %v4479 = vand.u32 %v4478, 4294901760
    %4480 = vmatpush1.msra.mxu0 %v4479
    %4481 = vmatprep.subr.mxu0 0.0
    %v4482 = vand.u32 %v84, 4294901760
    %v4483 = vsub.f32 %v84, %v4482
    %v4484 = vand.u32 %v4483, 4294901760
    %4485 = vmatpush1.msra.mxu0 %v4484
    %4486 = vmatprep.subr.mxu0 0.0
    %v4487 = vand.u32 %v85, 4294901760
    %v4488 = vsub.f32 %v85, %v4487
    %v4489 = vand.u32 %v4488, 4294901760
    %4490 = vmatpush1.msra.mxu0 %v4489
    %v4491 = vand.u32 %v2874, 4294901760
    %4492 = vmatprep.mubr.f32.mxu0 %v4491
    %v4493 = vand.u32 %v2870, 4294901760
    %4494 = vmatmul.mubr.f32.gmra.mrb[0].mxu0 %v4493
    %v4495 = vpop.f32.mrb[0].mxu0
    %v4496 = vadd.f32 %v4328, %v4495
    %v4497 = vpop.f32.mrb[0].mxu0
    %4498 = vdwg.mxu0
    %4499 = vmatprep.subr.mxu0 0.0
    %v4500 = vand.u32 %v54, 4294901760
    %4501 = vmatpush1.msra.mxu0 %v4500
    %4502 = vmatprep.subr.mxu0 0.0
    %v4503 = vand.u32 %v55, 4294901760
    %4504 = vmatpush1.msra.mxu0 %v4503
    %4505 = vmatprep.subr.mxu0 0.0
    %v4506 = vand.u32 %v56, 4294901760
    %4507 = vmatpush1.msra.mxu0 %v4506
    %4508 = vmatprep.subr.mxu0 0.0
    %v4509 = vand.u32 %v57, 4294901760
    %4510 = vmatpush1.msra.mxu0 %v4509
    %4511 = vmatprep.subr.mxu0 0.0
    %v4512 = vand.u32 %v58, 4294901760
    %4513 = vmatpush1.msra.mxu0 %v4512
    %4514 = vmatprep.subr.mxu0 0.0
    %v4515 = vand.u32 %v59, 4294901760
    %4516 = vmatpush1.msra.mxu0 %v4515
    %4517 = vmatprep.subr.mxu0 0.0
    %v4518 = vand.u32 %v60, 4294901760
    %4519 = vmatpush1.msra.mxu0 %v4518
    %4520 = vmatprep.subr.mxu0 0.0
    %v4521 = vand.u32 %v61, 4294901760
    %4522 = vmatpush1.msra.mxu0 %v4521
    %4523 = vmatprep.subr.mxu0 0.0
    %v4524 = vand.u32 %v62, 4294901760
    %4525 = vmatpush1.msra.mxu0 %v4524
    %4526 = vmatprep.subr.mxu0 0.0
    %v4527 = vand.u32 %v63, 4294901760
    %4528 = vmatpush1.msra.mxu0 %v4527
    %4529 = vmatprep.subr.mxu0 0.0
    %v4530 = vand.u32 %v64, 4294901760
    %4531 = vmatpush1.msra.mxu0 %v4530
    %4532 = vmatprep.subr.mxu0 0.0
    %v4533 = vand.u32 %v65, 4294901760
    %4534 = vmatpush1.msra.mxu0 %v4533
    %4535 = vmatprep.subr.mxu0 0.0
    %v4536 = vand.u32 %v66, 4294901760
    %4537 = vmatpush1.msra.mxu0 %v4536
    %4538 = vmatprep.subr.mxu0 0.0
    %v4539 = vand.u32 %v67, 4294901760
    %4540 = vmatpush1.msra.mxu0 %v4539
    %4541 = vmatprep.subr.mxu0 0.0
    %v4542 = vand.u32 %v68, 4294901760
    %4543 = vmatpush1.msra.mxu0 %v4542
    %4544 = vmatprep.subr.mxu0 0.0
    %v4545 = vand.u32 %v69, 4294901760
    %4546 = vmatpush1.msra.mxu0 %v4545
    %4547 = vmatprep.subr.mxu0 0.0
    %v4548 = vand.u32 %v70, 4294901760
    %4549 = vmatpush1.msra.mxu0 %v4548
    %4550 = vmatprep.subr.mxu0 0.0
    %v4551 = vand.u32 %v71, 4294901760
    %4552 = vmatpush1.msra.mxu0 %v4551
    %4553 = vmatprep.subr.mxu0 0.0
    %v4554 = vand.u32 %v72, 4294901760
    %4555 = vmatpush1.msra.mxu0 %v4554
    %4556 = vmatprep.subr.mxu0 0.0
    %v4557 = vand.u32 %v73, 4294901760
    %4558 = vmatpush1.msra.mxu0 %v4557
    %4559 = vmatprep.subr.mxu0 0.0
    %v4560 = vand.u32 %v74, 4294901760
    %4561 = vmatpush1.msra.mxu0 %v4560
    %4562 = vmatprep.subr.mxu0 0.0
    %v4563 = vand.u32 %v75, 4294901760
    %4564 = vmatpush1.msra.mxu0 %v4563
    %4565 = vmatprep.subr.mxu0 0.0
    %v4566 = vand.u32 %v76, 4294901760
    %4567 = vmatpush1.msra.mxu0 %v4566
    %4568 = vmatprep.subr.mxu0 0.0
    %v4569 = vand.u32 %v77, 4294901760
    %4570 = vmatpush1.msra.mxu0 %v4569
    %4571 = vmatprep.subr.mxu0 0.0
    %v4572 = vand.u32 %v78, 4294901760
    %4573 = vmatpush1.msra.mxu0 %v4572
    %4574 = vmatprep.subr.mxu0 0.0
    %v4575 = vand.u32 %v79, 4294901760
    %4576 = vmatpush1.msra.mxu0 %v4575
    %4577 = vmatprep.subr.mxu0 0.0
    %v4578 = vand.u32 %v80, 4294901760
    %4579 = vmatpush1.msra.mxu0 %v4578
    %4580 = vmatprep.subr.mxu0 0.0
    %v4581 = vand.u32 %v81, 4294901760
    %4582 = vmatpush1.msra.mxu0 %v4581
    %4583 = vmatprep.subr.mxu0 0.0
    %v4584 = vand.u32 %v82, 4294901760
    %4585 = vmatpush1.msra.mxu0 %v4584
    %4586 = vmatprep.subr.mxu0 0.0
    %v4587 = vand.u32 %v83, 4294901760
    %4588 = vmatpush1.msra.mxu0 %v4587
    %4589 = vmatprep.subr.mxu0 0.0
    %v4590 = vand.u32 %v84, 4294901760
    %4591 = vmatpush1.msra.mxu0 %v4590
    %4592 = vmatprep.subr.mxu0 0.0
    %v4593 = vand.u32 %v85, 4294901760
    %4594 = vmatpush1.msra.mxu0 %v4593
    %v4595 = vand.u32 %v2874, 4294901760
    %4596 = vmatprep.mubr.f32.mxu0 %v4595
    %v4597 = vand.u32 %v2870, 4294901760
    %4598 = vmatmul.mubr.f32.gmra.mrb[0].mxu0 %v4597
    %v4599 = vpop.f32.mrb[0].mxu0
    %v4600 = vadd.f32 %v4496, %v4599
    %v4601 = vpop.f32.mrb[0].mxu0
    %4602 = vdwg.mxu0
    %v4603 = vrcp.pop 31.0
    %v4604 = vmul.f32 %v4600, %v4603
    %v4605 = vrsqrt.pop %v4604
    %v4606 = vmul.f32 %v4604, %v4605
    %vm4607 = vcmp.eq.f32.partialorder %v4604, inf
    %v4608 = vsel %vm4607, %v4604, %v4606
    %vm4609 = vcmp.eq.f32.partialorder %v4604, 0.0
    %v4610 = vand.u32 %v4604, 2147483648
    %v4611 = vsel %vm4609, %v4610, %v4608
    %v4612 = vadd.f32 %v4611, 1e-06
    %v4613 = vrcp.pop %v4612
    %v4615 = vsel %vm1841, %v4613, 0
    %v4617 = vand.u32 %v87, 4294901760
    %4618 = vmatprep.subr.mxu0 %v4617
    %v4619 = vand.u32 %v86, 4294901760
    %4620 = vmatpush1.msra.mxu0 %v4619
    %v4621 = vand.u32 %v91, 4294901760
    %4622 = vmatprep.subr.mxu0 %v4621
    %v4623 = vand.u32 %v90, 4294901760
    %4624 = vmatpush1.msra.mxu0 %v4623
    %4625 = vmatprep.subr.mxu0 0.0
    %4626 = vmatpush1.msra.mxu0 0.0
    %4627 = vmatprep.subr.mxu0 0.0
    %4628 = vmatpush1.msra.mxu0 0.0
    %4629 = vmatprep.subr.mxu0 0.0
    %4630 = vmatpush1.msra.mxu0 0.0
    %4631 = vmatprep.subr.mxu0 0.0
    %4632 = vmatpush1.msra.mxu0 0.0
    %4633 = vmatprep.subr.mxu0 0.0
    %4634 = vmatpush1.msra.mxu0 0.0
    %4635 = vmatprep.subr.mxu0 0.0
    %4636 = vmatpush1.msra.mxu0 0.0
    %4637 = vmatprep.subr.mxu0 0.0
    %4638 = vmatpush1.msra.mxu0 0.0
    %4639 = vmatprep.subr.mxu0 0.0
    %4640 = vmatpush1.msra.mxu0 0.0
    %4641 = vmatprep.subr.mxu0 0.0
    %4642 = vmatpush1.msra.mxu0 0.0
    %4643 = vmatprep.subr.mxu0 0.0
    %4644 = vmatpush1.msra.mxu0 0.0
    %4645 = vmatprep.subr.mxu0 0.0
    %4646 = vmatpush1.msra.mxu0 0.0
    %4647 = vmatprep.subr.mxu0 0.0
    %4648 = vmatpush1.msra.mxu0 0.0
    %4649 = vmatprep.subr.mxu0 0.0
    %4650 = vmatpush1.msra.mxu0 0.0
    %4651 = vmatprep.subr.mxu0 0.0
    %4652 = vmatpush1.msra.mxu0 0.0
    %4653 = vmatprep.subr.mxu0 0.0
    %4654 = vmatpush1.msra.mxu0 0.0
    %4655 = vmatprep.subr.mxu0 0.0
    %4656 = vmatpush1.msra.mxu0 0.0
    %4657 = vmatprep.subr.mxu0 0.0
    %4658 = vmatpush1.msra.mxu0 0.0
    %4659 = vmatprep.subr.mxu0 0.0
    %4660 = vmatpush1.msra.mxu0 0.0
    %4661 = vmatprep.subr.mxu0 0.0
    %4662 = vmatpush1.msra.mxu0 0.0
    %4663 = vmatprep.subr.mxu0 0.0
    %4664 = vmatpush1.msra.mxu0 0.0
    %4665 = vmatprep.subr.mxu0 0.0
    %4666 = vmatpush1.msra.mxu0 0.0
    %4667 = vmatprep.subr.mxu0 0.0
    %4668 = vmatpush1.msra.mxu0 0.0
    %4669 = vmatprep.subr.mxu0 0.0
    %4670 = vmatpush1.msra.mxu0 0.0
    %4671 = vmatprep.subr.mxu0 0.0
    %4672 = vmatpush1.msra.mxu0 0.0
    %4673 = vmatprep.subr.mxu0 0.0
    %4674 = vmatpush1.msra.mxu0 0.0
    %4675 = vmatprep.subr.mxu0 0.0
    %4676 = vmatpush1.msra.mxu0 0.0
    %4677 = vmatprep.subr.mxu0 0.0
    %4678 = vmatpush1.msra.mxu0 0.0
    %4679 = vmatprep.subr.mxu0 0.0
    %4680 = vmatpush1.msra.mxu0 0.0
    %4681 = vmatprep.subr.mxu0 0.0
    %4682 = vmatpush1.msra.mxu0 0.0
    %4683 = vmatprep.subr.mxu0 0.0
    %4684 = vmatpush1.msra.mxu0 0.0
    %4685 = vmatprep.mubr.f32.mxu0 0.0
    %v4686 = vand.u32 %v4615, 4294901760
    %v4687 = vsub.f32 %v4615, %v4686
    %v4688 = vand.u32 %v4687, 4294901760
    %v4689 = vsub.f32 %v4687, %v4688
    %v4690 = vand.u32 %v4689, 4294901760
    %4691 = vmatmul.mubr.f32.gmra.mrb[0].mxu0 %v4690
    %v4692 = vpop.f32.mrb[0].mxu0
    %v4693 = vadd.f32 0.0, %v4692
    %v4694 = vpop.f32.mrb[0].mxu0
    %v4695 = vadd.f32 0.0, %v4694
    %4696 = vdwg.mxu0
    %v4697 = vand.u32 %v87, 4294901760
    %v4698 = vsub.f32 %v87, %v4697
    %v4699 = vand.u32 %v4698, 4294901760
    %v4700 = vsub.f32 %v4698, %v4699
    %v4701 = vand.u32 %v4700, 4294901760
    %4702 = vmatprep.subr.mxu0 %v4701
    %v4703 = vand.u32 %v86, 4294901760
    %v4704 = vsub.f32 %v86, %v4703
    %v4705 = vand.u32 %v4704, 4294901760
    %v4706 = vsub.f32 %v4704, %v4705
    %v4707 = vand.u32 %v4706, 4294901760
    %4708 = vmatpush1.msra.mxu0 %v4707
    %v4709 = vand.u32 %v91, 4294901760
    %v4710 = vsub.f32 %v91, %v4709
    %v4711 = vand.u32 %v4710, 4294901760
    %v4712 = vsub.f32 %v4710, %v4711
    %v4713 = vand.u32 %v4712, 4294901760
    %4714 = vmatprep.subr.mxu0 %v4713
    %v4715 = vand.u32 %v90, 4294901760
    %v4716 = vsub.f32 %v90, %v4715
    %v4717 = vand.u32 %v4716, 4294901760
    %v4718 = vsub.f32 %v4716, %v4717
    %v4719 = vand.u32 %v4718, 4294901760
    %4720 = vmatpush1.msra.mxu0 %v4719
    %4721 = vmatprep.subr.mxu0 0.0
    %4722 = vmatpush1.msra.mxu0 0.0
    %4723 = vmatprep.subr.mxu0 0.0
    %4724 = vmatpush1.msra.mxu0 0.0
    %4725 = vmatprep.subr.mxu0 0.0
    %4726 = vmatpush1.msra.mxu0 0.0
    %4727 = vmatprep.subr.mxu0 0.0
    %4728 = vmatpush1.msra.mxu0 0.0
    %4729 = vmatprep.subr.mxu0 0.0
    %4730 = vmatpush1.msra.mxu0 0.0
    %4731 = vmatprep.subr.mxu0 0.0
    %4732 = vmatpush1.msra.mxu0 0.0
    %4733 = vmatprep.subr.mxu0 0.0
    %4734 = vmatpush1.msra.mxu0 0.0
    %4735 = vmatprep.subr.mxu0 0.0
    %4736 = vmatpush1.msra.mxu0 0.0
    %4737 = vmatprep.subr.mxu0 0.0
    %4738 = vmatpush1.msra.mxu0 0.0
    %4739 = vmatprep.subr.mxu0 0.0
    %4740 = vmatpush1.msra.mxu0 0.0
    %4741 = vmatprep.subr.mxu0 0.0
    %4742 = vmatpush1.msra.mxu0 0.0
    %4743 = vmatprep.subr.mxu0 0.0
    %4744 = vmatpush1.msra.mxu0 0.0
    %4745 = vmatprep.subr.mxu0 0.0
    %4746 = vmatpush1.msra.mxu0 0.0
    %4747 = vmatprep.subr.mxu0 0.0
    %4748 = vmatpush1.msra.mxu0 0.0
    %4749 = vmatprep.subr.mxu0 0.0
    %4750 = vmatpush1.msra.mxu0 0.0
    %4751 = vmatprep.subr.mxu0 0.0
    %4752 = vmatpush1.msra.mxu0 0.0
    %4753 = vmatprep.subr.mxu0 0.0
    %4754 = vmatpush1.msra.mxu0 0.0
    %4755 = vmatprep.subr.mxu0 0.0
    %4756 = vmatpush1.msra.mxu0 0.0
    %4757 = vmatprep.subr.mxu0 0.0
    %4758 = vmatpush1.msra.mxu0 0.0
    %4759 = vmatprep.subr.mxu0 0.0
    %4760 = vmatpush1.msra.mxu0 0.0
    %4761 = vmatprep.subr.mxu0 0.0
    %4762 = vmatpush1.msra.mxu0 0.0
    %4763 = vmatprep.subr.mxu0 0.0
    %4764 = vmatpush1.msra.mxu0 0.0
    %4765 = vmatprep.subr.mxu0 0.0
    %4766 = vmatpush1.msra.mxu0 0.0
    %4767 = vmatprep.subr.mxu0 0.0
    %4768 = vmatpush1.msra.mxu0 0.0
    %4769 = vmatprep.subr.mxu0 0.0
    %4770 = vmatpush1.msra.mxu0 0.0
    %4771 = vmatprep.subr.mxu0 0.0
    %4772 = vmatpush1.msra.mxu0 0.0
    %4773 = vmatprep.subr.mxu0 0.0
    %4774 = vmatpush1.msra.mxu0 0.0
    %4775 = vmatprep.subr.mxu0 0.0
    %4776 = vmatpush1.msra.mxu0 0.0
    %4777 = vmatprep.subr.mxu0 0.0
    %4778 = vmatpush1.msra.mxu0 0.0
    %4779 = vmatprep.subr.mxu0 0.0
    %4780 = vmatpush1.msra.mxu0 0.0
    %4781 = vmatprep.mubr.f32.mxu0 0.0
    %v4782 = vand.u32 %v4615, 4294901760
    %4783 = vmatmul.mubr.f32.gmra.mrb[0].mxu0 %v4782
    %v4784 = vpop.f32.mrb[0].mxu0
    %v4785 = vadd.f32 %v4693, %v4784
    %v4786 = vpop.f32.mrb[0].mxu0
    %v4787 = vadd.f32 %v4695, %v4786
    %4788 = vdwg.mxu0
    %v4789 = vand.u32 %v87, 4294901760
    %v4790 = vsub.f32 %v87, %v4789
    %4791 = vmatprep.subr.mxu0 %v4790
    %v4792 = vand.u32 %v86, 4294901760
    %v4793 = vsub.f32 %v86, %v4792
    %4794 = vmatpush1.msra.mxu0 %v4793
    %v4795 = vand.u32 %v91, 4294901760
    %v4796 = vsub.f32 %v91, %v4795
    %4797 = vmatprep.subr.mxu0 %v4796
    %v4798 = vand.u32 %v90, 4294901760
    %v4799 = vsub.f32 %v90, %v4798
    %4800 = vmatpush1.msra.mxu0 %v4799
    %4801 = vmatprep.subr.mxu0 0.0
    %4802 = vmatpush1.msra.mxu0 0.0
    %4803 = vmatprep.subr.mxu0 0.0
    %4804 = vmatpush1.msra.mxu0 0.0
    %4805 = vmatprep.subr.mxu0 0.0
    %4806 = vmatpush1.msra.mxu0 0.0
    %4807 = vmatprep.subr.mxu0 0.0
    %4808 = vmatpush1.msra.mxu0 0.0
    %4809 = vmatprep.subr.mxu0 0.0
    %4810 = vmatpush1.msra.mxu0 0.0
    %4811 = vmatprep.subr.mxu0 0.0
    %4812 = vmatpush1.msra.mxu0 0.0
    %4813 = vmatprep.subr.mxu0 0.0
    %4814 = vmatpush1.msra.mxu0 0.0
    %4815 = vmatprep.subr.mxu0 0.0
    %4816 = vmatpush1.msra.mxu0 0.0
    %4817 = vmatprep.subr.mxu0 0.0
    %4818 = vmatpush1.msra.mxu0 0.0
    %4819 = vmatprep.subr.mxu0 0.0
    %4820 = vmatpush1.msra.mxu0 0.0
    %4821 = vmatprep.subr.mxu0 0.0
    %4822 = vmatpush1.msra.mxu0 0.0
    %4823 = vmatprep.subr.mxu0 0.0
    %4824 = vmatpush1.msra.mxu0 0.0
    %4825 = vmatprep.subr.mxu0 0.0
    %4826 = vmatpush1.msra.mxu0 0.0
    %4827 = vmatprep.subr.mxu0 0.0
    %4828 = vmatpush1.msra.mxu0 0.0
    %4829 = vmatprep.subr.mxu0 0.0
    %4830 = vmatpush1.msra.mxu0 0.0
    %4831 = vmatprep.subr.mxu0 0.0
    %4832 = vmatpush1.msra.mxu0 0.0
    %4833 = vmatprep.subr.mxu0 0.0
    %4834 = vmatpush1.msra.mxu0 0.0
    %4835 = vmatprep.subr.mxu0 0.0
    %4836 = vmatpush1.msra.mxu0 0.0
    %4837 = vmatprep.subr.mxu0 0.0
    %4838 = vmatpush1.msra.mxu0 0.0
    %4839 = vmatprep.subr.mxu0 0.0
    %4840 = vmatpush1.msra.mxu0 0.0
    %4841 = vmatprep.subr.mxu0 0.0
    %4842 = vmatpush1.msra.mxu0 0.0
    %4843 = vmatprep.subr.mxu0 0.0
    %4844 = vmatpush1.msra.mxu0 0.0
    %4845 = vmatprep.subr.mxu0 0.0
    %4846 = vmatpush1.msra.mxu0 0.0
    %4847 = vmatprep.subr.mxu0 0.0
    %4848 = vmatpush1.msra.mxu0 0.0
    %4849 = vmatprep.subr.mxu0 0.0
    %4850 = vmatpush1.msra.mxu0 0.0
    %4851 = vmatprep.subr.mxu0 0.0
    %4852 = vmatpush1.msra.mxu0 0.0
    %4853 = vmatprep.subr.mxu0 0.0
    %4854 = vmatpush1.msra.mxu0 0.0
    %4855 = vmatprep.subr.mxu0 0.0
    %4856 = vmatpush1.msra.mxu0 0.0
    %4857 = vmatprep.subr.mxu0 0.0
    %4858 = vmatpush1.msra.mxu0 0.0
    %4859 = vmatprep.subr.mxu0 0.0
    %4860 = vmatpush1.msra.mxu0 0.0
    %4861 = vmatprep.mubr.f32.mxu0 0.0
    %v4862 = vand.u32 %v4615, 4294901760
    %v4863 = vsub.f32 %v4615, %v4862
    %4864 = vmatmul.mubr.f32.gmra.mrb[0].mxu0 %v4863
    %v4865 = vpop.f32.mrb[0].mxu0
    %v4866 = vadd.f32 %v4785, %v4865
    %v4867 = vpop.f32.mrb[0].mxu0
    %v4868 = vadd.f32 %v4787, %v4867
    %4869 = vdwg.mxu0
    %v4870 = vand.u32 %v87, 4294901760
    %4871 = vmatprep.subr.mxu0 %v4870
    %v4872 = vand.u32 %v86, 4294901760
    %4873 = vmatpush1.msra.mxu0 %v4872
    %v4874 = vand.u32 %v91, 4294901760
    %4875 = vmatprep.subr.mxu0 %v4874
    %v4876 = vand.u32 %v90, 4294901760
    %4877 = vmatpush1.msra.mxu0 %v4876
    %4878 = vmatprep.subr.mxu0 0.0
    %4879 = vmatpush1.msra.mxu0 0.0
    %4880 = vmatprep.subr.mxu0 0.0
    %4881 = vmatpush1.msra.mxu0 0.0
    %4882 = vmatprep.subr.mxu0 0.0
    %4883 = vmatpush1.msra.mxu0 0.0
    %4884 = vmatprep.subr.mxu0 0.0
    %4885 = vmatpush1.msra.mxu0 0.0
    %4886 = vmatprep.subr.mxu0 0.0
    %4887 = vmatpush1.msra.mxu0 0.0
    %4888 = vmatprep.subr.mxu0 0.0
    %4889 = vmatpush1.msra.mxu0 0.0
    %4890 = vmatprep.subr.mxu0 0.0
    %4891 = vmatpush1.msra.mxu0 0.0
    %4892 = vmatprep.subr.mxu0 0.0
    %4893 = vmatpush1.msra.mxu0 0.0
    %4894 = vmatprep.subr.mxu0 0.0
    %4895 = vmatpush1.msra.mxu0 0.0
    %4896 = vmatprep.subr.mxu0 0.0
    %4897 = vmatpush1.msra.mxu0 0.0
    %4898 = vmatprep.subr.mxu0 0.0
    %4899 = vmatpush1.msra.mxu0 0.0
    %4900 = vmatprep.subr.mxu0 0.0
    %4901 = vmatpush1.msra.mxu0 0.0
    %4902 = vmatprep.subr.mxu0 0.0
    %4903 = vmatpush1.msra.mxu0 0.0
    %4904 = vmatprep.subr.mxu0 0.0
    %4905 = vmatpush1.msra.mxu0 0.0
    %4906 = vmatprep.subr.mxu0 0.0
    %4907 = vmatpush1.msra.mxu0 0.0
    %4908 = vmatprep.subr.mxu0 0.0
    %4909 = vmatpush1.msra.mxu0 0.0
    %4910 = vmatprep.subr.mxu0 0.0
    %4911 = vmatpush1.msra.mxu0 0.0
    %4912 = vmatprep.subr.mxu0 0.0
    %4913 = vmatpush1.msra.mxu0 0.0
    %4914 = vmatprep.subr.mxu0 0.0
    %4915 = vmatpush1.msra.mxu0 0.0
    %4916 = vmatprep.subr.mxu0 0.0
    %4917 = vmatpush1.msra.mxu0 0.0
    %4918 = vmatprep.subr.mxu0 0.0
    %4919 = vmatpush1.msra.mxu0 0.0
    %4920 = vmatprep.subr.mxu0 0.0
    %4921 = vmatpush1.msra.mxu0 0.0
    %4922 = vmatprep.subr.mxu0 0.0
    %4923 = vmatpush1.msra.mxu0 0.0
    %4924 = vmatprep.subr.mxu0 0.0
    %4925 = vmatpush1.msra.mxu0 0.0
    %4926 = vmatprep.subr.mxu0 0.0
    %4927 = vmatpush1.msra.mxu0 0.0
    %4928 = vmatprep.subr.mxu0 0.0
    %4929 = vmatpush1.msra.mxu0 0.0
    %4930 = vmatprep.subr.mxu0 0.0
    %4931 = vmatpush1.msra.mxu0 0.0
    %4932 = vmatprep.subr.mxu0 0.0
    %4933 = vmatpush1.msra.mxu0 0.0
    %4934 = vmatprep.subr.mxu0 0.0
    %4935 = vmatpush1.msra.mxu0 0.0
    %4936 = vmatprep.subr.mxu0 0.0
    %4937 = vmatpush1.msra.mxu0 0.0
    %4938 = vmatprep.mubr.f32.mxu0 0.0
    %v4939 = vand.u32 %v4615, 4294901760
    %v4940 = vsub.f32 %v4615, %v4939
    %v4941 = vand.u32 %v4940, 4294901760
    %4942 = vmatmul.mubr.f32.gmra.mrb[0].mxu0 %v4941
    %v4943 = vpop.f32.mrb[0].mxu0
    %v4944 = vadd.f32 %v4866, %v4943
    %v4945 = vpop.f32.mrb[0].mxu0
    %v4946 = vadd.f32 %v4868, %v4945
    %4947 = vdwg.mxu0
    %v4948 = vand.u32 %v87, 4294901760
    %v4949 = vsub.f32 %v87, %v4948
    %v4950 = vand.u32 %v4949, 4294901760
    %4951 = vmatprep.subr.mxu0 %v4950
    %v4952 = vand.u32 %v86, 4294901760
    %v4953 = vsub.f32 %v86, %v4952
    %v4954 = vand.u32 %v4953, 4294901760
    %4955 = vmatpush1.msra.mxu0 %v4954
    %v4956 = vand.u32 %v91, 4294901760
    %v4957 = vsub.f32 %v91, %v4956
    %v4958 = vand.u32 %v4957, 4294901760
    %4959 = vmatprep.subr.mxu0 %v4958
    %v4960 = vand.u32 %v90, 4294901760
    %v4961 = vsub.f32 %v90, %v4960
    %v4962 = vand.u32 %v4961, 4294901760
    %4963 = vmatpush1.msra.mxu0 %v4962
    %4964 = vmatprep.subr.mxu0 0.0
    %4965 = vmatpush1.msra.mxu0 0.0
    %4966 = vmatprep.subr.mxu0 0.0
    %4967 = vmatpush1.msra.mxu0 0.0
    %4968 = vmatprep.subr.mxu0 0.0
    %4969 = vmatpush1.msra.mxu0 0.0
    %4970 = vmatprep.subr.mxu0 0.0
    %4971 = vmatpush1.msra.mxu0 0.0
    %4972 = vmatprep.subr.mxu0 0.0
    %4973 = vmatpush1.msra.mxu0 0.0
    %4974 = vmatprep.subr.mxu0 0.0
    %4975 = vmatpush1.msra.mxu0 0.0
    %4976 = vmatprep.subr.mxu0 0.0
    %4977 = vmatpush1.msra.mxu0 0.0
    %4978 = vmatprep.subr.mxu0 0.0
    %4979 = vmatpush1.msra.mxu0 0.0
    %4980 = vmatprep.subr.mxu0 0.0
    %4981 = vmatpush1.msra.mxu0 0.0
    %4982 = vmatprep.subr.mxu0 0.0
    %4983 = vmatpush1.msra.mxu0 0.0
    %4984 = vmatprep.subr.mxu0 0.0
    %4985 = vmatpush1.msra.mxu0 0.0
    %4986 = vmatprep.subr.mxu0 0.0
    %4987 = vmatpush1.msra.mxu0 0.0
    %4988 = vmatprep.subr.mxu0 0.0
    %4989 = vmatpush1.msra.mxu0 0.0
    %4990 = vmatprep.subr.mxu0 0.0
    %4991 = vmatpush1.msra.mxu0 0.0
    %4992 = vmatprep.subr.mxu0 0.0
    %4993 = vmatpush1.msra.mxu0 0.0
    %4994 = vmatprep.subr.mxu0 0.0
    %4995 = vmatpush1.msra.mxu0 0.0
    %4996 = vmatprep.subr.mxu0 0.0
    %4997 = vmatpush1.msra.mxu0 0.0
    %4998 = vmatprep.subr.mxu0 0.0
    %4999 = vmatpush1.msra.mxu0 0.0
    %5000 = vmatprep.subr.mxu0 0.0
    %5001 = vmatpush1.msra.mxu0 0.0
    %5002 = vmatprep.subr.mxu0 0.0
    %5003 = vmatpush1.msra.mxu0 0.0
    %5004 = vmatprep.subr.mxu0 0.0
    %5005 = vmatpush1.msra.mxu0 0.0
    %5006 = vmatprep.subr.mxu0 0.0
    %5007 = vmatpush1.msra.mxu0 0.0
    %5008 = vmatprep.subr.mxu0 0.0
    %5009 = vmatpush1.msra.mxu0 0.0
    %5010 = vmatprep.subr.mxu0 0.0
    %5011 = vmatpush1.msra.mxu0 0.0
    %5012 = vmatprep.subr.mxu0 0.0
    %5013 = vmatpush1.msra.mxu0 0.0
    %5014 = vmatprep.subr.mxu0 0.0
    %5015 = vmatpush1.msra.mxu0 0.0
    %5016 = vmatprep.subr.mxu0 0.0
    %5017 = vmatpush1.msra.mxu0 0.0
    %5018 = vmatprep.subr.mxu0 0.0
    %5019 = vmatpush1.msra.mxu0 0.0
    %5020 = vmatprep.subr.mxu0 0.0
    %5021 = vmatpush1.msra.mxu0 0.0
    %5022 = vmatprep.subr.mxu0 0.0
    %5023 = vmatpush1.msra.mxu0 0.0
    %5024 = vmatprep.mubr.f32.mxu0 0.0
    %v5025 = vand.u32 %v4615, 4294901760
    %5026 = vmatmul.mubr.f32.gmra.mrb[0].mxu0 %v5025
    %v5027 = vpop.f32.mrb[0].mxu0
    %v5028 = vadd.f32 %v4944, %v5027
    %v5029 = vpop.f32.mrb[0].mxu0
    %v5030 = vadd.f32 %v4946, %v5029
    %5031 = vdwg.mxu0
    %v5032 = vand.u32 %v87, 4294901760
    %5033 = vmatprep.subr.mxu0 %v5032
    %v5034 = vand.u32 %v86, 4294901760
    %5035 = vmatpush1.msra.mxu0 %v5034
    %v5036 = vand.u32 %v91, 4294901760
    %5037 = vmatprep.subr.mxu0 %v5036
    %v5038 = vand.u32 %v90, 4294901760
    %5039 = vmatpush1.msra.mxu0 %v5038
    %5040 = vmatprep.subr.mxu0 0.0
    %5041 = vmatpush1.msra.mxu0 0.0
    %5042 = vmatprep.subr.mxu0 0.0
    %5043 = vmatpush1.msra.mxu0 0.0
    %5044 = vmatprep.subr.mxu0 0.0
    %5045 = vmatpush1.msra.mxu0 0.0
    %5046 = vmatprep.subr.mxu0 0.0
    %5047 = vmatpush1.msra.mxu0 0.0
    %5048 = vmatprep.subr.mxu0 0.0
    %5049 = vmatpush1.msra.mxu0 0.0
    %5050 = vmatprep.subr.mxu0 0.0
    %5051 = vmatpush1.msra.mxu0 0.0
    %5052 = vmatprep.subr.mxu0 0.0
    %5053 = vmatpush1.msra.mxu0 0.0
    %5054 = vmatprep.subr.mxu0 0.0
    %5055 = vmatpush1.msra.mxu0 0.0
    %5056 = vmatprep.subr.mxu0 0.0
    %5057 = vmatpush1.msra.mxu0 0.0
    %5058 = vmatprep.subr.mxu0 0.0
    %5059 = vmatpush1.msra.mxu0 0.0
    %5060 = vmatprep.subr.mxu0 0.0
    %5061 = vmatpush1.msra.mxu0 0.0
    %5062 = vmatprep.subr.mxu0 0.0
    %5063 = vmatpush1.msra.mxu0 0.0
    %5064 = vmatprep.subr.mxu0 0.0
    %5065 = vmatpush1.msra.mxu0 0.0
    %5066 = vmatprep.subr.mxu0 0.0
    %5067 = vmatpush1.msra.mxu0 0.0
    %5068 = vmatprep.subr.mxu0 0.0
    %5069 = vmatpush1.msra.mxu0 0.0
    %5070 = vmatprep.subr.mxu0 0.0
    %5071 = vmatpush1.msra.mxu0 0.0
    %5072 = vmatprep.subr.mxu0 0.0
    %5073 = vmatpush1.msra.mxu0 0.0
    %5074 = vmatprep.subr.mxu0 0.0
    %5075 = vmatpush1.msra.mxu0 0.0
    %5076 = vmatprep.subr.mxu0 0.0
    %5077 = vmatpush1.msra.mxu0 0.0
    %5078 = vmatprep.subr.mxu0 0.0
    %5079 = vmatpush1.msra.mxu0 0.0
    %5080 = vmatprep.subr.mxu0 0.0
    %5081 = vmatpush1.msra.mxu0 0.0
    %5082 = vmatprep.subr.mxu0 0.0
    %5083 = vmatpush1.msra.mxu0 0.0
    %5084 = vmatprep.subr.mxu0 0.0
    %5085 = vmatpush1.msra.mxu0 0.0
    %5086 = vmatprep.subr.mxu0 0.0
    %5087 = vmatpush1.msra.mxu0 0.0
    %5088 = vmatprep.subr.mxu0 0.0
    %5089 = vmatpush1.msra.mxu0 0.0
    %5090 = vmatprep.subr.mxu0 0.0
    %5091 = vmatpush1.msra.mxu0 0.0
    %5092 = vmatprep.subr.mxu0 0.0
    %5093 = vmatpush1.msra.mxu0 0.0
    %5094 = vmatprep.subr.mxu0 0.0
    %5095 = vmatpush1.msra.mxu0 0.0
    %5096 = vmatprep.subr.mxu0 0.0
    %5097 = vmatpush1.msra.mxu0 0.0
    %5098 = vmatprep.subr.mxu0 0.0
    %5099 = vmatpush1.msra.mxu0 0.0
    %5100 = vmatprep.mubr.f32.mxu0 0.0
    %v5101 = vand.u32 %v4615, 4294901760
    %5102 = vmatmul.mubr.f32.gmra.mrb[0].mxu0 %v5101
    %v5103 = vpop.f32.mrb[0].mxu0
    %v5104 = vadd.f32 %v5028, %v5103
    %v5105 = vpop.f32.mrb[0].mxu0
    %v5106 = vadd.f32 %v5030, %v5105
    %5107 = vdwg.mxu0
    %v5108 = vand.u32 %v89, 4294901760
    %5109 = vmatprep.subr.mxu0 %v5108
    %v5110 = vand.u32 %v88, 4294901760
    %5111 = vmatpush1.msra.mxu0 %v5110
    %v5112 = vand.u32 %v93, 4294901760
    %5113 = vmatprep.subr.mxu0 %v5112
    %v5114 = vand.u32 %v92, 4294901760
    %5115 = vmatpush1.msra.mxu0 %v5114
    %5116 = vmatprep.subr.mxu0 0.0
    %5117 = vmatpush1.msra.mxu0 0.0
    %5118 = vmatprep.subr.mxu0 0.0
    %5119 = vmatpush1.msra.mxu0 0.0
    %5120 = vmatprep.subr.mxu0 0.0
    %5121 = vmatpush1.msra.mxu0 0.0
    %5122 = vmatprep.subr.mxu0 0.0
    %5123 = vmatpush1.msra.mxu0 0.0
    %5124 = vmatprep.subr.mxu0 0.0
    %5125 = vmatpush1.msra.mxu0 0.0
    %5126 = vmatprep.subr.mxu0 0.0
    %5127 = vmatpush1.msra.mxu0 0.0
    %5128 = vmatprep.subr.mxu0 0.0
    %5129 = vmatpush1.msra.mxu0 0.0
    %5130 = vmatprep.subr.mxu0 0.0
    %5131 = vmatpush1.msra.mxu0 0.0
    %5132 = vmatprep.subr.mxu0 0.0
    %5133 = vmatpush1.msra.mxu0 0.0
    %5134 = vmatprep.subr.mxu0 0.0
    %5135 = vmatpush1.msra.mxu0 0.0
    %5136 = vmatprep.subr.mxu0 0.0
    %5137 = vmatpush1.msra.mxu0 0.0
    %5138 = vmatprep.subr.mxu0 0.0
    %5139 = vmatpush1.msra.mxu0 0.0
    %5140 = vmatprep.subr.mxu0 0.0
    %5141 = vmatpush1.msra.mxu0 0.0
    %5142 = vmatprep.subr.mxu0 0.0
    %5143 = vmatpush1.msra.mxu0 0.0
    %5144 = vmatprep.subr.mxu0 0.0
    %5145 = vmatpush1.msra.mxu0 0.0
    %5146 = vmatprep.subr.mxu0 0.0
    %5147 = vmatpush1.msra.mxu0 0.0
    %5148 = vmatprep.subr.mxu0 0.0
    %5149 = vmatpush1.msra.mxu0 0.0
    %5150 = vmatprep.subr.mxu0 0.0
    %5151 = vmatpush1.msra.mxu0 0.0
    %5152 = vmatprep.subr.mxu0 0.0
    %5153 = vmatpush1.msra.mxu0 0.0
    %5154 = vmatprep.subr.mxu0 0.0
    %5155 = vmatpush1.msra.mxu0 0.0
    %5156 = vmatprep.subr.mxu0 0.0
    %5157 = vmatpush1.msra.mxu0 0.0
    %5158 = vmatprep.subr.mxu0 0.0
    %5159 = vmatpush1.msra.mxu0 0.0
    %5160 = vmatprep.subr.mxu0 0.0
    %5161 = vmatpush1.msra.mxu0 0.0
    %5162 = vmatprep.subr.mxu0 0.0
    %5163 = vmatpush1.msra.mxu0 0.0
    %5164 = vmatprep.subr.mxu0 0.0
    %5165 = vmatpush1.msra.mxu0 0.0
    %5166 = vmatprep.subr.mxu0 0.0
    %5167 = vmatpush1.msra.mxu0 0.0
    %5168 = vmatprep.subr.mxu0 0.0
    %5169 = vmatpush1.msra.mxu0 0.0
    %5170 = vmatprep.subr.mxu0 0.0
    %5171 = vmatpush1.msra.mxu0 0.0
    %5172 = vmatprep.subr.mxu0 0.0
    %5173 = vmatpush1.msra.mxu0 0.0
    %5174 = vmatprep.subr.mxu0 0.0
    %5175 = vmatpush1.msra.mxu0 0.0
    %5176 = vmatprep.mubr.f32.mxu0 0.0
    %v5177 = vand.u32 %v4615, 4294901760
    %v5178 = vsub.f32 %v4615, %v5177
    %v5179 = vand.u32 %v5178, 4294901760
    %v5180 = vsub.f32 %v5178, %v5179
    %v5181 = vand.u32 %v5180, 4294901760
    %5182 = vmatmul.mubr.f32.gmra.mrb[0].mxu0 %v5181
    %v5183 = vpop.f32.mrb[0].mxu0
    %v5184 = vadd.f32 0.0, %v5183
    %v5185 = vpop.f32.mrb[0].mxu0
    %v5186 = vadd.f32 0.0, %v5185
    %5187 = vdwg.mxu0
    %v5188 = vand.u32 %v89, 4294901760
    %v5189 = vsub.f32 %v89, %v5188
    %v5190 = vand.u32 %v5189, 4294901760
    %v5191 = vsub.f32 %v5189, %v5190
    %v5192 = vand.u32 %v5191, 4294901760
    %5193 = vmatprep.subr.mxu0 %v5192
    %v5194 = vand.u32 %v88, 4294901760
    %v5195 = vsub.f32 %v88, %v5194
    %v5196 = vand.u32 %v5195, 4294901760
    %v5197 = vsub.f32 %v5195, %v5196
    %v5198 = vand.u32 %v5197, 4294901760
    %5199 = vmatpush1.msra.mxu0 %v5198
    %v5200 = vand.u32 %v93, 4294901760
    %v5201 = vsub.f32 %v93, %v5200
    %v5202 = vand.u32 %v5201, 4294901760
    %v5203 = vsub.f32 %v5201, %v5202
    %v5204 = vand.u32 %v5203, 4294901760
    %5205 = vmatprep.subr.mxu0 %v5204
    %v5206 = vand.u32 %v92, 4294901760
    %v5207 = vsub.f32 %v92, %v5206
    %v5208 = vand.u32 %v5207, 4294901760
    %v5209 = vsub.f32 %v5207, %v5208
    %v5210 = vand.u32 %v5209, 4294901760
    %5211 = vmatpush1.msra.mxu0 %v5210
    %5212 = vmatprep.subr.mxu0 0.0
    %5213 = vmatpush1.msra.mxu0 0.0
    %5214 = vmatprep.subr.mxu0 0.0
    %5215 = vmatpush1.msra.mxu0 0.0
    %5216 = vmatprep.subr.mxu0 0.0
    %5217 = vmatpush1.msra.mxu0 0.0
    %5218 = vmatprep.subr.mxu0 0.0
    %5219 = vmatpush1.msra.mxu0 0.0
    %5220 = vmatprep.subr.mxu0 0.0
    %5221 = vmatpush1.msra.mxu0 0.0
    %5222 = vmatprep.subr.mxu0 0.0
    %5223 = vmatpush1.msra.mxu0 0.0
    %5224 = vmatprep.subr.mxu0 0.0
    %5225 = vmatpush1.msra.mxu0 0.0
    %5226 = vmatprep.subr.mxu0 0.0
    %5227 = vmatpush1.msra.mxu0 0.0
    %5228 = vmatprep.subr.mxu0 0.0
    %5229 = vmatpush1.msra.mxu0 0.0
    %5230 = vmatprep.subr.mxu0 0.0
    %5231 = vmatpush1.msra.mxu0 0.0
    %5232 = vmatprep.subr.mxu0 0.0
    %5233 = vmatpush1.msra.mxu0 0.0
    %5234 = vmatprep.subr.mxu0 0.0
    %5235 = vmatpush1.msra.mxu0 0.0
    %5236 = vmatprep.subr.mxu0 0.0
    %5237 = vmatpush1.msra.mxu0 0.0
    %5238 = vmatprep.subr.mxu0 0.0
    %5239 = vmatpush1.msra.mxu0 0.0
    %5240 = vmatprep.subr.mxu0 0.0
    %5241 = vmatpush1.msra.mxu0 0.0
    %5242 = vmatprep.subr.mxu0 0.0
    %5243 = vmatpush1.msra.mxu0 0.0
    %5244 = vmatprep.subr.mxu0 0.0
    %5245 = vmatpush1.msra.mxu0 0.0
    %5246 = vmatprep.subr.mxu0 0.0
    %5247 = vmatpush1.msra.mxu0 0.0
    %5248 = vmatprep.subr.mxu0 0.0
    %5249 = vmatpush1.msra.mxu0 0.0
    %5250 = vmatprep.subr.mxu0 0.0
    %5251 = vmatpush1.msra.mxu0 0.0
    %5252 = vmatprep.subr.mxu0 0.0
    %5253 = vmatpush1.msra.mxu0 0.0
    %5254 = vmatprep.subr.mxu0 0.0
    %5255 = vmatpush1.msra.mxu0 0.0
    %5256 = vmatprep.subr.mxu0 0.0
    %5257 = vmatpush1.msra.mxu0 0.0
    %5258 = vmatprep.subr.mxu0 0.0
    %5259 = vmatpush1.msra.mxu0 0.0
    %5260 = vmatprep.subr.mxu0 0.0
    %5261 = vmatpush1.msra.mxu0 0.0
    %5262 = vmatprep.subr.mxu0 0.0
    %5263 = vmatpush1.msra.mxu0 0.0
    %5264 = vmatprep.subr.mxu0 0.0
    %5265 = vmatpush1.msra.mxu0 0.0
    %5266 = vmatprep.subr.mxu0 0.0
    %5267 = vmatpush1.msra.mxu0 0.0
    %5268 = vmatprep.subr.mxu0 0.0
    %5269 = vmatpush1.msra.mxu0 0.0
    %5270 = vmatprep.subr.mxu0 0.0
    %5271 = vmatpush1.msra.mxu0 0.0
    %5272 = vmatprep.mubr.f32.mxu0 0.0
    %v5273 = vand.u32 %v4615, 4294901760
    %5274 = vmatmul.mubr.f32.gmra.mrb[0].mxu0 %v5273
    %v5275 = vpop.f32.mrb[0].mxu0
    %v5276 = vadd.f32 %v5184, %v5275
    %v5277 = vpop.f32.mrb[0].mxu0
    %v5278 = vadd.f32 %v5186, %v5277
    %5279 = vdwg.mxu0
    %v5280 = vand.u32 %v89, 4294901760
    %v5281 = vsub.f32 %v89, %v5280
    %5282 = vmatprep.subr.mxu0 %v5281
    %v5283 = vand.u32 %v88, 4294901760
    %v5284 = vsub.f32 %v88, %v5283
    %5285 = vmatpush1.msra.mxu0 %v5284
    %v5286 = vand.u32 %v93, 4294901760
    %v5287 = vsub.f32 %v93, %v5286
    %5288 = vmatprep.subr.mxu0 %v5287
    %v5289 = vand.u32 %v92, 4294901760
    %v5290 = vsub.f32 %v92, %v5289
    %5291 = vmatpush1.msra.mxu0 %v5290
    %5292 = vmatprep.subr.mxu0 0.0
    %5293 = vmatpush1.msra.mxu0 0.0
    %5294 = vmatprep.subr.mxu0 0.0
    %5295 = vmatpush1.msra.mxu0 0.0
    %5296 = vmatprep.subr.mxu0 0.0
    %5297 = vmatpush1.msra.mxu0 0.0
    %5298 = vmatprep.subr.mxu0 0.0
    %5299 = vmatpush1.msra.mxu0 0.0
    %5300 = vmatprep.subr.mxu0 0.0
    %5301 = vmatpush1.msra.mxu0 0.0
    %5302 = vmatprep.subr.mxu0 0.0
    %5303 = vmatpush1.msra.mxu0 0.0
    %5304 = vmatprep.subr.mxu0 0.0
    %5305 = vmatpush1.msra.mxu0 0.0
    %5306 = vmatprep.subr.mxu0 0.0
    %5307 = vmatpush1.msra.mxu0 0.0
    %5308 = vmatprep.subr.mxu0 0.0
    %5309 = vmatpush1.msra.mxu0 0.0
    %5310 = vmatprep.subr.mxu0 0.0
    %5311 = vmatpush1.msra.mxu0 0.0
    %5312 = vmatprep.subr.mxu0 0.0
    %5313 = vmatpush1.msra.mxu0 0.0
    %5314 = vmatprep.subr.mxu0 0.0
    %5315 = vmatpush1.msra.mxu0 0.0
    %5316 = vmatprep.subr.mxu0 0.0
    %5317 = vmatpush1.msra.mxu0 0.0
    %5318 = vmatprep.subr.mxu0 0.0
    %5319 = vmatpush1.msra.mxu0 0.0
    %5320 = vmatprep.subr.mxu0 0.0
    %5321 = vmatpush1.msra.mxu0 0.0
    %5322 = vmatprep.subr.mxu0 0.0
    %5323 = vmatpush1.msra.mxu0 0.0
    %5324 = vmatprep.subr.mxu0 0.0
    %5325 = vmatpush1.msra.mxu0 0.0
    %5326 = vmatprep.subr.mxu0 0.0
    %5327 = vmatpush1.msra.mxu0 0.0
    %5328 = vmatprep.subr.mxu0 0.0
    %5329 = vmatpush1.msra.mxu0 0.0
    %5330 = vmatprep.subr.mxu0 0.0
    %5331 = vmatpush1.msra.mxu0 0.0
    %5332 = vmatprep.subr.mxu0 0.0
    %5333 = vmatpush1.msra.mxu0 0.0
    %5334 = vmatprep.subr.mxu0 0.0
    %5335 = vmatpush1.msra.mxu0 0.0
    %5336 = vmatprep.subr.mxu0 0.0
    %5337 = vmatpush1.msra.mxu0 0.0
    %5338 = vmatprep.subr.mxu0 0.0
    %5339 = vmatpush1.msra.mxu0 0.0
    %5340 = vmatprep.subr.mxu0 0.0
    %5341 = vmatpush1.msra.mxu0 0.0
    %5342 = vmatprep.subr.mxu0 0.0
    %5343 = vmatpush1.msra.mxu0 0.0
    %5344 = vmatprep.subr.mxu0 0.0
    %5345 = vmatpush1.msra.mxu0 0.0
    %5346 = vmatprep.subr.mxu0 0.0
    %5347 = vmatpush1.msra.mxu0 0.0
    %5348 = vmatprep.subr.mxu0 0.0
    %5349 = vmatpush1.msra.mxu0 0.0
    %5350 = vmatprep.subr.mxu0 0.0
    %5351 = vmatpush1.msra.mxu0 0.0
    %5352 = vmatprep.mubr.f32.mxu0 0.0
    %v5353 = vand.u32 %v4615, 4294901760
    %v5354 = vsub.f32 %v4615, %v5353
    %5355 = vmatmul.mubr.f32.gmra.mrb[0].mxu0 %v5354
    %v5356 = vpop.f32.mrb[0].mxu0
    %v5357 = vadd.f32 %v5276, %v5356
    %v5358 = vpop.f32.mrb[0].mxu0
    %v5359 = vadd.f32 %v5278, %v5358
    %5360 = vdwg.mxu0
    %v5361 = vand.u32 %v89, 4294901760
    %5362 = vmatprep.subr.mxu0 %v5361
    %v5363 = vand.u32 %v88, 4294901760
    %5364 = vmatpush1.msra.mxu0 %v5363
    %v5365 = vand.u32 %v93, 4294901760
    %5366 = vmatprep.subr.mxu0 %v5365
    %v5367 = vand.u32 %v92, 4294901760
    %5368 = vmatpush1.msra.mxu0 %v5367
    %5369 = vmatprep.subr.mxu0 0.0
    %5370 = vmatpush1.msra.mxu0 0.0
    %5371 = vmatprep.subr.mxu0 0.0
    %5372 = vmatpush1.msra.mxu0 0.0
    %5373 = vmatprep.subr.mxu0 0.0
    %5374 = vmatpush1.msra.mxu0 0.0
    %5375 = vmatprep.subr.mxu0 0.0
    %5376 = vmatpush1.msra.mxu0 0.0
    %5377 = vmatprep.subr.mxu0 0.0
    %5378 = vmatpush1.msra.mxu0 0.0
    %5379 = vmatprep.subr.mxu0 0.0
    %5380 = vmatpush1.msra.mxu0 0.0
    %5381 = vmatprep.subr.mxu0 0.0
    %5382 = vmatpush1.msra.mxu0 0.0
    %5383 = vmatprep.subr.mxu0 0.0
    %5384 = vmatpush1.msra.mxu0 0.0
    %5385 = vmatprep.subr.mxu0 0.0
    %5386 = vmatpush1.msra.mxu0 0.0
    %5387 = vmatprep.subr.mxu0 0.0
    %5388 = vmatpush1.msra.mxu0 0.0
    %5389 = vmatprep.subr.mxu0 0.0
    %5390 = vmatpush1.msra.mxu0 0.0
    %5391 = vmatprep.subr.mxu0 0.0
    %5392 = vmatpush1.msra.mxu0 0.0
    %5393 = vmatprep.subr.mxu0 0.0
    %5394 = vmatpush1.msra.mxu0 0.0
    %5395 = vmatprep.subr.mxu0 0.0
    %5396 = vmatpush1.msra.mxu0 0.0
    %5397 = vmatprep.subr.mxu0 0.0
    %5398 = vmatpush1.msra.mxu0 0.0
    %5399 = vmatprep.subr.mxu0 0.0
    %5400 = vmatpush1.msra.mxu0 0.0
    %5401 = vmatprep.subr.mxu0 0.0
    %5402 = vmatpush1.msra.mxu0 0.0
    %5403 = vmatprep.subr.mxu0 0.0
    %5404 = vmatpush1.msra.mxu0 0.0
    %5405 = vmatprep.subr.mxu0 0.0
    %5406 = vmatpush1.msra.mxu0 0.0
    %5407 = vmatprep.subr.mxu0 0.0
    %5408 = vmatpush1.msra.mxu0 0.0
    %5409 = vmatprep.subr.mxu0 0.0
    %5410 = vmatpush1.msra.mxu0 0.0
    %5411 = vmatprep.subr.mxu0 0.0
    %5412 = vmatpush1.msra.mxu0 0.0
    %5413 = vmatprep.subr.mxu0 0.0
    %5414 = vmatpush1.msra.mxu0 0.0
    %5415 = vmatprep.subr.mxu0 0.0
    %5416 = vmatpush1.msra.mxu0 0.0
    %5417 = vmatprep.subr.mxu0 0.0
    %5418 = vmatpush1.msra.mxu0 0.0
    %5419 = vmatprep.subr.mxu0 0.0
    %5420 = vmatpush1.msra.mxu0 0.0
    %5421 = vmatprep.subr.mxu0 0.0
    %5422 = vmatpush1.msra.mxu0 0.0
    %5423 = vmatprep.subr.mxu0 0.0
    %5424 = vmatpush1.msra.mxu0 0.0
    %5425 = vmatprep.subr.mxu0 0.0
    %5426 = vmatpush1.msra.mxu0 0.0
    %5427 = vmatprep.subr.mxu0 0.0
    %5428 = vmatpush1.msra.mxu0 0.0
    %5429 = vmatprep.mubr.f32.mxu0 0.0
    %v5430 = vand.u32 %v4615, 4294901760
    %v5431 = vsub.f32 %v4615, %v5430
    %v5432 = vand.u32 %v5431, 4294901760
    %5433 = vmatmul.mubr.f32.gmra.mrb[0].mxu0 %v5432
    %v5434 = vpop.f32.mrb[0].mxu0
    %v5435 = vadd.f32 %v5357, %v5434
    %v5436 = vpop.f32.mrb[0].mxu0
    %v5437 = vadd.f32 %v5359, %v5436
    %5438 = vdwg.mxu0
    %v5439 = vand.u32 %v89, 4294901760
    %v5440 = vsub.f32 %v89, %v5439
    %v5441 = vand.u32 %v5440, 4294901760
    %5442 = vmatprep.subr.mxu0 %v5441
    %v5443 = vand.u32 %v88, 4294901760
    %v5444 = vsub.f32 %v88, %v5443
    %v5445 = vand.u32 %v5444, 4294901760
    %5446 = vmatpush1.msra.mxu0 %v5445
    %v5447 = vand.u32 %v93, 4294901760
    %v5448 = vsub.f32 %v93, %v5447
    %v5449 = vand.u32 %v5448, 4294901760
    %5450 = vmatprep.subr.mxu0 %v5449
    %v5451 = vand.u32 %v92, 4294901760
    %v5452 = vsub.f32 %v92, %v5451
    %v5453 = vand.u32 %v5452, 4294901760
    %5454 = vmatpush1.msra.mxu0 %v5453
    %5455 = vmatprep.subr.mxu0 0.0
    %5456 = vmatpush1.msra.mxu0 0.0
    %5457 = vmatprep.subr.mxu0 0.0
    %5458 = vmatpush1.msra.mxu0 0.0
    %5459 = vmatprep.subr.mxu0 0.0
    %5460 = vmatpush1.msra.mxu0 0.0
    %5461 = vmatprep.subr.mxu0 0.0
    %5462 = vmatpush1.msra.mxu0 0.0
    %5463 = vmatprep.subr.mxu0 0.0
    %5464 = vmatpush1.msra.mxu0 0.0
    %5465 = vmatprep.subr.mxu0 0.0
    %5466 = vmatpush1.msra.mxu0 0.0
    %5467 = vmatprep.subr.mxu0 0.0
    %5468 = vmatpush1.msra.mxu0 0.0
    %5469 = vmatprep.subr.mxu0 0.0
    %5470 = vmatpush1.msra.mxu0 0.0
    %5471 = vmatprep.subr.mxu0 0.0
    %5472 = vmatpush1.msra.mxu0 0.0
    %5473 = vmatprep.subr.mxu0 0.0
    %5474 = vmatpush1.msra.mxu0 0.0
    %5475 = vmatprep.subr.mxu0 0.0
    %5476 = vmatpush1.msra.mxu0 0.0
    %5477 = vmatprep.subr.mxu0 0.0
    %5478 = vmatpush1.msra.mxu0 0.0
    %5479 = vmatprep.subr.mxu0 0.0
    %5480 = vmatpush1.msra.mxu0 0.0
    %5481 = vmatprep.subr.mxu0 0.0
    %5482 = vmatpush1.msra.mxu0 0.0
    %5483 = vmatprep.subr.mxu0 0.0
    %5484 = vmatpush1.msra.mxu0 0.0
    %5485 = vmatprep.subr.mxu0 0.0
    %5486 = vmatpush1.msra.mxu0 0.0
    %5487 = vmatprep.subr.mxu0 0.0
    %5488 = vmatpush1.msra.mxu0 0.0
    %5489 = vmatprep.subr.mxu0 0.0
    %5490 = vmatpush1.msra.mxu0 0.0
    %5491 = vmatprep.subr.mxu0 0.0
    %5492 = vmatpush1.msra.mxu0 0.0
    %5493 = vmatprep.subr.mxu0 0.0
    %5494 = vmatpush1.msra.mxu0 0.0
    %5495 = vmatprep.subr.mxu0 0.0
    %5496 = vmatpush1.msra.mxu0 0.0
    %5497 = vmatprep.subr.mxu0 0.0
    %5498 = vmatpush1.msra.mxu0 0.0
    %5499 = vmatprep.subr.mxu0 0.0
    %5500 = vmatpush1.msra.mxu0 0.0
    %5501 = vmatprep.subr.mxu0 0.0
    %5502 = vmatpush1.msra.mxu0 0.0
    %5503 = vmatprep.subr.mxu0 0.0
    %5504 = vmatpush1.msra.mxu0 0.0
    %5505 = vmatprep.subr.mxu0 0.0
    %5506 = vmatpush1.msra.mxu0 0.0
    %5507 = vmatprep.subr.mxu0 0.0
    %5508 = vmatpush1.msra.mxu0 0.0
    %5509 = vmatprep.subr.mxu0 0.0
    %5510 = vmatpush1.msra.mxu0 0.0
    %5511 = vmatprep.subr.mxu0 0.0
    %5512 = vmatpush1.msra.mxu0 0.0
    %5513 = vmatprep.subr.mxu0 0.0
    %5514 = vmatpush1.msra.mxu0 0.0
    %5515 = vmatprep.mubr.f32.mxu0 0.0
    %v5516 = vand.u32 %v4615, 4294901760
    %5517 = vmatmul.mubr.f32.gmra.mrb[0].mxu0 %v5516
    %v5518 = vpop.f32.mrb[0].mxu0
    %v5519 = vadd.f32 %v5435, %v5518
    %v5520 = vpop.f32.mrb[0].mxu0
    %v5521 = vadd.f32 %v5437, %v5520
    %5522 = vdwg.mxu0
    %v5523 = vand.u32 %v89, 4294901760
    %5524 = vmatprep.subr.mxu0 %v5523
    %v5525 = vand.u32 %v88, 4294901760
    %5526 = vmatpush1.msra.mxu0 %v5525
    %v5527 = vand.u32 %v93, 4294901760
    %5528 = vmatprep.subr.mxu0 %v5527
    %v5529 = vand.u32 %v92, 4294901760
    %5530 = vmatpush1.msra.mxu0 %v5529
    %5531 = vmatprep.subr.mxu0 0.0
    %5532 = vmatpush1.msra.mxu0 0.0
    %5533 = vmatprep.subr.mxu0 0.0
    %5534 = vmatpush1.msra.mxu0 0.0
    %5535 = vmatprep.subr.mxu0 0.0
    %5536 = vmatpush1.msra.mxu0 0.0
    %5537 = vmatprep.subr.mxu0 0.0
    %5538 = vmatpush1.msra.mxu0 0.0
    %5539 = vmatprep.subr.mxu0 0.0
    %5540 = vmatpush1.msra.mxu0 0.0
    %5541 = vmatprep.subr.mxu0 0.0
    %5542 = vmatpush1.msra.mxu0 0.0
    %5543 = vmatprep.subr.mxu0 0.0
    %5544 = vmatpush1.msra.mxu0 0.0
    %5545 = vmatprep.subr.mxu0 0.0
    %5546 = vmatpush1.msra.mxu0 0.0
    %5547 = vmatprep.subr.mxu0 0.0
    %5548 = vmatpush1.msra.mxu0 0.0
    %5549 = vmatprep.subr.mxu0 0.0
    %5550 = vmatpush1.msra.mxu0 0.0
    %5551 = vmatprep.subr.mxu0 0.0
    %5552 = vmatpush1.msra.mxu0 0.0
    %5553 = vmatprep.subr.mxu0 0.0
    %5554 = vmatpush1.msra.mxu0 0.0
    %5555 = vmatprep.subr.mxu0 0.0
    %5556 = vmatpush1.msra.mxu0 0.0
    %5557 = vmatprep.subr.mxu0 0.0
    %5558 = vmatpush1.msra.mxu0 0.0
    %5559 = vmatprep.subr.mxu0 0.0
    %5560 = vmatpush1.msra.mxu0 0.0
    %5561 = vmatprep.subr.mxu0 0.0
    %5562 = vmatpush1.msra.mxu0 0.0
    %5563 = vmatprep.subr.mxu0 0.0
    %5564 = vmatpush1.msra.mxu0 0.0
    %5565 = vmatprep.subr.mxu0 0.0
    %5566 = vmatpush1.msra.mxu0 0.0
    %5567 = vmatprep.subr.mxu0 0.0
    %5568 = vmatpush1.msra.mxu0 0.0
    %5569 = vmatprep.subr.mxu0 0.0
    %5570 = vmatpush1.msra.mxu0 0.0
    %5571 = vmatprep.subr.mxu0 0.0
    %5572 = vmatpush1.msra.mxu0 0.0
    %5573 = vmatprep.subr.mxu0 0.0
    %5574 = vmatpush1.msra.mxu0 0.0
    %5575 = vmatprep.subr.mxu0 0.0
    %5576 = vmatpush1.msra.mxu0 0.0
    %5577 = vmatprep.subr.mxu0 0.0
    %5578 = vmatpush1.msra.mxu0 0.0
    %5579 = vmatprep.subr.mxu0 0.0
    %5580 = vmatpush1.msra.mxu0 0.0
    %5581 = vmatprep.subr.mxu0 0.0
    %5582 = vmatpush1.msra.mxu0 0.0
    %5583 = vmatprep.subr.mxu0 0.0
    %5584 = vmatpush1.msra.mxu0 0.0
    %5585 = vmatprep.subr.mxu0 0.0
    %5586 = vmatpush1.msra.mxu0 0.0
    %5587 = vmatprep.subr.mxu0 0.0
    %5588 = vmatpush1.msra.mxu0 0.0
    %5589 = vmatprep.subr.mxu0 0.0
    %5590 = vmatpush1.msra.mxu0 0.0
    %5591 = vmatprep.mubr.f32.mxu0 0.0
    %v5592 = vand.u32 %v4615, 4294901760
    %5593 = vmatmul.mubr.f32.gmra.mrb[0].mxu0 %v5592
    %v5594 = vpop.f32.mrb[0].mxu0
    %v5595 = vadd.f32 %v5519, %v5594
    %v5596 = vpop.f32.mrb[0].mxu0
    %v5597 = vadd.f32 %v5521, %v5596
    %5598 = vdwg.mxu0
    %v5599 = vld [vmem:[%s1] sm:$0xf]
    %v5600 = vld [vmem:[%s2] sm:$0xf]
    %v5605 = vcombine.low %v5104, %v5106
    %v5606 = vcombine.low %v5595, %v5597
    %v5608 = vunpack.c.l.s4 1966171168
    %v5609 = vunpack.c.0.s8 %v5608
    %v5610 = vlaneseq
    %v5611 = vshrl.u32 %v5610, 7
    %v5612 = vsub.s32 %v5609, %v5611
    %v5613 = vrot.slane %v5605, %v5612
    %v5615 = vunpack.c.l.s4 1966171168
    %v5616 = vunpack.c.0.s8 %v5615
    %v5617 = vlaneseq
    %v5618 = vshrl.u32 %v5617, 7
    %v5619 = vsub.s32 %v5616, %v5618
    %v5620 = vrot.slane %v5606, %v5619
    %v5621 = vcombine.low %v5613, %v5620
    %v5623 = vunpack.c.l.s4 1966171168
    %v5624 = vunpack.c.0.s8 %v5623
    %v5625 = vlaneseq
    %v5626 = vshrl.u32 %v5625, 7
    %v5627 = vsub.s32 %v5624, %v5626
    %v5628 = vrot.slane %v5621, %v5627
    %v5630 = vmul.f32 %v2856, %v5628
    %v5631 = vmul.f32 %v5630, %v5599
    %v5632 = vadd.f32 %v5631, %v5600
    %v5633 = vlaneseq
    %vm5634 = vcmp.ge.s32.totalorder %v5633, 0
    %vm5635 = vcmp.lt.s32.totalorder %v5633, 512
    %vm5636 = vmand %vm5634, %vm5635
    %5637 = vst.msk [vmem:[#allocation2] sm:$0xf] %vm5636, %v5632
    // Predicated region
    $region22: #{tpu_custom_call.1} parent=1 // pred_check
      _
    $region23: #{tpu_custom_call.1} parent=1 // pred_check_branch
      %5639 = sbr.rel (0) target = $region25
    $region24: #{tpu_custom_call.1} parent=1 // pred_region
      %s5641 = ssub.s32 64, 64
      %5642 = vsyncadd [#allocation3], %s5641
      %s5644 = sshll.u32 [#allocation2], 4
      %s5645 = int_to_ptr.vmem [resolvable:$true] %s5644
      %5647 = dma.vmem_to_hbm [thread:$0]  %s5645, 64, %s5, [#allocation3]
    $region25: #{tpu_custom_call.1} parent=1 // pred_fallthru
      _
    // Predicated region
    $region26: #{tpu_custom_call.1} parent=1 // pred_check
      _
    $region27: #{tpu_custom_call.1} parent=1 // pred_check_branch
      %5649 = sbr.rel (0) target = $region29
    $region28: #{tpu_custom_call.1} parent=1 // pred_region
      %5650 = dma.done [#allocation3], 64
    $region29: #{tpu_custom_call.1} parent=1 // pred_fallthru
      _
    %5651 = vsyncpa [#allocation3], 1

</llo_original>
